<compile_context>
chip_gen: v5e
topology: v5e:2x2
jax: 0.10.0
libtpu: 0.0.40
codegen_flags: <defaults>
</compile_context>

<pallas_src>
import functools

import numpy as np
import jax
import jax.numpy as jnp
from jax import lax
from jax.experimental import pallas as pl
from jax.experimental.pallas import tpu as pltpu

BN_EPS = 1e-5
NEG_SLOPE = 0.2


# --------------------------------------------------------------------------
# In-kernel helper: training-mode BatchNorm (global batch stats over the M
# rows, computed with MXU ones-row matmuls) + LeakyReLU(0.2).
# --------------------------------------------------------------------------
def _bn_leaky_relu(y, gamma, beta):
    """y: [M, C] f32 conv output, gamma/beta: [1, C] f32 -> [M, C] f32."""
    m = y.shape[0]
    ones = jnp.ones((1, m), jnp.float32)
    mean = jnp.dot(ones, y, preferred_element_type=jnp.float32) * (1.0 / m)
    yc = y - mean                                           # centered (safer var)
    var = jnp.dot(ones, yc * yc, preferred_element_type=jnp.float32) * (1.0 / m)
    scale = gamma * lax.rsqrt(var + BN_EPS)
    z = yc * scale + beta
    return jnp.where(z >= 0, z, NEG_SLOPE * z)


# --------------------------------------------------------------------------
# Kernel A: one encoder layer = conv (single matmul over im2col) + BN + LeakyReLU.
# --------------------------------------------------------------------------
def _conv_bn_act_call(cols, wmat, gamma, beta, *, out_dtype):
    M, K = cols.shape
    Cout = wmat.shape[1]

    def kernel(c_ref, w_ref, g_ref, b_ref, o_ref):
        y = jnp.dot(c_ref[...], w_ref[...], preferred_element_type=jnp.float32)
        o_ref[...] = _bn_leaky_relu(y, g_ref[...], b_ref[...]).astype(o_ref.dtype)

    itm = jnp.dtype(cols.dtype).itemsize
    cost = pl.CostEstimate(
        flops=2 * M * K * Cout + 6 * M * Cout,
        transcendentals=Cout,
        bytes_accessed=int(M * K * itm + K * Cout * itm + 2 * Cout * 4
                           + M * Cout * jnp.dtype(out_dtype).itemsize),
    )
    return pl.pallas_call(
        kernel,
        out_shape=jax.ShapeDtypeStruct((M, Cout), out_dtype),
        in_specs=[pl.BlockSpec(memory_space=pltpu.MemorySpace.VMEM)
                  for _ in range(4)],
        out_specs=pl.BlockSpec(memory_space=pltpu.MemorySpace.VMEM),
        cost_estimate=cost,
    )(cols, wmat, gamma, beta)


# --------------------------------------------------------------------------
# Kernel B: last encoder layer, additionally fusing Flatten -> Linear -> ReLU.
# --------------------------------------------------------------------------
def _conv_bn_act_linear_call(cols, wmat, gamma, beta, wlin, blin, *, n_batch):
    M, K = cols.shape
    Cout = wmat.shape[1]
    F = wlin.shape[1]
    HW = M // n_batch                      # spatial positions per image

    def kernel(c_ref, w_ref, g_ref, b_ref, wl_ref, bl_ref, o_ref):
        y = jnp.dot(c_ref[...], w_ref[...], preferred_element_type=jnp.float32)
        act = _bn_leaky_relu(y, g_ref[...], b_ref[...]).astype(wl_ref.dtype)
        # Flatten (n, hw) rows -> [n_batch, HW*Cout] ordered (h, w, c), which
        # matches the host-permuted Linear weight.  Static slices + concats.
        imgs = []
        for n in range(n_batch):
            taps = [act[n * HW + t:n * HW + t + 1, :] for t in range(HW)]
            imgs.append(jnp.concatenate(taps, axis=1))     # [1, HW*Cout]
        flat = jnp.concatenate(imgs, axis=0)               # [n_batch, HW*Cout]
        z = jnp.dot(flat, wl_ref[...],
                    preferred_element_type=jnp.float32) + bl_ref[...]
        o_ref[...] = jnp.maximum(z, 0.0).astype(o_ref.dtype)

    itm = jnp.dtype(cols.dtype).itemsize
    cost = pl.CostEstimate(
        flops=2 * M * K * Cout + 6 * M * Cout + 2 * n_batch * (HW * Cout) * F,
        transcendentals=Cout,
        bytes_accessed=int(M * K * itm + K * Cout * itm + HW * Cout * F * itm
                           + 2 * Cout * 4 + F * 4 + n_batch * F * 4),
    )
    return pl.pallas_call(
        kernel,
        out_shape=jax.ShapeDtypeStruct((n_batch, F), jnp.float32),
        in_specs=[pl.BlockSpec(memory_space=pltpu.MemorySpace.VMEM)
                  for _ in range(6)],
        out_specs=pl.BlockSpec(memory_space=pltpu.MemorySpace.VMEM),
        cost_estimate=cost,
    )(cols, wmat, gamma, beta, wlin, blin)


# --------------------------------------------------------------------------
# Host-side layout glue (pure reshuffling, XLA-fused, <=~150 KiB per layer).
# --------------------------------------------------------------------------
def _im2col_2x2s2(a):
    """NHWC activation -> im2col rows for a 4x4, stride-2, pad-1 conv.

    a: [N, H, W, C] (H, W even)  ->  [N*Ho*Wo, 16*C]
    K ordered (a, b, di, dj, c) with kernel tap (p, q) = (2a+di, 2b+dj)."""
    N, H, W, C = a.shape
    Ho, Wo = H // 2, W // 2
    ap = jnp.pad(a, ((0, 0), (1, 1), (1, 1), (0, 0)))
    s = ap.reshape(N, Ho + 1, 2, Wo + 1, 2, C)
    s = jnp.transpose(s, (0, 1, 3, 2, 4, 5)).reshape(N, Ho + 1, Wo + 1, 4 * C)
    cols = jnp.concatenate(
        [s[:, 0:Ho, 0:Wo, :], s[:, 0:Ho, 1:Wo + 1, :],
         s[:, 1:Ho + 1, 0:Wo, :], s[:, 1:Ho + 1, 1:Wo + 1, :]], axis=-1)
    return cols.reshape(N * Ho * Wo, 16 * C)


def _conv_weight_matrix(w):
    """PyTorch Conv2d weight [O, Cin, 4, 4] -> [16*Cin, O], K order matching
    _im2col_2x2s2 (a, b, di, dj, c) with p = 2a+di, q = 2b+dj."""
    O, C = w.shape[0], w.shape[1]
    w6 = w.reshape(O, C, 2, 2, 2, 2)               # (o, c, a, di, b, dj)
    return jnp.transpose(w6, (2, 4, 3, 5, 1, 0)).reshape(16 * C, O)


# --------------------------------------------------------------------------
# Full VAE_Encoder forward (latent_dim=1 branch).
# --------------------------------------------------------------------------
@functools.partial(jax.jit, static_argnames=("compute_dtype",))
def vae_encoder_forward(x_nchw, conv_params, lin_params, *,
                        compute_dtype=jnp.bfloat16):
    N = x_nchw.shape[0]
    n_conv = len(conv_params)
    a = jnp.transpose(x_nchw, (0, 2, 3, 1)).astype(compute_dtype)   # NCHW->NHWC

    for li, (w, g, b) in enumerate(conv_params):
        H, W = a.shape[1], a.shape[2]
        assert H % 2 == 0 and W % 2 == 0, (H, W)
        Ho, Wo = H // 2, W // 2
        Cout = w.shape[0]
        cols = _im2col_2x2s2(a)                                     # [M, 16*Cin]
        wmat = _conv_weight_matrix(w).astype(compute_dtype)
        gamma = g.astype(jnp.float32).reshape(1, Cout)
        beta = b.astype(jnp.float32).reshape(1, Cout)
        if li + 1 < n_conv:
            y = _conv_bn_act_call(cols, wmat, gamma, beta, out_dtype=compute_dtype)
            a = y.reshape(N, Ho, Wo, Cout)                          # bitcast-free
        else:
            w_lin, b_lin = lin_params
            F = w_lin.shape[0]
            # PyTorch Flatten is (C,H,W)-ordered; permute Linear weight columns
            # to our (H,W,C) order (parameter relayout, same math).
            wl = w_lin.reshape(F, Cout, Ho, Wo).transpose(0, 2, 3, 1)
            wl = wl.reshape(F, Ho * Wo * Cout).T.astype(compute_dtype)
            bl = b_lin.astype(jnp.float32).reshape(1, F)
            return _conv_bn_act_linear_call(cols, wmat, gamma, beta, wl, bl,
                                            n_batch=N)


# --------------------------------------------------------------------------
# Pure-JAX reference (faithful to the PyTorch module, NCHW, f32).
# --------------------------------------------------------------------------
def reference_forward(x_nchw, conv_params, lin_params):
    y = x_nchw.astype(jnp.float32)
    for (w, g, b) in conv_params:
        y = jax.lax.conv_general_dilated(
            y, w.astype(jnp.float32), window_strides=(2, 2),
            padding=((1, 1), (1, 1)),
            dimension_numbers=("NCHW", "OIHW", "NCHW"))
        mean = jnp.mean(y, axis=(0, 2, 3), keepdims=True)
        var = jnp.mean((y - mean) ** 2, axis=(0, 2, 3), keepdims=True)
        y = (y - mean) * jax.lax.rsqrt(var + BN_EPS)
        y = y * g.reshape(1, -1, 1, 1) + b.reshape(1, -1, 1, 1)
        y = jnp.where(y >= 0, y, NEG_SLOPE * y)
    w_lin, b_lin = lin_params
    z = y.reshape(y.shape[0], -1) @ w_lin.astype(jnp.float32).T
    z = z + b_lin.astype(jnp.float32)
    return jnp.maximum(z, 0.0)


if __name__ == "__main__":
    key = jax.random.PRNGKey(0)
    N = 2
    CIN, H, W = 1, 32, 32          # input_shape = (1, 32, 32)
    FIRST, N_CONV, FEATURE = 32, 4, 64

    keys = jax.random.split(key, 3 * N_CONV + 3)
    chans = [CIN] + [FIRST * (2 ** i) for i in range(N_CONV)]   # 1,32,64,128,256

    conv_params = []
    for i in range(N_CONV):
        cin, cout = chans[i], chans[i + 1]
        k_w, k_g, k_b = keys[3 * i], keys[3 * i + 1], keys[3 * i + 2]
        wconv = jax.random.normal(k_w, (cout, cin, 4, 4), jnp.float32) / np.sqrt(cin * 16)
        gamma = 1.0 + 0.1 * jax.random.normal(k_g, (cout,), jnp.float32)
        beta = 0.1 * jax.random.normal(k_b, (cout,), jnp.float32)
        conv_params.append((wconv, gamma, beta))
    conv_params = tuple(conv_params)

    hf, wf = H // (2 ** N_CONV), W // (2 ** N_CONV)
    n_pix = chans[-1] * hf * wf                                  # 256*2*2 = 1024
    k_x, k_l, k_bl = keys[-3], keys[-2], keys[-1]
    x = jax.random.normal(k_x, (N, CIN, H, W), jnp.float32)
    w_lin = jax.random.normal(k_l, (FEATURE, n_pix), jnp.float32) / np.sqrt(n_pix)
    b_lin = 0.01 * jax.random.normal(k_bl, (FEATURE,), jnp.float32)
    lin_params = (w_lin, b_lin)

    ref = reference_forward(x, conv_params, lin_params)

    # f32 compute path: strict correctness check against the module semantics.
    out32 = jax.block_until_ready(
        vae_encoder_forward(x, conv_params, lin_params, compute_dtype=jnp.float32))
    assert out32.shape == (N, FEATURE), out32.shape
    assert jnp.allclose(out32, ref, rtol=2e-3, atol=2e-3), \
        float(jnp.max(jnp.abs(out32 - ref)))

    # bf16 MXU operands (f32 accumulation; BN stats and BN application share
    # the same in-kernel f32 accumulator): the perf path on v5e/v6e/v7x.
    out16 = jax.block_until_ready(
        vae_encoder_forward(x, conv_params, lin_params, compute_dtype=jnp.bfloat16))
    assert out16.shape == (N, FEATURE), out16.shape
    assert jnp.allclose(out16, ref, rtol=0.25, atol=0.25), \
        float(jnp.max(jnp.abs(out16 - ref)))

    print("KERNEL_OK")
</pallas_src>

<mosaic_0001>
module attributes {stable_mosaic.version = 11 : i64} {
  func.func @kernel(%arg0: memref<512x16xf32, #tpu.memory_space<vmem>>, %arg1: memref<16x32xf32, #tpu.memory_space<vmem>>, %arg2: memref<1x32xf32, #tpu.memory_space<vmem>>, %arg3: memref<1x32xf32, #tpu.memory_space<vmem>>, %arg4: memref<512x32xf32, #tpu.memory_space<vmem>>) attributes {dimension_semantics = [], scalar_prefetch = 0 : i64, scratch_operands = 0 : i64, tpu.core_type = #tpu.core_type<tc>} {
    %c0 = arith.constant 0 : index
    %c0_0 = arith.constant 0 : index
    %0 = vector.load %arg0[%c0, %c0_0] : memref<512x16xf32, #tpu.memory_space<vmem>>, vector<512x16xf32>
    %c0_1 = arith.constant 0 : index
    %c0_2 = arith.constant 0 : index
    %1 = vector.load %arg1[%c0_1, %c0_2] : memref<16x32xf32, #tpu.memory_space<vmem>>, vector<16x32xf32>
    %cst = arith.constant dense<0.000000e+00> : vector<512x32xf32>
    %2 = tpu.matmul %0, %1, %cst {dimension_numbers = #tpu.dot_dimension_numbers<[1], [0], [0], [1], [0, 0, 1, 1], [], []>} : vector<512x16xf32>, vector<16x32xf32>, vector<512x32xf32> -> vector<512x32xf32>
    %c0_3 = arith.constant 0 : index
    %c0_4 = arith.constant 0 : index
    %3 = vector.load %arg2[%c0_3, %c0_4] : memref<1x32xf32, #tpu.memory_space<vmem>>, vector<1x32xf32>
    %c0_5 = arith.constant 0 : index
    %c0_6 = arith.constant 0 : index
    %4 = vector.load %arg3[%c0_5, %c0_6] : memref<1x32xf32, #tpu.memory_space<vmem>>, vector<1x32xf32>
    %cst_7 = arith.constant 1.000000e+00 : f32
    %5 = vector.broadcast %cst_7 : f32 to vector<1x512xf32>
    %cst_8 = arith.constant dense<0.000000e+00> : vector<1x32xf32>
    %6 = tpu.matmul %5, %2, %cst_8 {dimension_numbers = #tpu.dot_dimension_numbers<[1], [0], [0], [1], [0, 0, 1, 1], [], []>} : vector<1x512xf32>, vector<512x32xf32>, vector<1x32xf32> -> vector<1x32xf32>
    %cst_9 = arith.constant 0.001953125 : f32
    %7 = vector.broadcast %cst_9 : f32 to vector<1x32xf32>
    %8 = arith.mulf %6, %7 : vector<1x32xf32>
    %9 = vector.broadcast %8 : vector<1x32xf32> to vector<512x32xf32>
    %10 = arith.subf %2, %9 : vector<512x32xf32>
    %11 = arith.mulf %10, %10 : vector<512x32xf32>
    %cst_10 = arith.constant dense<0.000000e+00> : vector<1x32xf32>
    %12 = tpu.matmul %5, %11, %cst_10 {dimension_numbers = #tpu.dot_dimension_numbers<[1], [0], [0], [1], [0, 0, 1, 1], [], []>} : vector<1x512xf32>, vector<512x32xf32>, vector<1x32xf32> -> vector<1x32xf32>
    %cst_11 = arith.constant 0.001953125 : f32
    %13 = vector.broadcast %cst_11 : f32 to vector<1x32xf32>
    %14 = arith.mulf %12, %13 : vector<1x32xf32>
    %cst_12 = arith.constant 9.99999974E-6 : f32
    %15 = vector.broadcast %cst_12 : f32 to vector<1x32xf32>
    %16 = arith.addf %14, %15 : vector<1x32xf32>
    %17 = math.rsqrt %16 : vector<1x32xf32>
    %18 = arith.mulf %3, %17 : vector<1x32xf32>
    %19 = vector.broadcast %18 : vector<1x32xf32> to vector<512x32xf32>
    %20 = arith.mulf %10, %19 : vector<512x32xf32>
    %21 = vector.broadcast %4 : vector<1x32xf32> to vector<512x32xf32>
    %22 = arith.addf %20, %21 : vector<512x32xf32>
    %cst_13 = arith.constant 0.000000e+00 : f32
    %23 = vector.broadcast %cst_13 : f32 to vector<512x32xf32>
    %24 = arith.cmpf oge, %22, %23 : vector<512x32xf32>
    %cst_14 = arith.constant 2.000000e-01 : f32
    %25 = vector.broadcast %cst_14 : f32 to vector<512x32xf32>
    %26 = arith.mulf %25, %22 : vector<512x32xf32>
    %27 = arith.select %24, %22, %26 : vector<512x32xi1>, vector<512x32xf32>
    %c0_15 = arith.constant 0 : index
    %c0_16 = arith.constant 0 : index
    %28 = vector.load %arg4[%c0_15, %c0_16] : memref<512x32xf32, #tpu.memory_space<vmem>>, vector<512x32xf32>
    tpu.vector_store %arg4[%c0_15, %c0_16], %27 {strides = array<i32>} : memref<512x32xf32, #tpu.memory_space<vmem>>, vector<512x32xf32>,
    return
  }
}

module attributes {stable_mosaic.version = 11 : i64} {
  func.func @kernel(%arg0: memref<128x512xf32, #tpu.memory_space<vmem>>, %arg1: memref<512x64xf32, #tpu.memory_space<vmem>>, %arg2: memref<1x64xf32, #tpu.memory_space<vmem>>, %arg3: memref<1x64xf32, #tpu.memory_space<vmem>>, %arg4: memref<128x64xf32, #tpu.memory_space<vmem>>) attributes {dimension_semantics = [], scalar_prefetch = 0 : i64, scratch_operands = 0 : i64, tpu.core_type = #tpu.core_type<tc>} {
    %c0 = arith.constant 0 : index
    %c0_0 = arith.constant 0 : index
    %0 = vector.load %arg0[%c0, %c0_0] : memref<128x512xf32, #tpu.memory_space<vmem>>, vector<128x512xf32>
    %c0_1 = arith.constant 0 : index
    %c0_2 = arith.constant 0 : index
    %1 = vector.load %arg1[%c0_1, %c0_2] : memref<512x64xf32, #tpu.memory_space<vmem>>, vector<512x64xf32>
    %cst = arith.constant dense<0.000000e+00> : vector<128x64xf32>
    %2 = tpu.matmul %0, %1, %cst {dimension_numbers = #tpu.dot_dimension_numbers<[1], [0], [0], [1], [0, 0, 1, 1], [], []>} : vector<128x512xf32>, vector<512x64xf32>, vector<128x64xf32> -> vector<128x64xf32>
    %c0_3 = arith.constant 0 : index
    %c0_4 = arith.constant 0 : index
    %3 = vector.load %arg2[%c0_3, %c0_4] : memref<1x64xf32, #tpu.memory_space<vmem>>, vector<1x64xf32>
    %c0_5 = arith.constant 0 : index
    %c0_6 = arith.constant 0 : index
    %4 = vector.load %arg3[%c0_5, %c0_6] : memref<1x64xf32, #tpu.memory_space<vmem>>, vector<1x64xf32>
    %cst_7 = arith.constant 1.000000e+00 : f32
    %5 = vector.broadcast %cst_7 : f32 to vector<1x128xf32>
    %cst_8 = arith.constant dense<0.000000e+00> : vector<1x64xf32>
    %6 = tpu.matmul %5, %2, %cst_8 {dimension_numbers = #tpu.dot_dimension_numbers<[1], [0], [0], [1], [0, 0, 1, 1], [], []>} : vector<1x128xf32>, vector<128x64xf32>, vector<1x64xf32> -> vector<1x64xf32>
    %cst_9 = arith.constant 7.812500e-03 : f32
    %7 = vector.broadcast %cst_9 : f32 to vector<1x64xf32>
    %8 = arith.mulf %6, %7 : vector<1x64xf32>
    %9 = vector.broadcast %8 : vector<1x64xf32> to vector<128x64xf32>
    %10 = arith.subf %2, %9 : vector<128x64xf32>
    %11 = arith.mulf %10, %10 : vector<128x64xf32>
    %cst_10 = arith.constant dense<0.000000e+00> : vector<1x64xf32>
    %12 = tpu.matmul %5, %11, %cst_10 {dimension_numbers = #tpu.dot_dimension_numbers<[1], [0], [0], [1], [0, 0, 1, 1], [], []>} : vector<1x128xf32>, vector<128x64xf32>, vector<1x64xf32> -> vector<1x64xf32>
    %cst_11 = arith.constant 7.812500e-03 : f32
    %13 = vector.broadcast %cst_11 : f32 to vector<1x64xf32>
    %14 = arith.mulf %12, %13 : vector<1x64xf32>
    %cst_12 = arith.constant 9.99999974E-6 : f32
    %15 = vector.broadcast %cst_12 : f32 to vector<1x64xf32>
    %16 = arith.addf %14, %15 : vector<1x64xf32>
    %17 = math.rsqrt %16 : vector<1x64xf32>
    %18 = arith.mulf %3, %17 : vector<1x64xf32>
    %19 = vector.broadcast %18 : vector<1x64xf32> to vector<128x64xf32>
    %20 = arith.mulf %10, %19 : vector<128x64xf32>
    %21 = vector.broadcast %4 : vector<1x64xf32> to vector<128x64xf32>
    %22 = arith.addf %20, %21 : vector<128x64xf32>
    %cst_13 = arith.constant 0.000000e+00 : f32
    %23 = vector.broadcast %cst_13 : f32 to vector<128x64xf32>
    %24 = arith.cmpf oge, %22, %23 : vector<128x64xf32>
    %cst_14 = arith.constant 2.000000e-01 : f32
    %25 = vector.broadcast %cst_14 : f32 to vector<128x64xf32>
    %26 = arith.mulf %25, %22 : vector<128x64xf32>
    %27 = arith.select %24, %22, %26 : vector<128x64xi1>, vector<128x64xf32>
    %c0_15 = arith.constant 0 : index
    %c0_16 = arith.constant 0 : index
    %28 = vector.load %arg4[%c0_15, %c0_16] : memref<128x64xf32, #tpu.memory_space<vmem>>, vector<128x64xf32>
    tpu.vector_store %arg4[%c0_15, %c0_16], %27 {strides = array<i32>} : memref<128x64xf32, #tpu.memory_space<vmem>>, vector<128x64xf32>,
    return
  }
}

module attributes {stable_mosaic.version = 11 : i64} {
  func.func @kernel(%arg0: memref<32x1024xf32, #tpu.memory_space<vmem>>, %arg1: memref<1024x128xf32, #tpu.memory_space<vmem>>, %arg2: memref<1x128xf32, #tpu.memory_space<vmem>>, %arg3: memref<1x128xf32, #tpu.memory_space<vmem>>, %arg4: memref<32x128xf32, #tpu.memory_space<vmem>>) attributes {dimension_semantics = [], scalar_prefetch = 0 : i64, scratch_operands = 0 : i64, tpu.core_type = #tpu.core_type<tc>} {
    %c0 = arith.constant 0 : index
    %c0_0 = arith.constant 0 : index
    %0 = vector.load %arg0[%c0, %c0_0] : memref<32x1024xf32, #tpu.memory_space<vmem>>, vector<32x1024xf32>
    %c0_1 = arith.constant 0 : index
    %c0_2 = arith.constant 0 : index
    %1 = vector.load %arg1[%c0_1, %c0_2] : memref<1024x128xf32, #tpu.memory_space<vmem>>, vector<1024x128xf32>
    %cst = arith.constant dense<0.000000e+00> : vector<32x128xf32>
    %2 = tpu.matmul %0, %1, %cst {dimension_numbers = #tpu.dot_dimension_numbers<[1], [0], [0], [1], [0, 0, 1, 1], [], []>} : vector<32x1024xf32>, vector<1024x128xf32>, vector<32x128xf32> -> vector<32x128xf32>
    %c0_3 = arith.constant 0 : index
    %c0_4 = arith.constant 0 : index
    %3 = vector.load %arg2[%c0_3, %c0_4] : memref<1x128xf32, #tpu.memory_space<vmem>>, vector<1x128xf32>
    %c0_5 = arith.constant 0 : index
    %c0_6 = arith.constant 0 : index
    %4 = vector.load %arg3[%c0_5, %c0_6] : memref<1x128xf32, #tpu.memory_space<vmem>>, vector<1x128xf32>
    %cst_7 = arith.constant 1.000000e+00 : f32
    %5 = vector.broadcast %cst_7 : f32 to vector<1x32xf32>
    %cst_8 = arith.constant dense<0.000000e+00> : vector<1x128xf32>
    %6 = tpu.matmul %5, %2, %cst_8 {dimension_numbers = #tpu.dot_dimension_numbers<[1], [0], [0], [1], [0, 0, 1, 1], [], []>} : vector<1x32xf32>, vector<32x128xf32>, vector<1x128xf32> -> vector<1x128xf32>
    %cst_9 = arith.constant 3.125000e-02 : f32
    %7 = vector.broadcast %cst_9 : f32 to vector<1x128xf32>
    %8 = arith.mulf %6, %7 : vector<1x128xf32>
    %9 = vector.broadcast %8 : vector<1x128xf32> to vector<32x128xf32>
    %10 = arith.subf %2, %9 : vector<32x128xf32>
    %11 = arith.mulf %10, %10 : vector<32x128xf32>
    %cst_10 = arith.constant dense<0.000000e+00> : vector<1x128xf32>
    %12 = tpu.matmul %5, %11, %cst_10 {dimension_numbers = #tpu.dot_dimension_numbers<[1], [0], [0], [1], [0, 0, 1, 1], [], []>} : vector<1x32xf32>, vector<32x128xf32>, vector<1x128xf32> -> vector<1x128xf32>
    %cst_11 = arith.constant 3.125000e-02 : f32
    %13 = vector.broadcast %cst_11 : f32 to vector<1x128xf32>
    %14 = arith.mulf %12, %13 : vector<1x128xf32>
    %cst_12 = arith.constant 9.99999974E-6 : f32
    %15 = vector.broadcast %cst_12 : f32 to vector<1x128xf32>
    %16 = arith.addf %14, %15 : vector<1x128xf32>
    %17 = math.rsqrt %16 : vector<1x128xf32>
    %18 = arith.mulf %3, %17 : vector<1x128xf32>
    %19 = vector.broadcast %18 : vector<1x128xf32> to vector<32x128xf32>
    %20 = arith.mulf %10, %19 : vector<32x128xf32>
    %21 = vector.broadcast %4 : vector<1x128xf32> to vector<32x128xf32>
    %22 = arith.addf %20, %21 : vector<32x128xf32>
    %cst_13 = arith.constant 0.000000e+00 : f32
    %23 = vector.broadcast %cst_13 : f32 to vector<32x128xf32>
    %24 = arith.cmpf oge, %22, %23 : vector<32x128xf32>
    %cst_14 = arith.constant 2.000000e-01 : f32
    %25 = vector.broadcast %cst_14 : f32 to vector<32x128xf32>
    %26 = arith.mulf %25, %22 : vector<32x128xf32>
    %27 = arith.select %24, %22, %26 : vector<32x128xi1>, vector<32x128xf32>
    %c0_15 = arith.constant 0 : index
    %c0_16 = arith.constant 0 : index
    %28 = vector.load %arg4[%c0_15, %c0_16] : memref<32x128xf32, #tpu.memory_space<vmem>>, vector<32x128xf32>
    tpu.vector_store %arg4[%c0_15, %c0_16], %27 {strides = array<i32>} : memref<32x128xf32, #tpu.memory_space<vmem>>, vector<32x128xf32>,
    return
  }
}

module attributes {stable_mosaic.version = 11 : i64} {
  func.func @kernel(%arg0: memref<8x2048xf32, #tpu.memory_space<vmem>>, %arg1: memref<2048x256xf32, #tpu.memory_space<vmem>>, %arg2: memref<1x256xf32, #tpu.memory_space<vmem>>, %arg3: memref<1x256xf32, #tpu.memory_space<vmem>>, %arg4: memref<1024x64xf32, #tpu.memory_space<vmem>>, %arg5: memref<1x64xf32, #tpu.memory_space<vmem>>, %arg6: memref<2x64xf32, #tpu.memory_space<vmem>>) attributes {dimension_semantics = [], scalar_prefetch = 0 : i64, scratch_operands = 0 : i64, tpu.core_type = #tpu.core_type<tc>} {
    %c0 = arith.constant 0 : index
    %c0_0 = arith.constant 0 : index
    %0 = vector.load %arg0[%c0, %c0_0] : memref<8x2048xf32, #tpu.memory_space<vmem>>, vector<8x2048xf32>
    %c0_1 = arith.constant 0 : index
    %c0_2 = arith.constant 0 : index
    %1 = vector.load %arg1[%c0_1, %c0_2] : memref<2048x256xf32, #tpu.memory_space<vmem>>, vector<2048x256xf32>
    %cst = arith.constant dense<0.000000e+00> : vector<8x256xf32>
    %2 = tpu.matmul %0, %1, %cst {dimension_numbers = #tpu.dot_dimension_numbers<[1], [0], [0], [1], [0, 0, 1, 1], [], []>} : vector<8x2048xf32>, vector<2048x256xf32>, vector<8x256xf32> -> vector<8x256xf32>
    %c0_3 = arith.constant 0 : index
    %c0_4 = arith.constant 0 : index
    %3 = vector.load %arg2[%c0_3, %c0_4] : memref<1x256xf32, #tpu.memory_space<vmem>>, vector<1x256xf32>
    %c0_5 = arith.constant 0 : index
    %c0_6 = arith.constant 0 : index
    %4 = vector.load %arg3[%c0_5, %c0_6] : memref<1x256xf32, #tpu.memory_space<vmem>>, vector<1x256xf32>
    %cst_7 = arith.constant 1.000000e+00 : f32
    %5 = vector.broadcast %cst_7 : f32 to vector<1x8xf32>
    %cst_8 = arith.constant dense<0.000000e+00> : vector<1x256xf32>
    %6 = tpu.matmul %5, %2, %cst_8 {dimension_numbers = #tpu.dot_dimension_numbers<[1], [0], [0], [1], [0, 0, 1, 1], [], []>} : vector<1x8xf32>, vector<8x256xf32>, vector<1x256xf32> -> vector<1x256xf32>
    %cst_9 = arith.constant 1.250000e-01 : f32
    %7 = vector.broadcast %cst_9 : f32 to vector<1x256xf32>
    %8 = arith.mulf %6, %7 : vector<1x256xf32>
    %9 = vector.broadcast %8 : vector<1x256xf32> to vector<8x256xf32>
    %10 = arith.subf %2, %9 : vector<8x256xf32>
    %11 = arith.mulf %10, %10 : vector<8x256xf32>
    %cst_10 = arith.constant dense<0.000000e+00> : vector<1x256xf32>
    %12 = tpu.matmul %5, %11, %cst_10 {dimension_numbers = #tpu.dot_dimension_numbers<[1], [0], [0], [1], [0, 0, 1, 1], [], []>} : vector<1x8xf32>, vector<8x256xf32>, vector<1x256xf32> -> vector<1x256xf32>
    %cst_11 = arith.constant 1.250000e-01 : f32
    %13 = vector.broadcast %cst_11 : f32 to vector<1x256xf32>
    %14 = arith.mulf %12, %13 : vector<1x256xf32>
    %cst_12 = arith.constant 9.99999974E-6 : f32
    %15 = vector.broadcast %cst_12 : f32 to vector<1x256xf32>
    %16 = arith.addf %14, %15 : vector<1x256xf32>
    %17 = math.rsqrt %16 : vector<1x256xf32>
    %18 = arith.mulf %3, %17 : vector<1x256xf32>
    %19 = vector.broadcast %18 : vector<1x256xf32> to vector<8x256xf32>
    %20 = arith.mulf %10, %19 : vector<8x256xf32>
    %21 = vector.broadcast %4 : vector<1x256xf32> to vector<8x256xf32>
    %22 = arith.addf %20, %21 : vector<8x256xf32>
    %cst_13 = arith.constant 0.000000e+00 : f32
    %23 = vector.broadcast %cst_13 : f32 to vector<8x256xf32>
    %24 = arith.cmpf oge, %22, %23 : vector<8x256xf32>
    %cst_14 = arith.constant 2.000000e-01 : f32
    %25 = vector.broadcast %cst_14 : f32 to vector<8x256xf32>
    %26 = arith.mulf %25, %22 : vector<8x256xf32>
    %27 = arith.select %24, %22, %26 : vector<8x256xi1>, vector<8x256xf32>
    %28 = vector.extract_strided_slice %27 {offsets = [0, 0], sizes = [1, 256], strides = [1, 1]} : vector<8x256xf32> to vector<1x256xf32>
    %29 = vector.extract_strided_slice %27 {offsets = [1, 0], sizes = [1, 256], strides = [1, 1]} : vector<8x256xf32> to vector<1x256xf32>
    %30 = vector.extract_strided_slice %27 {offsets = [2, 0], sizes = [1, 256], strides = [1, 1]} : vector<8x256xf32> to vector<1x256xf32>
    %31 = vector.extract_strided_slice %27 {offsets = [3, 0], sizes = [1, 256], strides = [1, 1]} : vector<8x256xf32> to vector<1x256xf32>
    %32 = tpu.concatenate %28, %29, %30, %31 in 1 : vector<1x256xf32>, vector<1x256xf32>, vector<1x256xf32>, vector<1x256xf32> -> vector<1x1024xf32>
    %33 = vector.extract_strided_slice %27 {offsets = [4, 0], sizes = [1, 256], strides = [1, 1]} : vector<8x256xf32> to vector<1x256xf32>
    %34 = vector.extract_strided_slice %27 {offsets = [5, 0], sizes = [1, 256], strides = [1, 1]} : vector<8x256xf32> to vector<1x256xf32>
    %35 = vector.extract_strided_slice %27 {offsets = [6, 0], sizes = [1, 256], strides = [1, 1]} : vector<8x256xf32> to vector<1x256xf32>
    %36 = vector.extract_strided_slice %27 {offsets = [7, 0], sizes = [1, 256], strides = [1, 1]} : vector<8x256xf32> to vector<1x256xf32>
    %37 = tpu.concatenate %33, %34, %35, %36 in 1 : vector<1x256xf32>, vector<1x256xf32>, vector<1x256xf32>, vector<1x256xf32> -> vector<1x1024xf32>
    %38 = tpu.concatenate %32, %37 in 0 : vector<1x1024xf32>, vector<1x1024xf32> -> vector<2x1024xf32>
    %c0_15 = arith.constant 0 : index
    %c0_16 = arith.constant 0 : index
    %39 = vector.load %arg4[%c0_15, %c0_16] : memref<1024x64xf32, #tpu.memory_space<vmem>>, vector<1024x64xf32>
    %cst_17 = arith.constant dense<0.000000e+00> : vector<2x64xf32>
    %40 = tpu.matmul %38, %39, %cst_17 {dimension_numbers = #tpu.dot_dimension_numbers<[1], [0], [0], [1], [0, 0, 1, 1], [], []>} : vector<2x1024xf32>, vector<1024x64xf32>, vector<2x64xf32> -> vector<2x64xf32>
    %c0_18 = arith.constant 0 : index
    %c0_19 = arith.constant 0 : index
    %41 = vector.load %arg5[%c0_18, %c0_19] : memref<1x64xf32, #tpu.memory_space<vmem>>, vector<1x64xf32>
    %42 = vector.broadcast %41 : vector<1x64xf32> to vector<2x64xf32>
    %43 = arith.addf %40, %42 : vector<2x64xf32>
    %cst_20 = arith.constant 0.000000e+00 : f32
    %44 = vector.broadcast %cst_20 : f32 to vector<2x64xf32>
    %45 = arith.maximumf %43, %44 : vector<2x64xf32>
    %c0_21 = arith.constant 0 : index
    %c0_22 = arith.constant 0 : index
    %46 = vector.load %arg6[%c0_21, %c0_22] : memref<2x64xf32, #tpu.memory_space<vmem>>, vector<2x64xf32>
    tpu.vector_store %arg6[%c0_21, %c0_22], %45 {strides = array<i32>} : memref<2x64xf32, #tpu.memory_space<vmem>>, vector<2x64xf32>,
    return
  }
}

</mosaic_0001>

<llo_original>
// kernel: vae_encoder_forward.4
$region0: #{vae_encoder_forward.4}
  #allocation0 [shape = 'u32[]', space=smem, size = 0x4, offset = 0x4, fixed_abs, tag = 'smem constant byte address 0x4 - core index']
  #allocation1 [shape = 'u32[72,128]{1,0:T(1,128)}', space=vmem, size = 0x9000, scoped, tag = 'internal scratch']
  %s0 = inlined_call_operand.vmem [shape: f32[512,16], index: 0, kind: input, shape index: {}]
  %s1 = inlined_call_operand.vmem [shape: f32[16,32], index: 1, kind: input, shape index: {}]
  %s2 = inlined_call_operand.vmem [shape: f32[1,32], index: 2, kind: input, shape index: {}]
  %s3 = inlined_call_operand.vmem [shape: f32[1,32], index: 3, kind: input, shape index: {}]
  %s4 = inlined_call_operand.vmem [shape: f32[512,32], index: 4, kind: output, shape index: {}]
  %s5 = sld [smem:[#allocation0]]
  $region26: #{vae_encoder_forward.4} parent=0
    _
  %s7 = ssub.s32 1, %s5
  %s8 = scalar_select 0, %s7, %s5
  // Predicated region
  $region2: #{vae_encoder_forward.4} parent=0 // pred_check
    _
  $region3: #{vae_encoder_forward.4} parent=0 // pred_check_branch
    %10 = sbr.rel (0) target = $region5
  $region4: #{vae_encoder_forward.4} parent=0 // pred_region
    _
  $region5: #{vae_encoder_forward.4} parent=0 // pred_fallthru
    _
  // Predicated region
  $region6: #{vae_encoder_forward.4} parent=0 // pred_check
    _
  $region7: #{vae_encoder_forward.4} parent=0 // pred_check_branch
    %12 = sbr.rel (0) target = $region9
  $region8: #{vae_encoder_forward.4} parent=0 // pred_region
    _
  $region9: #{vae_encoder_forward.4} parent=0 // pred_fallthru
    _
  // Predicated region
  $region10: #{vae_encoder_forward.4} parent=0 // pred_check
    _
  $region11: #{vae_encoder_forward.4} parent=0 // pred_check_branch
    %14 = sbr.rel (0) target = $region13
  $region12: #{vae_encoder_forward.4} parent=0 // pred_region
    _
  $region13: #{vae_encoder_forward.4} parent=0 // pred_fallthru
    _
  // Predicated region
  $region14: #{vae_encoder_forward.4} parent=0 // pred_check
    _
  $region15: #{vae_encoder_forward.4} parent=0 // pred_check_branch
    %16 = sbr.rel (0) target = $region17
  $region16: #{vae_encoder_forward.4} parent=0 // pred_region
    _
  $region17: #{vae_encoder_forward.4} parent=0 // pred_fallthru
    _
  %v17 = vld [vmem:[%s0] sm:$0xff]
  %v18 = vld [vmem:[%s0 + $0x8] sm:$0xff]
  %v19 = vld [vmem:[%s0 + $0x10] sm:$0xff]
  %v20 = vld [vmem:[%s0 + $0x18] sm:$0xff]
  %v21 = vld [vmem:[%s0 + $0x20] sm:$0xff]
  %v22 = vld [vmem:[%s0 + $0x28] sm:$0xff]
  %v23 = vld [vmem:[%s0 + $0x30] sm:$0xff]
  %v24 = vld [vmem:[%s0 + $0x38] sm:$0xff]
  %v25 = vld [vmem:[%s0 + $0x40] sm:$0xff]
  %v26 = vld [vmem:[%s0 + $0x48] sm:$0xff]
  %v27 = vld [vmem:[%s0 + $0x50] sm:$0xff]
  %v28 = vld [vmem:[%s0 + $0x58] sm:$0xff]
  %v29 = vld [vmem:[%s0 + $0x60] sm:$0xff]
  %v30 = vld [vmem:[%s0 + $0x68] sm:$0xff]
  %v31 = vld [vmem:[%s0 + $0x70] sm:$0xff]
  %v32 = vld [vmem:[%s0 + $0x78] sm:$0xff]
  %v33 = vld [vmem:[%s0 + $0x80] sm:$0xff]
  %v34 = vld [vmem:[%s0 + $0x88] sm:$0xff]
  %v35 = vld [vmem:[%s0 + $0x90] sm:$0xff]
  %v36 = vld [vmem:[%s0 + $0x98] sm:$0xff]
  %v37 = vld [vmem:[%s0 + $0xa0] sm:$0xff]
  %v38 = vld [vmem:[%s0 + $0xa8] sm:$0xff]
  %v39 = vld [vmem:[%s0 + $0xb0] sm:$0xff]
  %v40 = vld [vmem:[%s0 + $0xb8] sm:$0xff]
  %v41 = vld [vmem:[%s0 + $0xc0] sm:$0xff]
  %v42 = vld [vmem:[%s0 + $0xc8] sm:$0xff]
  %v43 = vld [vmem:[%s0 + $0xd0] sm:$0xff]
  %v44 = vld [vmem:[%s0 + $0xd8] sm:$0xff]
  %v45 = vld [vmem:[%s0 + $0xe0] sm:$0xff]
  %v46 = vld [vmem:[%s0 + $0xe8] sm:$0xff]
  %v47 = vld [vmem:[%s0 + $0xf0] sm:$0xff]
  %v48 = vld [vmem:[%s0 + $0xf8] sm:$0xff]
  %v49 = vld [vmem:[%s0 + $0x100] sm:$0xff]
  %v50 = vld [vmem:[%s0 + $0x108] sm:$0xff]
  %v51 = vld [vmem:[%s0 + $0x110] sm:$0xff]
  %v52 = vld [vmem:[%s0 + $0x118] sm:$0xff]
  %v53 = vld [vmem:[%s0 + $0x120] sm:$0xff]
  %v54 = vld [vmem:[%s0 + $0x128] sm:$0xff]
  %v55 = vld [vmem:[%s0 + $0x130] sm:$0xff]
  %v56 = vld [vmem:[%s0 + $0x138] sm:$0xff]
  %v57 = vld [vmem:[%s0 + $0x140] sm:$0xff]
  %v58 = vld [vmem:[%s0 + $0x148] sm:$0xff]
  %v59 = vld [vmem:[%s0 + $0x150] sm:$0xff]
  %v60 = vld [vmem:[%s0 + $0x158] sm:$0xff]
  %v61 = vld [vmem:[%s0 + $0x160] sm:$0xff]
  %v62 = vld [vmem:[%s0 + $0x168] sm:$0xff]
  %v63 = vld [vmem:[%s0 + $0x170] sm:$0xff]
  %v64 = vld [vmem:[%s0 + $0x178] sm:$0xff]
  %v65 = vld [vmem:[%s0 + $0x180] sm:$0xff]
  %v66 = vld [vmem:[%s0 + $0x188] sm:$0xff]
  %v67 = vld [vmem:[%s0 + $0x190] sm:$0xff]
  %v68 = vld [vmem:[%s0 + $0x198] sm:$0xff]
  %v69 = vld [vmem:[%s0 + $0x1a0] sm:$0xff]
  %v70 = vld [vmem:[%s0 + $0x1a8] sm:$0xff]
  %v71 = vld [vmem:[%s0 + $0x1b0] sm:$0xff]
  %v72 = vld [vmem:[%s0 + $0x1b8] sm:$0xff]
  %v73 = vld [vmem:[%s0 + $0x1c0] sm:$0xff]
  %v74 = vld [vmem:[%s0 + $0x1c8] sm:$0xff]
  %v75 = vld [vmem:[%s0 + $0x1d0] sm:$0xff]
  %v76 = vld [vmem:[%s0 + $0x1d8] sm:$0xff]
  %v77 = vld [vmem:[%s0 + $0x1e0] sm:$0xff]
  %v78 = vld [vmem:[%s0 + $0x1e8] sm:$0xff]
  %v79 = vld [vmem:[%s0 + $0x1f0] sm:$0xff]
  %v80 = vld [vmem:[%s0 + $0x1f8] sm:$0xff]
  %v81 = vld [vmem:[%s1] sm:$0xff]
  %v82 = vld [vmem:[%s1 + $0x8] sm:$0xff]
  %vm83 = vcmask 130048
  %v85 = vsel %vm83, %v17, 0
  %v88 = vsel %vm83, %v18, 0
  %v91 = vsel %vm83, %v19, 0
  %v94 = vsel %vm83, %v20, 0
  %v97 = vsel %vm83, %v21, 0
  %v100 = vsel %vm83, %v22, 0
  %v103 = vsel %vm83, %v23, 0
  %v106 = vsel %vm83, %v24, 0
  %v109 = vsel %vm83, %v25, 0
  %v112 = vsel %vm83, %v26, 0
  %v115 = vsel %vm83, %v27, 0
  %v118 = vsel %vm83, %v28, 0
  %v121 = vsel %vm83, %v29, 0
  %v124 = vsel %vm83, %v30, 0
  %v127 = vsel %vm83, %v31, 0
  %v130 = vsel %vm83, %v32, 0
  %v133 = vsel %vm83, %v33, 0
  %v136 = vsel %vm83, %v34, 0
  %v139 = vsel %vm83, %v35, 0
  %v142 = vsel %vm83, %v36, 0
  %v145 = vsel %vm83, %v37, 0
  %v148 = vsel %vm83, %v38, 0
  %v151 = vsel %vm83, %v39, 0
  %v154 = vsel %vm83, %v40, 0
  %v157 = vsel %vm83, %v41, 0
  %v160 = vsel %vm83, %v42, 0
  %v163 = vsel %vm83, %v43, 0
  %v166 = vsel %vm83, %v44, 0
  %v169 = vsel %vm83, %v45, 0
  %v172 = vsel %vm83, %v46, 0
  %v175 = vsel %vm83, %v47, 0
  %v178 = vsel %vm83, %v48, 0
  %v181 = vsel %vm83, %v49, 0
  %v184 = vsel %vm83, %v50, 0
  %v187 = vsel %vm83, %v51, 0
  %v190 = vsel %vm83, %v52, 0
  %v193 = vsel %vm83, %v53, 0
  %v196 = vsel %vm83, %v54, 0
  %v199 = vsel %vm83, %v55, 0
  %v202 = vsel %vm83, %v56, 0
  %v205 = vsel %vm83, %v57, 0
  %v208 = vsel %vm83, %v58, 0
  %v211 = vsel %vm83, %v59, 0
  %v214 = vsel %vm83, %v60, 0
  %v217 = vsel %vm83, %v61, 0
  %v220 = vsel %vm83, %v62, 0
  %v223 = vsel %vm83, %v63, 0
  %v226 = vsel %vm83, %v64, 0
  %v229 = vsel %vm83, %v65, 0
  %v232 = vsel %vm83, %v66, 0
  %v235 = vsel %vm83, %v67, 0
  %v238 = vsel %vm83, %v68, 0
  %v241 = vsel %vm83, %v69, 0
  %v244 = vsel %vm83, %v70, 0
  %v247 = vsel %vm83, %v71, 0
  %v250 = vsel %vm83, %v72, 0
  %v253 = vsel %vm83, %v73, 0
  %v256 = vsel %vm83, %v74, 0
  %v259 = vsel %vm83, %v75, 0
  %v262 = vsel %vm83, %v76, 0
  %v265 = vsel %vm83, %v77, 0
  %v268 = vsel %vm83, %v78, 0
  %v271 = vsel %vm83, %v79, 0
  %v274 = vsel %vm83, %v80, 0
  %276 = vmatpush.msra.mxu0 0.0
  %277 = vmatpush.msra.mxu0 0.0
  %278 = vmatpush.msra.mxu0 0.0
  %279 = vmatpush.msra.mxu0 0.0
  %280 = vmatpush.msra.mxu0 0.0
  %281 = vmatpush.msra.mxu0 0.0
  %282 = vmatpush.msra.mxu0 0.0
  %283 = vmatpush.msra.mxu0 0.0
  %284 = vmatpush.msra.mxu0 0.0
  %285 = vmatpush.msra.mxu0 0.0
  %286 = vmatpush.msra.mxu0 0.0
  %287 = vmatpush.msra.mxu0 0.0
  %288 = vmatpush.msra.mxu0 0.0
  %289 = vmatpush.msra.mxu0 0.0
  %290 = vmatpush.msra.mxu0 %v82
  %291 = vmatpush.msra.mxu0 %v81
  %292 = vmatmul.f32.gmra.mxu0 %v85
  %v293 = vpop.f32.mrf.mxu0
  %v294 = vadd.f32 0.0, %v293
  %295 = vmatmul.f32.gmra.mxu0 %v88
  %v296 = vpop.f32.mrf.mxu0
  %v297 = vadd.f32 0.0, %v296
  %298 = vmatmul.f32.gmra.mxu0 %v91
  %v299 = vpop.f32.mrf.mxu0
  %v300 = vadd.f32 0.0, %v299
  %301 = vmatmul.f32.gmra.mxu0 %v94
  %v302 = vpop.f32.mrf.mxu0
  %v303 = vadd.f32 0.0, %v302
  %304 = vmatmul.f32.gmra.mxu0 %v97
  %v305 = vpop.f32.mrf.mxu0
  %v306 = vadd.f32 0.0, %v305
  %307 = vmatmul.f32.gmra.mxu0 %v100
  %v308 = vpop.f32.mrf.mxu0
  %v309 = vadd.f32 0.0, %v308
  %310 = vmatmul.f32.gmra.mxu0 %v103
  %v311 = vpop.f32.mrf.mxu0
  %v312 = vadd.f32 0.0, %v311
  %313 = vmatmul.f32.gmra.mxu0 %v106
  %v314 = vpop.f32.mrf.mxu0
  %v315 = vadd.f32 0.0, %v314
  %316 = vmatmul.f32.gmra.mxu0 %v109
  %v317 = vpop.f32.mrf.mxu0
  %v318 = vadd.f32 0.0, %v317
  %319 = vmatmul.f32.gmra.mxu0 %v112
  %v320 = vpop.f32.mrf.mxu0
  %v321 = vadd.f32 0.0, %v320
  %322 = vmatmul.f32.gmra.mxu0 %v115
  %v323 = vpop.f32.mrf.mxu0
  %v324 = vadd.f32 0.0, %v323
  %325 = vmatmul.f32.gmra.mxu0 %v118
  %v326 = vpop.f32.mrf.mxu0
  %v327 = vadd.f32 0.0, %v326
  %328 = vmatmul.f32.gmra.mxu0 %v121
  %v329 = vpop.f32.mrf.mxu0
  %v330 = vadd.f32 0.0, %v329
  %331 = vmatmul.f32.gmra.mxu0 %v124
  %v332 = vpop.f32.mrf.mxu0
  %v333 = vadd.f32 0.0, %v332
  %334 = vmatmul.f32.gmra.mxu0 %v127
  %v335 = vpop.f32.mrf.mxu0
  %v336 = vadd.f32 0.0, %v335
  %337 = vmatmul.f32.gmra.mxu0 %v130
  %v338 = vpop.f32.mrf.mxu0
  %v339 = vadd.f32 0.0, %v338
  %340 = vmatmul.f32.gmra.mxu0 %v133
  %v341 = vpop.f32.mrf.mxu0
  %v342 = vadd.f32 0.0, %v341
  %343 = vmatmul.f32.gmra.mxu0 %v136
  %v344 = vpop.f32.mrf.mxu0
  %v345 = vadd.f32 0.0, %v344
  %346 = vmatmul.f32.gmra.mxu0 %v139
  %v347 = vpop.f32.mrf.mxu0
  %v348 = vadd.f32 0.0, %v347
  %349 = vmatmul.f32.gmra.mxu0 %v142
  %v350 = vpop.f32.mrf.mxu0
  %v351 = vadd.f32 0.0, %v350
  %352 = vmatmul.f32.gmra.mxu0 %v145
  %v353 = vpop.f32.mrf.mxu0
  %v354 = vadd.f32 0.0, %v353
  %355 = vmatmul.f32.gmra.mxu0 %v148
  %v356 = vpop.f32.mrf.mxu0
  %v357 = vadd.f32 0.0, %v356
  %358 = vmatmul.f32.gmra.mxu0 %v151
  %v359 = vpop.f32.mrf.mxu0
  %v360 = vadd.f32 0.0, %v359
  %361 = vmatmul.f32.gmra.mxu0 %v154
  %v362 = vpop.f32.mrf.mxu0
  %v363 = vadd.f32 0.0, %v362
  %364 = vmatmul.f32.gmra.mxu0 %v157
  %v365 = vpop.f32.mrf.mxu0
  %v366 = vadd.f32 0.0, %v365
  %367 = vmatmul.f32.gmra.mxu0 %v160
  %v368 = vpop.f32.mrf.mxu0
  %v369 = vadd.f32 0.0, %v368
  %370 = vmatmul.f32.gmra.mxu0 %v163
  %v371 = vpop.f32.mrf.mxu0
  %v372 = vadd.f32 0.0, %v371
  %373 = vmatmul.f32.gmra.mxu0 %v166
  %v374 = vpop.f32.mrf.mxu0
  %v375 = vadd.f32 0.0, %v374
  %376 = vmatmul.f32.gmra.mxu0 %v169
  %v377 = vpop.f32.mrf.mxu0
  %v378 = vadd.f32 0.0, %v377
  %379 = vmatmul.f32.gmra.mxu0 %v172
  %v380 = vpop.f32.mrf.mxu0
  %v381 = vadd.f32 0.0, %v380
  %382 = vmatmul.f32.gmra.mxu0 %v175
  %v383 = vpop.f32.mrf.mxu0
  %v384 = vadd.f32 0.0, %v383
  %385 = vmatmul.f32.gmra.mxu0 %v178
  %v386 = vpop.f32.mrf.mxu0
  %v387 = vadd.f32 0.0, %v386
  %388 = vmatmul.f32.gmra.mxu0 %v181
  %v389 = vpop.f32.mrf.mxu0
  %v390 = vadd.f32 0.0, %v389
  %391 = vmatmul.f32.gmra.mxu0 %v184
  %v392 = vpop.f32.mrf.mxu0
  %v393 = vadd.f32 0.0, %v392
  %394 = vmatmul.f32.gmra.mxu0 %v187
  %v395 = vpop.f32.mrf.mxu0
  %v396 = vadd.f32 0.0, %v395
  %397 = vmatmul.f32.gmra.mxu0 %v190
  %v398 = vpop.f32.mrf.mxu0
  %v399 = vadd.f32 0.0, %v398
  %400 = vmatmul.f32.gmra.mxu0 %v193
  %v401 = vpop.f32.mrf.mxu0
  %v402 = vadd.f32 0.0, %v401
  %403 = vmatmul.f32.gmra.mxu0 %v196
  %v404 = vpop.f32.mrf.mxu0
  %v405 = vadd.f32 0.0, %v404
  %406 = vmatmul.f32.gmra.mxu0 %v199
  %v407 = vpop.f32.mrf.mxu0
  %v408 = vadd.f32 0.0, %v407
  %409 = vmatmul.f32.gmra.mxu0 %v202
  %v410 = vpop.f32.mrf.mxu0
  %v411 = vadd.f32 0.0, %v410
  %412 = vmatmul.f32.gmra.mxu0 %v205
  %v413 = vpop.f32.mrf.mxu0
  %v414 = vadd.f32 0.0, %v413
  %415 = vmatmul.f32.gmra.mxu0 %v208
  %v416 = vpop.f32.mrf.mxu0
  %v417 = vadd.f32 0.0, %v416
  %418 = vmatmul.f32.gmra.mxu0 %v211
  %v419 = vpop.f32.mrf.mxu0
  %v420 = vadd.f32 0.0, %v419
  %421 = vmatmul.f32.gmra.mxu0 %v214
  %v422 = vpop.f32.mrf.mxu0
  %v423 = vadd.f32 0.0, %v422
  %424 = vmatmul.f32.gmra.mxu0 %v217
  %v425 = vpop.f32.mrf.mxu0
  %v426 = vadd.f32 0.0, %v425
  %427 = vmatmul.f32.gmra.mxu0 %v220
  %v428 = vpop.f32.mrf.mxu0
  %v429 = vadd.f32 0.0, %v428
  %430 = vmatmul.f32.gmra.mxu0 %v223
  %v431 = vpop.f32.mrf.mxu0
  %v432 = vadd.f32 0.0, %v431
  %433 = vmatmul.f32.gmra.mxu0 %v226
  %v434 = vpop.f32.mrf.mxu0
  %v435 = vadd.f32 0.0, %v434
  %436 = vmatmul.f32.gmra.mxu0 %v229
  %v437 = vpop.f32.mrf.mxu0
  %v438 = vadd.f32 0.0, %v437
  %439 = vmatmul.f32.gmra.mxu0 %v232
  %v440 = vpop.f32.mrf.mxu0
  %v441 = vadd.f32 0.0, %v440
  %442 = vmatmul.f32.gmra.mxu0 %v235
  %v443 = vpop.f32.mrf.mxu0
  %v444 = vadd.f32 0.0, %v443
  %445 = vmatmul.f32.gmra.mxu0 %v238
  %v446 = vpop.f32.mrf.mxu0
  %v447 = vadd.f32 0.0, %v446
  %448 = vmatmul.f32.gmra.mxu0 %v241
  %v449 = vpop.f32.mrf.mxu0
  %v450 = vadd.f32 0.0, %v449
  %451 = vmatmul.f32.gmra.mxu0 %v244
  %v452 = vpop.f32.mrf.mxu0
  %v453 = vadd.f32 0.0, %v452
  %454 = vmatmul.f32.gmra.mxu0 %v247
  %v455 = vpop.f32.mrf.mxu0
  %v456 = vadd.f32 0.0, %v455
  %457 = vmatmul.f32.gmra.mxu0 %v250
  %v458 = vpop.f32.mrf.mxu0
  %v459 = vadd.f32 0.0, %v458
  %460 = vmatmul.f32.gmra.mxu0 %v253
  %v461 = vpop.f32.mrf.mxu0
  %v462 = vadd.f32 0.0, %v461
  %463 = vmatmul.f32.gmra.mxu0 %v256
  %v464 = vpop.f32.mrf.mxu0
  %v465 = vadd.f32 0.0, %v464
  %466 = vmatmul.f32.gmra.mxu0 %v259
  %v467 = vpop.f32.mrf.mxu0
  %v468 = vadd.f32 0.0, %v467
  %469 = vmatmul.f32.gmra.mxu0 %v262
  %v470 = vpop.f32.mrf.mxu0
  %v471 = vadd.f32 0.0, %v470
  %472 = vmatmul.f32.gmra.mxu0 %v265
  %v473 = vpop.f32.mrf.mxu0
  %v474 = vadd.f32 0.0, %v473
  %475 = vmatmul.f32.gmra.mxu0 %v268
  %v476 = vpop.f32.mrf.mxu0
  %v477 = vadd.f32 0.0, %v476
  %478 = vmatmul.f32.gmra.mxu0 %v271
  %v479 = vpop.f32.mrf.mxu0
  %v480 = vadd.f32 0.0, %v479
  %481 = vmatmul.f32.gmra.mxu0 %v274
  %v482 = vpop.f32.mrf.mxu0
  %v483 = vadd.f32 0.0, %v482
  %484 = vdwg.mxu0
  %v485 = vld [vmem:[%s2] sm:$0x1]
  %v486 = vld [vmem:[%s3] sm:$0x1]
  %487 = vmatpush.msra.mxu0 %v339
  %488 = vmatpush.msra.mxu0 %v336
  %489 = vmatpush.msra.mxu0 %v333
  %490 = vmatpush.msra.mxu0 %v330
  %491 = vmatpush.msra.mxu0 %v327
  %492 = vmatpush.msra.mxu0 %v324
  %493 = vmatpush.msra.mxu0 %v321
  %494 = vmatpush.msra.mxu0 %v318
  %495 = vmatpush.msra.mxu0 %v315
  %496 = vmatpush.msra.mxu0 %v312
  %497 = vmatpush.msra.mxu0 %v309
  %498 = vmatpush.msra.mxu0 %v306
  %499 = vmatpush.msra.mxu0 %v303
  %500 = vmatpush.msra.mxu0 %v300
  %501 = vmatpush.msra.mxu0 %v297
  %502 = vmatpush.msra.mxu0 %v294
  %503 = vmatmul.f32.gmra.mxu0 1.0
  %v504 = vpop.f32.mrf.mxu0
  %v505 = vadd.f32 0.0, %v504
  %506 = vdwg.mxu0
  %507 = vmatpush.msra.mxu0 %v387
  %508 = vmatpush.msra.mxu0 %v384
  %509 = vmatpush.msra.mxu0 %v381
  %510 = vmatpush.msra.mxu0 %v378
  %511 = vmatpush.msra.mxu0 %v375
  %512 = vmatpush.msra.mxu0 %v372
  %513 = vmatpush.msra.mxu0 %v369
  %514 = vmatpush.msra.mxu0 %v366
  %515 = vmatpush.msra.mxu0 %v363
  %516 = vmatpush.msra.mxu0 %v360
  %517 = vmatpush.msra.mxu0 %v357
  %518 = vmatpush.msra.mxu0 %v354
  %519 = vmatpush.msra.mxu0 %v351
  %520 = vmatpush.msra.mxu0 %v348
  %521 = vmatpush.msra.mxu0 %v345
  %522 = vmatpush.msra.mxu0 %v342
  %523 = vmatmul.f32.gmra.mxu0 1.0
  %v524 = vpop.f32.mrf.mxu0
  %v525 = vadd.f32 %v505, %v524
  %526 = vdwg.mxu0
  %527 = vmatpush.msra.mxu0 %v435
  %528 = vmatpush.msra.mxu0 %v432
  %529 = vmatpush.msra.mxu0 %v429
  %530 = vmatpush.msra.mxu0 %v426
  %531 = vmatpush.msra.mxu0 %v423
  %532 = vmatpush.msra.mxu0 %v420
  %533 = vmatpush.msra.mxu0 %v417
  %534 = vmatpush.msra.mxu0 %v414
  %535 = vmatpush.msra.mxu0 %v411
  %536 = vmatpush.msra.mxu0 %v408
  %537 = vmatpush.msra.mxu0 %v405
  %538 = vmatpush.msra.mxu0 %v402
  %539 = vmatpush.msra.mxu0 %v399
  %540 = vmatpush.msra.mxu0 %v396
  %541 = vmatpush.msra.mxu0 %v393
  %542 = vmatpush.msra.mxu0 %v390
  %543 = vmatmul.f32.gmra.mxu0 1.0
  %v544 = vpop.f32.mrf.mxu0
  %v545 = vadd.f32 %v525, %v544
  %546 = vdwg.mxu0
  %547 = vmatpush.msra.mxu0 %v483
  %548 = vmatpush.msra.mxu0 %v480
  %549 = vmatpush.msra.mxu0 %v477
  %550 = vmatpush.msra.mxu0 %v474
  %551 = vmatpush.msra.mxu0 %v471
  %552 = vmatpush.msra.mxu0 %v468
  %553 = vmatpush.msra.mxu0 %v465
  %554 = vmatpush.msra.mxu0 %v462
  %555 = vmatpush.msra.mxu0 %v459
  %556 = vmatpush.msra.mxu0 %v456
  %557 = vmatpush.msra.mxu0 %v453
  %558 = vmatpush.msra.mxu0 %v450
  %559 = vmatpush.msra.mxu0 %v447
  %560 = vmatpush.msra.mxu0 %v444
  %561 = vmatpush.msra.mxu0 %v441
  %562 = vmatpush.msra.mxu0 %v438
  %563 = vmatmul.f32.gmra.mxu0 1.0
  %v564 = vpop.f32.mrf.mxu0
  %v565 = vadd.f32 %v545, %v564
  %566 = vdwg.mxu0
  %v567 = vmul.f32 %v565, 0.001953125
  %v568 = vperm.slane %v567, 0
  %v569 = vsub.f32 %v294, %v568
  %v570 = vsub.f32 %v297, %v568
  %v571 = vsub.f32 %v300, %v568
  %v572 = vsub.f32 %v303, %v568
  %v573 = vsub.f32 %v306, %v568
  %v574 = vsub.f32 %v309, %v568
  %v575 = vsub.f32 %v312, %v568
  %v576 = vsub.f32 %v315, %v568
  %v577 = vsub.f32 %v318, %v568
  %v578 = vsub.f32 %v321, %v568
  %v579 = vsub.f32 %v324, %v568
  %v580 = vsub.f32 %v327, %v568
  %v581 = vsub.f32 %v330, %v568
  %v582 = vsub.f32 %v333, %v568
  %v583 = vsub.f32 %v336, %v568
  %v584 = vsub.f32 %v339, %v568
  %v585 = vsub.f32 %v342, %v568
  %v586 = vsub.f32 %v345, %v568
  %v587 = vsub.f32 %v348, %v568
  %v588 = vsub.f32 %v351, %v568
  %v589 = vsub.f32 %v354, %v568
  %v590 = vsub.f32 %v357, %v568
  %v591 = vsub.f32 %v360, %v568
  %v592 = vsub.f32 %v363, %v568
  %v593 = vsub.f32 %v366, %v568
  %v594 = vsub.f32 %v369, %v568
  %v595 = vsub.f32 %v372, %v568
  %v596 = vsub.f32 %v375, %v568
  %v597 = vsub.f32 %v378, %v568
  %v598 = vsub.f32 %v381, %v568
  %v599 = vsub.f32 %v384, %v568
  %v600 = vsub.f32 %v387, %v568
  %v601 = vsub.f32 %v390, %v568
  %v602 = vsub.f32 %v393, %v568
  %v603 = vsub.f32 %v396, %v568
  %v604 = vsub.f32 %v399, %v568
  %v605 = vsub.f32 %v402, %v568
  %v606 = vsub.f32 %v405, %v568
  %v607 = vsub.f32 %v408, %v568
  %v608 = vsub.f32 %v411, %v568
  %v609 = vsub.f32 %v414, %v568
  %v610 = vsub.f32 %v417, %v568
  %v611 = vsub.f32 %v420, %v568
  %v612 = vsub.f32 %v423, %v568
  %v613 = vsub.f32 %v426, %v568
  %v614 = vsub.f32 %v429, %v568
  %v615 = vsub.f32 %v432, %v568
  %v616 = vsub.f32 %v435, %v568
  %v617 = vsub.f32 %v438, %v568
  %v618 = vsub.f32 %v441, %v568
  %v619 = vsub.f32 %v444, %v568
  %v620 = vsub.f32 %v447, %v568
  %v621 = vsub.f32 %v450, %v568
  %v622 = vsub.f32 %v453, %v568
  %v623 = vsub.f32 %v456, %v568
  %v624 = vsub.f32 %v459, %v568
  %v625 = vsub.f32 %v462, %v568
  %v626 = vsub.f32 %v465, %v568
  %v627 = vsub.f32 %v468, %v568
  %v628 = vsub.f32 %v471, %v568
  %v629 = vsub.f32 %v474, %v568
  %v630 = vsub.f32 %v477, %v568
  %v631 = vsub.f32 %v480, %v568
  %v632 = vsub.f32 %v483, %v568
  %v633 = vmul.f32 %v569, %v569
  %v634 = vmul.f32 %v570, %v570
  %v635 = vmul.f32 %v571, %v571
  %v636 = vmul.f32 %v572, %v572
  %v637 = vmul.f32 %v573, %v573
  %v638 = vmul.f32 %v574, %v574
  %v639 = vmul.f32 %v575, %v575
  %v640 = vmul.f32 %v576, %v576
  %v641 = vmul.f32 %v577, %v577
  %v642 = vmul.f32 %v578, %v578
  %v643 = vmul.f32 %v579, %v579
  %v644 = vmul.f32 %v580, %v580
  %v645 = vmul.f32 %v581, %v581
  %v646 = vmul.f32 %v582, %v582
  %v647 = vmul.f32 %v583, %v583
  %v648 = vmul.f32 %v584, %v584
  %v649 = vmul.f32 %v585, %v585
  %v650 = vmul.f32 %v586, %v586
  %v651 = vmul.f32 %v587, %v587
  %v652 = vmul.f32 %v588, %v588
  %v653 = vmul.f32 %v589, %v589
  %v654 = vmul.f32 %v590, %v590
  %v655 = vmul.f32 %v591, %v591
  %v656 = vmul.f32 %v592, %v592
  %v657 = vmul.f32 %v593, %v593
  %v658 = vmul.f32 %v594, %v594
  %v659 = vmul.f32 %v595, %v595
  %v660 = vmul.f32 %v596, %v596
  %v661 = vmul.f32 %v597, %v597
  %v662 = vmul.f32 %v598, %v598
  %v663 = vmul.f32 %v599, %v599
  %v664 = vmul.f32 %v600, %v600
  %v665 = vmul.f32 %v601, %v601
  %v666 = vmul.f32 %v602, %v602
  %v667 = vmul.f32 %v603, %v603
  %v668 = vmul.f32 %v604, %v604
  %v669 = vmul.f32 %v605, %v605
  %v670 = vmul.f32 %v606, %v606
  %v671 = vmul.f32 %v607, %v607
  %v672 = vmul.f32 %v608, %v608
  %v673 = vmul.f32 %v609, %v609
  %v674 = vmul.f32 %v610, %v610
  %v675 = vmul.f32 %v611, %v611
  %v676 = vmul.f32 %v612, %v612
  %v677 = vmul.f32 %v613, %v613
  %v678 = vmul.f32 %v614, %v614
  %v679 = vmul.f32 %v615, %v615
  %v680 = vmul.f32 %v616, %v616
  %v681 = vmul.f32 %v617, %v617
  %v682 = vmul.f32 %v618, %v618
  %v683 = vmul.f32 %v619, %v619
  %v684 = vmul.f32 %v620, %v620
  %v685 = vmul.f32 %v621, %v621
  %v686 = vmul.f32 %v622, %v622
  %v687 = vmul.f32 %v623, %v623
  %v688 = vmul.f32 %v624, %v624
  %v689 = vmul.f32 %v625, %v625
  %v690 = vmul.f32 %v626, %v626
  %v691 = vmul.f32 %v627, %v627
  %v692 = vmul.f32 %v628, %v628
  %v693 = vmul.f32 %v629, %v629
  %v694 = vmul.f32 %v630, %v630
  %v695 = vmul.f32 %v631, %v631
  %v696 = vmul.f32 %v632, %v632
  %697 = vmatpush.msra.mxu0 %v648
  %698 = vmatpush.msra.mxu0 %v647
  %699 = vmatpush.msra.mxu0 %v646
  %700 = vmatpush.msra.mxu0 %v645
  %701 = vmatpush.msra.mxu0 %v644
  %702 = vmatpush.msra.mxu0 %v643
  %703 = vmatpush.msra.mxu0 %v642
  %704 = vmatpush.msra.mxu0 %v641
  %705 = vmatpush.msra.mxu0 %v640
  %706 = vmatpush.msra.mxu0 %v639
  %707 = vmatpush.msra.mxu0 %v638
  %708 = vmatpush.msra.mxu0 %v637
  %709 = vmatpush.msra.mxu0 %v636
  %710 = vmatpush.msra.mxu0 %v635
  %711 = vmatpush.msra.mxu0 %v634
  %712 = vmatpush.msra.mxu0 %v633
  %713 = vmatmul.f32.gmra.mxu0 1.0
  %v714 = vpop.f32.mrf.mxu0
  %v715 = vadd.f32 0.0, %v714
  %716 = vdwg.mxu0
  %717 = vmatpush.msra.mxu0 %v664
  %718 = vmatpush.msra.mxu0 %v663
  %719 = vmatpush.msra.mxu0 %v662
  %720 = vmatpush.msra.mxu0 %v661
  %721 = vmatpush.msra.mxu0 %v660
  %722 = vmatpush.msra.mxu0 %v659
  %723 = vmatpush.msra.mxu0 %v658
  %724 = vmatpush.msra.mxu0 %v657
  %725 = vmatpush.msra.mxu0 %v656
  %726 = vmatpush.msra.mxu0 %v655
  %727 = vmatpush.msra.mxu0 %v654
  %728 = vmatpush.msra.mxu0 %v653
  %729 = vmatpush.msra.mxu0 %v652
  %730 = vmatpush.msra.mxu0 %v651
  %731 = vmatpush.msra.mxu0 %v650
  %732 = vmatpush.msra.mxu0 %v649
  %733 = vmatmul.f32.gmra.mxu0 1.0
  %v734 = vpop.f32.mrf.mxu0
  %v735 = vadd.f32 %v715, %v734
  %736 = vdwg.mxu0
  %737 = vmatpush.msra.mxu0 %v680
  %738 = vmatpush.msra.mxu0 %v679
  %739 = vmatpush.msra.mxu0 %v678
  %740 = vmatpush.msra.mxu0 %v677
  %741 = vmatpush.msra.mxu0 %v676
  %742 = vmatpush.msra.mxu0 %v675
  %743 = vmatpush.msra.mxu0 %v674
  %744 = vmatpush.msra.mxu0 %v673
  %745 = vmatpush.msra.mxu0 %v672
  %746 = vmatpush.msra.mxu0 %v671
  %747 = vmatpush.msra.mxu0 %v670
  %748 = vmatpush.msra.mxu0 %v669
  %749 = vmatpush.msra.mxu0 %v668
  %750 = vmatpush.msra.mxu0 %v667
  %751 = vmatpush.msra.mxu0 %v666
  %752 = vmatpush.msra.mxu0 %v665
  %753 = vmatmul.f32.gmra.mxu0 1.0
  %v754 = vpop.f32.mrf.mxu0
  %v755 = vadd.f32 %v735, %v754
  %756 = vdwg.mxu0
  %757 = vmatpush.msra.mxu0 %v696
  %758 = vmatpush.msra.mxu0 %v695
  %759 = vmatpush.msra.mxu0 %v694
  %760 = vmatpush.msra.mxu0 %v693
  %761 = vmatpush.msra.mxu0 %v692
  %762 = vmatpush.msra.mxu0 %v691
  %763 = vmatpush.msra.mxu0 %v690
  %764 = vmatpush.msra.mxu0 %v689
  %765 = vmatpush.msra.mxu0 %v688
  %766 = vmatpush.msra.mxu0 %v687
  %767 = vmatpush.msra.mxu0 %v686
  %768 = vmatpush.msra.mxu0 %v685
  %769 = vmatpush.msra.mxu0 %v684
  %770 = vmatpush.msra.mxu0 %v683
  %771 = vmatpush.msra.mxu0 %v682
  %772 = vmatpush.msra.mxu0 %v681
  %773 = vmatmul.f32.gmra.mxu0 1.0
  %v774 = vpop.f32.mrf.mxu0
  %v775 = vadd.f32 %v755, %v774
  %776 = vdwg.mxu0
  %v777 = vmul.f32 %v775, 0.001953125
  %v778 = vadd.f32 %v777, 1e-05
  %v779 = vrsqrt.pop %v778
  %v780 = vmul.f32 %v779, %v778
  %v781 = vmul.f32 %v780, %v779
  %v782 = vmul.f32 0.5, %v781
  %v783 = vsub.f32 1.5, %v782
  %v784 = vmul.f32 %v779, %v783
  %vm785 = vweird.f32 %v778
  %vm786 = vweird.f32 %v779
  %vm787 = vmor %vm785, %vm786
  %v788 = vsel %vm787, %v779, %v784
  %v789 = vmul.f32 %v485, %v788
  %v791 = vperm.slane %v789, 0
  %v793 = vmul.f32 %v569, %v791
  %v794 = vmul.f32 %v570, %v791
  %v795 = vmul.f32 %v571, %v791
  %v796 = vmul.f32 %v572, %v791
  %v797 = vmul.f32 %v573, %v791
  %v798 = vmul.f32 %v574, %v791
  %v799 = vmul.f32 %v575, %v791
  %v800 = vmul.f32 %v576, %v791
  %v801 = vmul.f32 %v577, %v791
  %v802 = vmul.f32 %v578, %v791
  %v803 = vmul.f32 %v579, %v791
  %v804 = vmul.f32 %v580, %v791
  %v805 = vmul.f32 %v581, %v791
  %v806 = vmul.f32 %v582, %v791
  %v807 = vmul.f32 %v583, %v791
  %v808 = vmul.f32 %v584, %v791
  %v809 = vmul.f32 %v585, %v791
  %v810 = vmul.f32 %v586, %v791
  %v811 = vmul.f32 %v587, %v791
  %v812 = vmul.f32 %v588, %v791
  %v813 = vmul.f32 %v589, %v791
  %v814 = vmul.f32 %v590, %v791
  %v815 = vmul.f32 %v591, %v791
  %v816 = vmul.f32 %v592, %v791
  %v817 = vmul.f32 %v593, %v791
  %v818 = vmul.f32 %v594, %v791
  %v819 = vmul.f32 %v595, %v791
  %v820 = vmul.f32 %v596, %v791
  %v821 = vmul.f32 %v597, %v791
  %v822 = vmul.f32 %v598, %v791
  %v823 = vmul.f32 %v599, %v791
  %v824 = vmul.f32 %v600, %v791
  %v825 = vmul.f32 %v601, %v791
  %v826 = vmul.f32 %v602, %v791
  %v827 = vmul.f32 %v603, %v791
  %v828 = vmul.f32 %v604, %v791
  %v829 = vmul.f32 %v605, %v791
  %v830 = vmul.f32 %v606, %v791
  %v831 = vmul.f32 %v607, %v791
  %v832 = vmul.f32 %v608, %v791
  %v833 = vmul.f32 %v609, %v791
  %v834 = vmul.f32 %v610, %v791
  %v835 = vmul.f32 %v611, %v791
  %v836 = vmul.f32 %v612, %v791
  %v837 = vmul.f32 %v613, %v791
  %v838 = vmul.f32 %v614, %v791
  %v839 = vmul.f32 %v615, %v791
  %v840 = vmul.f32 %v616, %v791
  %v841 = vmul.f32 %v617, %v791
  %v842 = vmul.f32 %v618, %v791
  %v843 = vmul.f32 %v619, %v791
  %v844 = vmul.f32 %v620, %v791
  %v845 = vmul.f32 %v621, %v791
  %v846 = vmul.f32 %v622, %v791
  %v847 = vmul.f32 %v623, %v791
  %v848 = vmul.f32 %v624, %v791
  %v849 = vmul.f32 %v625, %v791
  %v850 = vmul.f32 %v626, %v791
  %v851 = vmul.f32 %v627, %v791
  %v852 = vmul.f32 %v628, %v791
  %v853 = vmul.f32 %v629, %v791
  %v854 = vmul.f32 %v630, %v791
  %v855 = vmul.f32 %v631, %v791
  %v856 = vmul.f32 %v632, %v791
  %v858 = vperm.slane %v486, 0
  %v860 = vadd.f32 %v793, %v858
  %v861 = vadd.f32 %v794, %v858
  %v862 = vadd.f32 %v795, %v858
  %v863 = vadd.f32 %v796, %v858
  %v864 = vadd.f32 %v797, %v858
  %v865 = vadd.f32 %v798, %v858
  %v866 = vadd.f32 %v799, %v858
  %v867 = vadd.f32 %v800, %v858
  %v868 = vadd.f32 %v801, %v858
  %v869 = vadd.f32 %v802, %v858
  %v870 = vadd.f32 %v803, %v858
  %v871 = vadd.f32 %v804, %v858
  %v872 = vadd.f32 %v805, %v858
  %v873 = vadd.f32 %v806, %v858
  %v874 = vadd.f32 %v807, %v858
  %v875 = vadd.f32 %v808, %v858
  %v876 = vadd.f32 %v809, %v858
  %v877 = vadd.f32 %v810, %v858
  %v878 = vadd.f32 %v811, %v858
  %v879 = vadd.f32 %v812, %v858
  %v880 = vadd.f32 %v813, %v858
  %v881 = vadd.f32 %v814, %v858
  %v882 = vadd.f32 %v815, %v858
  %v883 = vadd.f32 %v816, %v858
  %v884 = vadd.f32 %v817, %v858
  %v885 = vadd.f32 %v818, %v858
  %v886 = vadd.f32 %v819, %v858
  %v887 = vadd.f32 %v820, %v858
  %v888 = vadd.f32 %v821, %v858
  %v889 = vadd.f32 %v822, %v858
  %v890 = vadd.f32 %v823, %v858
  %v891 = vadd.f32 %v824, %v858
  %v892 = vadd.f32 %v825, %v858
  %v893 = vadd.f32 %v826, %v858
  %v894 = vadd.f32 %v827, %v858
  %v895 = vadd.f32 %v828, %v858
  %v896 = vadd.f32 %v829, %v858
  %v897 = vadd.f32 %v830, %v858
  %v898 = vadd.f32 %v831, %v858
  %v899 = vadd.f32 %v832, %v858
  %v900 = vadd.f32 %v833, %v858
  %v901 = vadd.f32 %v834, %v858
  %v902 = vadd.f32 %v835, %v858
  %v903 = vadd.f32 %v836, %v858
  %v904 = vadd.f32 %v837, %v858
  %v905 = vadd.f32 %v838, %v858
  %v906 = vadd.f32 %v839, %v858
  %v907 = vadd.f32 %v840, %v858
  %v908 = vadd.f32 %v841, %v858
  %v909 = vadd.f32 %v842, %v858
  %v910 = vadd.f32 %v843, %v858
  %v911 = vadd.f32 %v844, %v858
  %v912 = vadd.f32 %v845, %v858
  %v913 = vadd.f32 %v846, %v858
  %v914 = vadd.f32 %v847, %v858
  %v915 = vadd.f32 %v848, %v858
  %v916 = vadd.f32 %v849, %v858
  %v917 = vadd.f32 %v850, %v858
  %v918 = vadd.f32 %v851, %v858
  %v919 = vadd.f32 %v852, %v858
  %v920 = vadd.f32 %v853, %v858
  %v921 = vadd.f32 %v854, %v858
  %v922 = vadd.f32 %v855, %v858
  %v923 = vadd.f32 %v856, %v858
  %vm924 = vcmp.ge.f32.partialorder %v860, 0.0
  %vm925 = vcmp.ge.f32.partialorder %v861, 0.0
  %vm926 = vcmp.ge.f32.partialorder %v862, 0.0
  %vm927 = vcmp.ge.f32.partialorder %v863, 0.0
  %vm928 = vcmp.ge.f32.partialorder %v864, 0.0
  %vm929 = vcmp.ge.f32.partialorder %v865, 0.0
  %vm930 = vcmp.ge.f32.partialorder %v866, 0.0
  %vm931 = vcmp.ge.f32.partialorder %v867, 0.0
  %vm932 = vcmp.ge.f32.partialorder %v868, 0.0
  %vm933 = vcmp.ge.f32.partialorder %v869, 0.0
  %vm934 = vcmp.ge.f32.partialorder %v870, 0.0
  %vm935 = vcmp.ge.f32.partialorder %v871, 0.0
  %vm936 = vcmp.ge.f32.partialorder %v872, 0.0
  %vm937 = vcmp.ge.f32.partialorder %v873, 0.0
  %vm938 = vcmp.ge.f32.partialorder %v874, 0.0
  %vm939 = vcmp.ge.f32.partialorder %v875, 0.0
  %vm940 = vcmp.ge.f32.partialorder %v876, 0.0
  %vm941 = vcmp.ge.f32.partialorder %v877, 0.0
  %vm942 = vcmp.ge.f32.partialorder %v878, 0.0
  %vm943 = vcmp.ge.f32.partialorder %v879, 0.0
  %vm944 = vcmp.ge.f32.partialorder %v880, 0.0
  %vm945 = vcmp.ge.f32.partialorder %v881, 0.0
  %vm946 = vcmp.ge.f32.partialorder %v882, 0.0
  %vm947 = vcmp.ge.f32.partialorder %v883, 0.0
  %vm948 = vcmp.ge.f32.partialorder %v884, 0.0
  %vm949 = vcmp.ge.f32.partialorder %v885, 0.0
  %vm950 = vcmp.ge.f32.partialorder %v886, 0.0
  %vm951 = vcmp.ge.f32.partialorder %v887, 0.0
  %vm952 = vcmp.ge.f32.partialorder %v888, 0.0
  %vm953 = vcmp.ge.f32.partialorder %v889, 0.0
  %vm954 = vcmp.ge.f32.partialorder %v890, 0.0
  %vm955 = vcmp.ge.f32.partialorder %v891, 0.0
  %vm956 = vcmp.ge.f32.partialorder %v892, 0.0
  %vm957 = vcmp.ge.f32.partialorder %v893, 0.0
  %vm958 = vcmp.ge.f32.partialorder %v894, 0.0
  %vm959 = vcmp.ge.f32.partialorder %v895, 0.0
  %vm960 = vcmp.ge.f32.partialorder %v896, 0.0
  %vm961 = vcmp.ge.f32.partialorder %v897, 0.0
  %vm962 = vcmp.ge.f32.partialorder %v898, 0.0
  %vm963 = vcmp.ge.f32.partialorder %v899, 0.0
  %vm964 = vcmp.ge.f32.partialorder %v900, 0.0
  %vm965 = vcmp.ge.f32.partialorder %v901, 0.0
  %vm966 = vcmp.ge.f32.partialorder %v902, 0.0
  %vm967 = vcmp.ge.f32.partialorder %v903, 0.0
  %vm968 = vcmp.ge.f32.partialorder %v904, 0.0
  %vm969 = vcmp.ge.f32.partialorder %v905, 0.0
  %vm970 = vcmp.ge.f32.partialorder %v906, 0.0
  %vm971 = vcmp.ge.f32.partialorder %v907, 0.0
  %vm972 = vcmp.ge.f32.partialorder %v908, 0.0
  %vm973 = vcmp.ge.f32.partialorder %v909, 0.0
  %vm974 = vcmp.ge.f32.partialorder %v910, 0.0
  %vm975 = vcmp.ge.f32.partialorder %v911, 0.0
  %vm976 = vcmp.ge.f32.partialorder %v912, 0.0
  %vm977 = vcmp.ge.f32.partialorder %v913, 0.0
  %vm978 = vcmp.ge.f32.partialorder %v914, 0.0
  %vm979 = vcmp.ge.f32.partialorder %v915, 0.0
  %vm980 = vcmp.ge.f32.partialorder %v916, 0.0
  %vm981 = vcmp.ge.f32.partialorder %v917, 0.0
  %vm982 = vcmp.ge.f32.partialorder %v918, 0.0
  %vm983 = vcmp.ge.f32.partialorder %v919, 0.0
  %vm984 = vcmp.ge.f32.partialorder %v920, 0.0
  %vm985 = vcmp.ge.f32.partialorder %v921, 0.0
  %vm986 = vcmp.ge.f32.partialorder %v922, 0.0
  %vm987 = vcmp.ge.f32.partialorder %v923, 0.0
  %v988 = vmul.f32 %v860, 0.2
  %v989 = vmul.f32 %v861, 0.2
  %v990 = vmul.f32 %v862, 0.2
  %v991 = vmul.f32 %v863, 0.2
  %v992 = vmul.f32 %v864, 0.2
  %v993 = vmul.f32 %v865, 0.2
  %v994 = vmul.f32 %v866, 0.2
  %v995 = vmul.f32 %v867, 0.2
  %v996 = vmul.f32 %v868, 0.2
  %v997 = vmul.f32 %v869, 0.2
  %v998 = vmul.f32 %v870, 0.2
  %v999 = vmul.f32 %v871, 0.2
  %v1000 = vmul.f32 %v872, 0.2
  %v1001 = vmul.f32 %v873, 0.2
  %v1002 = vmul.f32 %v874, 0.2
  %v1003 = vmul.f32 %v875, 0.2
  %v1004 = vmul.f32 %v876, 0.2
  %v1005 = vmul.f32 %v877, 0.2
  %v1006 = vmul.f32 %v878, 0.2
  %v1007 = vmul.f32 %v879, 0.2
  %v1008 = vmul.f32 %v880, 0.2
  %v1009 = vmul.f32 %v881, 0.2
  %v1010 = vmul.f32 %v882, 0.2
  %v1011 = vmul.f32 %v883, 0.2
  %v1012 = vmul.f32 %v884, 0.2
  %v1013 = vmul.f32 %v885, 0.2
  %v1014 = vmul.f32 %v886, 0.2
  %v1015 = vmul.f32 %v887, 0.2
  %v1016 = vmul.f32 %v888, 0.2
  %v1017 = vmul.f32 %v889, 0.2
  %v1018 = vmul.f32 %v890, 0.2
  %v1019 = vmul.f32 %v891, 0.2
  %v1020 = vmul.f32 %v892, 0.2
  %v1021 = vmul.f32 %v893, 0.2
  %v1022 = vmul.f32 %v894, 0.2
  %v1023 = vmul.f32 %v895, 0.2
  %v1024 = vmul.f32 %v896, 0.2
  %v1025 = vmul.f32 %v897, 0.2
  %v1026 = vmul.f32 %v898, 0.2
  %v1027 = vmul.f32 %v899, 0.2
  %v1028 = vmul.f32 %v900, 0.2
  %v1029 = vmul.f32 %v901, 0.2
  %v1030 = vmul.f32 %v902, 0.2
  %v1031 = vmul.f32 %v903, 0.2
  %v1032 = vmul.f32 %v904, 0.2
  %v1033 = vmul.f32 %v905, 0.2
  %v1034 = vmul.f32 %v906, 0.2
  %v1035 = vmul.f32 %v907, 0.2
  %v1036 = vmul.f32 %v908, 0.2
  %v1037 = vmul.f32 %v909, 0.2
  %v1038 = vmul.f32 %v910, 0.2
  %v1039 = vmul.f32 %v911, 0.2
  %v1040 = vmul.f32 %v912, 0.2
  %v1041 = vmul.f32 %v913, 0.2
  %v1042 = vmul.f32 %v914, 0.2
  %v1043 = vmul.f32 %v915, 0.2
  %v1044 = vmul.f32 %v916, 0.2
  %v1045 = vmul.f32 %v917, 0.2
  %v1046 = vmul.f32 %v918, 0.2
  %v1047 = vmul.f32 %v919, 0.2
  %v1048 = vmul.f32 %v920, 0.2
  %v1049 = vmul.f32 %v921, 0.2
  %v1050 = vmul.f32 %v922, 0.2
  %v1051 = vmul.f32 %v923, 0.2
  %v1052 = vsel %vm924, %v860, %v988
  %v1053 = vsel %vm925, %v861, %v989
  %v1054 = vsel %vm926, %v862, %v990
  %v1055 = vsel %vm927, %v863, %v991
  %v1056 = vsel %vm928, %v864, %v992
  %v1057 = vsel %vm929, %v865, %v993
  %v1058 = vsel %vm930, %v866, %v994
  %v1059 = vsel %vm931, %v867, %v995
  %v1060 = vsel %vm932, %v868, %v996
  %v1061 = vsel %vm933, %v869, %v997
  %v1062 = vsel %vm934, %v870, %v998
  %v1063 = vsel %vm935, %v871, %v999
  %v1064 = vsel %vm936, %v872, %v1000
  %v1065 = vsel %vm937, %v873, %v1001
  %v1066 = vsel %vm938, %v874, %v1002
  %v1067 = vsel %vm939, %v875, %v1003
  %v1068 = vsel %vm940, %v876, %v1004
  %v1069 = vsel %vm941, %v877, %v1005
  %v1070 = vsel %vm942, %v878, %v1006
  %v1071 = vsel %vm943, %v879, %v1007
  %v1072 = vsel %vm944, %v880, %v1008
  %v1073 = vsel %vm945, %v881, %v1009
  %v1074 = vsel %vm946, %v882, %v1010
  %v1075 = vsel %vm947, %v883, %v1011
  %v1076 = vsel %vm948, %v884, %v1012
  %v1077 = vsel %vm949, %v885, %v1013
  %v1078 = vsel %vm950, %v886, %v1014
  %v1079 = vsel %vm951, %v887, %v1015
  %v1080 = vsel %vm952, %v888, %v1016
  %v1081 = vsel %vm953, %v889, %v1017
  %v1082 = vsel %vm954, %v890, %v1018
  %v1083 = vsel %vm955, %v891, %v1019
  %v1084 = vsel %vm956, %v892, %v1020
  %v1085 = vsel %vm957, %v893, %v1021
  %v1086 = vsel %vm958, %v894, %v1022
  %v1087 = vsel %vm959, %v895, %v1023
  %v1088 = vsel %vm960, %v896, %v1024
  %v1089 = vsel %vm961, %v897, %v1025
  %v1090 = vsel %vm962, %v898, %v1026
  %v1091 = vsel %vm963, %v899, %v1027
  %v1092 = vsel %vm964, %v900, %v1028
  %v1093 = vsel %vm965, %v901, %v1029
  %v1094 = vsel %vm966, %v902, %v1030
  %v1095 = vsel %vm967, %v903, %v1031
  %v1096 = vsel %vm968, %v904, %v1032
  %v1097 = vsel %vm969, %v905, %v1033
  %v1098 = vsel %vm970, %v906, %v1034
  %v1099 = vsel %vm971, %v907, %v1035
  %v1100 = vsel %vm972, %v908, %v1036
  %v1101 = vsel %vm973, %v909, %v1037
  %v1102 = vsel %vm974, %v910, %v1038
  %v1103 = vsel %vm975, %v911, %v1039
  %v1104 = vsel %vm976, %v912, %v1040
  %v1105 = vsel %vm977, %v913, %v1041
  %v1106 = vsel %vm978, %v914, %v1042
  %v1107 = vsel %vm979, %v915, %v1043
  %v1108 = vsel %vm980, %v916, %v1044
  %v1109 = vsel %vm981, %v917, %v1045
  %v1110 = vsel %vm982, %v918, %v1046
  %v1111 = vsel %vm983, %v919, %v1047
  %v1112 = vsel %vm984, %v920, %v1048
  %v1113 = vsel %vm985, %v921, %v1049
  %v1114 = vsel %vm986, %v922, %v1050
  %v1115 = vsel %vm987, %v923, %v1051
  %vm1116 = vcmask 261120
  %1117 = vst.msk [vmem:[%s4] sm:$0xff] %vm1116, %v1052
  %1118 = vst.msk [vmem:[%s4 + $0x8] sm:$0xff] %vm1116, %v1053
  %1119 = vst.msk [vmem:[%s4 + $0x10] sm:$0xff] %vm1116, %v1054
  %1120 = vst.msk [vmem:[%s4 + $0x18] sm:$0xff] %vm1116, %v1055
  %1121 = vst.msk [vmem:[%s4 + $0x20] sm:$0xff] %vm1116, %v1056
  %1122 = vst.msk [vmem:[%s4 + $0x28] sm:$0xff] %vm1116, %v1057
  %1123 = vst.msk [vmem:[%s4 + $0x30] sm:$0xff] %vm1116, %v1058
  %1124 = vst.msk [vmem:[%s4 + $0x38] sm:$0xff] %vm1116, %v1059
  %1125 = vst.msk [vmem:[%s4 + $0x40] sm:$0xff] %vm1116, %v1060
  %1126 = vst.msk [vmem:[%s4 + $0x48] sm:$0xff] %vm1116, %v1061
  %1127 = vst.msk [vmem:[%s4 + $0x50] sm:$0xff] %vm1116, %v1062
  %1128 = vst.msk [vmem:[%s4 + $0x58] sm:$0xff] %vm1116, %v1063
  %1129 = vst.msk [vmem:[%s4 + $0x60] sm:$0xff] %vm1116, %v1064
  %1130 = vst.msk [vmem:[%s4 + $0x68] sm:$0xff] %vm1116, %v1065
  %1131 = vst.msk [vmem:[%s4 + $0x70] sm:$0xff] %vm1116, %v1066
  %1132 = vst.msk [vmem:[%s4 + $0x78] sm:$0xff] %vm1116, %v1067
  %1133 = vst.msk [vmem:[%s4 + $0x80] sm:$0xff] %vm1116, %v1068
  %1134 = vst.msk [vmem:[%s4 + $0x88] sm:$0xff] %vm1116, %v1069
  %1135 = vst.msk [vmem:[%s4 + $0x90] sm:$0xff] %vm1116, %v1070
  %1136 = vst.msk [vmem:[%s4 + $0x98] sm:$0xff] %vm1116, %v1071
  %1137 = vst.msk [vmem:[%s4 + $0xa0] sm:$0xff] %vm1116, %v1072
  %1138 = vst.msk [vmem:[%s4 + $0xa8] sm:$0xff] %vm1116, %v1073
  %1139 = vst.msk [vmem:[%s4 + $0xb0] sm:$0xff] %vm1116, %v1074
  %1140 = vst.msk [vmem:[%s4 + $0xb8] sm:$0xff] %vm1116, %v1075
  %1141 = vst.msk [vmem:[%s4 + $0xc0] sm:$0xff] %vm1116, %v1076
  %1142 = vst.msk [vmem:[%s4 + $0xc8] sm:$0xff] %vm1116, %v1077
  %1143 = vst.msk [vmem:[%s4 + $0xd0] sm:$0xff] %vm1116, %v1078
  %1144 = vst.msk [vmem:[%s4 + $0xd8] sm:$0xff] %vm1116, %v1079
  %1145 = vst.msk [vmem:[%s4 + $0xe0] sm:$0xff] %vm1116, %v1080
  %1146 = vst.msk [vmem:[%s4 + $0xe8] sm:$0xff] %vm1116, %v1081
  %1147 = vst.msk [vmem:[%s4 + $0xf0] sm:$0xff] %vm1116, %v1082
  %1148 = vst.msk [vmem:[%s4 + $0xf8] sm:$0xff] %vm1116, %v1083
  %1149 = vst.msk [vmem:[%s4 + $0x100] sm:$0xff] %vm1116, %v1084
  %1150 = vst.msk [vmem:[%s4 + $0x108] sm:$0xff] %vm1116, %v1085
  %1151 = vst.msk [vmem:[%s4 + $0x110] sm:$0xff] %vm1116, %v1086
  %1152 = vst.msk [vmem:[%s4 + $0x118] sm:$0xff] %vm1116, %v1087
  %1153 = vst.msk [vmem:[%s4 + $0x120] sm:$0xff] %vm1116, %v1088
  %1154 = vst.msk [vmem:[%s4 + $0x128] sm:$0xff] %vm1116, %v1089
  %1155 = vst.msk [vmem:[%s4 + $0x130] sm:$0xff] %vm1116, %v1090
  %1156 = vst.msk [vmem:[%s4 + $0x138] sm:$0xff] %vm1116, %v1091
  %1157 = vst.msk [vmem:[%s4 + $0x140] sm:$0xff] %vm1116, %v1092
  %1158 = vst.msk [vmem:[%s4 + $0x148] sm:$0xff] %vm1116, %v1093
  %1159 = vst.msk [vmem:[%s4 + $0x150] sm:$0xff] %vm1116, %v1094
  %1160 = vst.msk [vmem:[%s4 + $0x158] sm:$0xff] %vm1116, %v1095
  %1161 = vst.msk [vmem:[%s4 + $0x160] sm:$0xff] %vm1116, %v1096
  %1162 = vst.msk [vmem:[%s4 + $0x168] sm:$0xff] %vm1116, %v1097
  %1163 = vst.msk [vmem:[%s4 + $0x170] sm:$0xff] %vm1116, %v1098
  %1164 = vst.msk [vmem:[%s4 + $0x178] sm:$0xff] %vm1116, %v1099
  %1165 = vst.msk [vmem:[%s4 + $0x180] sm:$0xff] %vm1116, %v1100
  %1166 = vst.msk [vmem:[%s4 + $0x188] sm:$0xff] %vm1116, %v1101
  %1167 = vst.msk [vmem:[%s4 + $0x190] sm:$0xff] %vm1116, %v1102
  %1168 = vst.msk [vmem:[%s4 + $0x198] sm:$0xff] %vm1116, %v1103
  %1169 = vst.msk [vmem:[%s4 + $0x1a0] sm:$0xff] %vm1116, %v1104
  %1170 = vst.msk [vmem:[%s4 + $0x1a8] sm:$0xff] %vm1116, %v1105
  %1171 = vst.msk [vmem:[%s4 + $0x1b0] sm:$0xff] %vm1116, %v1106
  %1172 = vst.msk [vmem:[%s4 + $0x1b8] sm:$0xff] %vm1116, %v1107
  %1173 = vst.msk [vmem:[%s4 + $0x1c0] sm:$0xff] %vm1116, %v1108
  %1174 = vst.msk [vmem:[%s4 + $0x1c8] sm:$0xff] %vm1116, %v1109
  %1175 = vst.msk [vmem:[%s4 + $0x1d0] sm:$0xff] %vm1116, %v1110
  %1176 = vst.msk [vmem:[%s4 + $0x1d8] sm:$0xff] %vm1116, %v1111
  %1177 = vst.msk [vmem:[%s4 + $0x1e0] sm:$0xff] %vm1116, %v1112
  %1178 = vst.msk [vmem:[%s4 + $0x1e8] sm:$0xff] %vm1116, %v1113
  %1179 = vst.msk [vmem:[%s4 + $0x1f0] sm:$0xff] %vm1116, %v1114
  %1180 = vst.msk [vmem:[%s4 + $0x1f8] sm:$0xff] %vm1116, %v1115
  // Predicated region
  $region18: #{vae_encoder_forward.4} parent=0 // pred_check
    _
  $region19: #{vae_encoder_forward.4} parent=0 // pred_check_branch
    %1182 = sbr.rel (0) target = $region21
  $region20: #{vae_encoder_forward.4} parent=0 // pred_region
    _
  $region21: #{vae_encoder_forward.4} parent=0 // pred_fallthru
    _
  // Predicated region
  $region22: #{vae_encoder_forward.4} parent=0 // pred_check
    _
  $region23: #{vae_encoder_forward.4} parent=0 // pred_check_branch
    %1184 = sbr.rel (0) target = $region25
  $region24: #{vae_encoder_forward.4} parent=0 // pred_region
    _
  $region25: #{vae_encoder_forward.4} parent=0 // pred_fallthru
    _

// kernel: vae_encoder_forward.5
$region0: #{vae_encoder_forward.5}
  #allocation0 [shape = 'u32[]', space=smem, size = 0x4, offset = 0x4, fixed_abs, tag = 'smem constant byte address 0x4 - core index']
  #allocation1 [shape = 'u32[72,128]{1,0:T(1,128)}', space=vmem, size = 0x9000, scoped, tag = 'internal scratch']
  %s0 = inlined_call_operand.vmem [shape: f32[128,512], index: 0, kind: input, shape index: {}]
  %s1 = inlined_call_operand.vmem [shape: f32[512,64], index: 1, kind: input, shape index: {}]
  %s2 = inlined_call_operand.vmem [shape: f32[1,64], index: 2, kind: input, shape index: {}]
  %s3 = inlined_call_operand.vmem [shape: f32[1,64], index: 3, kind: input, shape index: {}]
  %s4 = inlined_call_operand.vmem [shape: f32[128,64], index: 4, kind: output, shape index: {}]
  %s5 = sld [smem:[#allocation0]]
  $region26: #{vae_encoder_forward.5} parent=0
    _
  %s7 = ssub.s32 1, %s5
  %s8 = scalar_select 0, %s7, %s5
  // Predicated region
  $region2: #{vae_encoder_forward.5} parent=0 // pred_check
    _
  $region3: #{vae_encoder_forward.5} parent=0 // pred_check_branch
    %10 = sbr.rel (0) target = $region5
  $region4: #{vae_encoder_forward.5} parent=0 // pred_region
    _
  $region5: #{vae_encoder_forward.5} parent=0 // pred_fallthru
    _
  // Predicated region
  $region6: #{vae_encoder_forward.5} parent=0 // pred_check
    _
  $region7: #{vae_encoder_forward.5} parent=0 // pred_check_branch
    %12 = sbr.rel (0) target = $region9
  $region8: #{vae_encoder_forward.5} parent=0 // pred_region
    _
  $region9: #{vae_encoder_forward.5} parent=0 // pred_fallthru
    _
  // Predicated region
  $region10: #{vae_encoder_forward.5} parent=0 // pred_check
    _
  $region11: #{vae_encoder_forward.5} parent=0 // pred_check_branch
    %14 = sbr.rel (0) target = $region13
  $region12: #{vae_encoder_forward.5} parent=0 // pred_region
    _
  $region13: #{vae_encoder_forward.5} parent=0 // pred_fallthru
    _
  // Predicated region
  $region14: #{vae_encoder_forward.5} parent=0 // pred_check
    _
  $region15: #{vae_encoder_forward.5} parent=0 // pred_check_branch
    %16 = sbr.rel (0) target = $region17
  $region16: #{vae_encoder_forward.5} parent=0 // pred_region
    _
  $region17: #{vae_encoder_forward.5} parent=0 // pred_fallthru
    _
  %v17 = vld [vmem:[%s0] sm:$0xff]
  %v18 = vld [vmem:[%s0 + $0x8] sm:$0xff]
  %v19 = vld [vmem:[%s0 + $0x10] sm:$0xff]
  %v20 = vld [vmem:[%s0 + $0x18] sm:$0xff]
  %v21 = vld [vmem:[%s0 + $0x20] sm:$0xff]
  %v22 = vld [vmem:[%s0 + $0x28] sm:$0xff]
  %v23 = vld [vmem:[%s0 + $0x30] sm:$0xff]
  %v24 = vld [vmem:[%s0 + $0x38] sm:$0xff]
  %v25 = vld [vmem:[%s0 + $0x40] sm:$0xff]
  %v26 = vld [vmem:[%s0 + $0x48] sm:$0xff]
  %v27 = vld [vmem:[%s0 + $0x50] sm:$0xff]
  %v28 = vld [vmem:[%s0 + $0x58] sm:$0xff]
  %v29 = vld [vmem:[%s0 + $0x60] sm:$0xff]
  %v30 = vld [vmem:[%s0 + $0x68] sm:$0xff]
  %v31 = vld [vmem:[%s0 + $0x70] sm:$0xff]
  %v32 = vld [vmem:[%s0 + $0x78] sm:$0xff]
  %v33 = vld [vmem:[%s0 + $0x80] sm:$0xff]
  %v34 = vld [vmem:[%s0 + $0x88] sm:$0xff]
  %v35 = vld [vmem:[%s0 + $0x90] sm:$0xff]
  %v36 = vld [vmem:[%s0 + $0x98] sm:$0xff]
  %v37 = vld [vmem:[%s0 + $0xa0] sm:$0xff]
  %v38 = vld [vmem:[%s0 + $0xa8] sm:$0xff]
  %v39 = vld [vmem:[%s0 + $0xb0] sm:$0xff]
  %v40 = vld [vmem:[%s0 + $0xb8] sm:$0xff]
  %v41 = vld [vmem:[%s0 + $0xc0] sm:$0xff]
  %v42 = vld [vmem:[%s0 + $0xc8] sm:$0xff]
  %v43 = vld [vmem:[%s0 + $0xd0] sm:$0xff]
  %v44 = vld [vmem:[%s0 + $0xd8] sm:$0xff]
  %v45 = vld [vmem:[%s0 + $0xe0] sm:$0xff]
  %v46 = vld [vmem:[%s0 + $0xe8] sm:$0xff]
  %v47 = vld [vmem:[%s0 + $0xf0] sm:$0xff]
  %v48 = vld [vmem:[%s0 + $0xf8] sm:$0xff]
  %v49 = vld [vmem:[%s0 + $0x100] sm:$0xff]
  %v50 = vld [vmem:[%s0 + $0x108] sm:$0xff]
  %v51 = vld [vmem:[%s0 + $0x110] sm:$0xff]
  %v52 = vld [vmem:[%s0 + $0x118] sm:$0xff]
  %v53 = vld [vmem:[%s0 + $0x120] sm:$0xff]
  %v54 = vld [vmem:[%s0 + $0x128] sm:$0xff]
  %v55 = vld [vmem:[%s0 + $0x130] sm:$0xff]
  %v56 = vld [vmem:[%s0 + $0x138] sm:$0xff]
  %v57 = vld [vmem:[%s0 + $0x140] sm:$0xff]
  %v58 = vld [vmem:[%s0 + $0x148] sm:$0xff]
  %v59 = vld [vmem:[%s0 + $0x150] sm:$0xff]
  %v60 = vld [vmem:[%s0 + $0x158] sm:$0xff]
  %v61 = vld [vmem:[%s0 + $0x160] sm:$0xff]
  %v62 = vld [vmem:[%s0 + $0x168] sm:$0xff]
  %v63 = vld [vmem:[%s0 + $0x170] sm:$0xff]
  %v64 = vld [vmem:[%s0 + $0x178] sm:$0xff]
  %v65 = vld [vmem:[%s0 + $0x180] sm:$0xff]
  %v66 = vld [vmem:[%s0 + $0x188] sm:$0xff]
  %v67 = vld [vmem:[%s0 + $0x190] sm:$0xff]
  %v68 = vld [vmem:[%s0 + $0x198] sm:$0xff]
  %v69 = vld [vmem:[%s0 + $0x1a0] sm:$0xff]
  %v70 = vld [vmem:[%s0 + $0x1a8] sm:$0xff]
  %v71 = vld [vmem:[%s0 + $0x1b0] sm:$0xff]
  %v72 = vld [vmem:[%s0 + $0x1b8] sm:$0xff]
  %v73 = vld [vmem:[%s0 + $0x1c0] sm:$0xff]
  %v74 = vld [vmem:[%s0 + $0x1c8] sm:$0xff]
  %v75 = vld [vmem:[%s0 + $0x1d0] sm:$0xff]
  %v76 = vld [vmem:[%s0 + $0x1d8] sm:$0xff]
  %v77 = vld [vmem:[%s0 + $0x1e0] sm:$0xff]
  %v78 = vld [vmem:[%s0 + $0x1e8] sm:$0xff]
  %v79 = vld [vmem:[%s0 + $0x1f0] sm:$0xff]
  %v80 = vld [vmem:[%s0 + $0x1f8] sm:$0xff]
  %v81 = vld [vmem:[%s1] sm:$0xff]
  %v82 = vld [vmem:[%s1 + $0x8] sm:$0xff]
  %v83 = vld [vmem:[%s1 + $0x10] sm:$0xff]
  %v84 = vld [vmem:[%s1 + $0x18] sm:$0xff]
  %v85 = vld [vmem:[%s1 + $0x20] sm:$0xff]
  %v86 = vld [vmem:[%s1 + $0x28] sm:$0xff]
  %v87 = vld [vmem:[%s1 + $0x30] sm:$0xff]
  %v88 = vld [vmem:[%s1 + $0x38] sm:$0xff]
  %v89 = vld [vmem:[%s1 + $0x40] sm:$0xff]
  %v90 = vld [vmem:[%s1 + $0x48] sm:$0xff]
  %v91 = vld [vmem:[%s1 + $0x50] sm:$0xff]
  %v92 = vld [vmem:[%s1 + $0x58] sm:$0xff]
  %v93 = vld [vmem:[%s1 + $0x60] sm:$0xff]
  %v94 = vld [vmem:[%s1 + $0x68] sm:$0xff]
  %v95 = vld [vmem:[%s1 + $0x70] sm:$0xff]
  %v96 = vld [vmem:[%s1 + $0x78] sm:$0xff]
  %v97 = vld [vmem:[%s1 + $0x80] sm:$0xff]
  %v98 = vld [vmem:[%s1 + $0x88] sm:$0xff]
  %v99 = vld [vmem:[%s1 + $0x90] sm:$0xff]
  %v100 = vld [vmem:[%s1 + $0x98] sm:$0xff]
  %v101 = vld [vmem:[%s1 + $0xa0] sm:$0xff]
  %v102 = vld [vmem:[%s1 + $0xa8] sm:$0xff]
  %v103 = vld [vmem:[%s1 + $0xb0] sm:$0xff]
  %v104 = vld [vmem:[%s1 + $0xb8] sm:$0xff]
  %v105 = vld [vmem:[%s1 + $0xc0] sm:$0xff]
  %v106 = vld [vmem:[%s1 + $0xc8] sm:$0xff]
  %v107 = vld [vmem:[%s1 + $0xd0] sm:$0xff]
  %v108 = vld [vmem:[%s1 + $0xd8] sm:$0xff]
  %v109 = vld [vmem:[%s1 + $0xe0] sm:$0xff]
  %v110 = vld [vmem:[%s1 + $0xe8] sm:$0xff]
  %v111 = vld [vmem:[%s1 + $0xf0] sm:$0xff]
  %v112 = vld [vmem:[%s1 + $0xf8] sm:$0xff]
  %v113 = vld [vmem:[%s1 + $0x100] sm:$0xff]
  %v114 = vld [vmem:[%s1 + $0x108] sm:$0xff]
  %v115 = vld [vmem:[%s1 + $0x110] sm:$0xff]
  %v116 = vld [vmem:[%s1 + $0x118] sm:$0xff]
  %v117 = vld [vmem:[%s1 + $0x120] sm:$0xff]
  %v118 = vld [vmem:[%s1 + $0x128] sm:$0xff]
  %v119 = vld [vmem:[%s1 + $0x130] sm:$0xff]
  %v120 = vld [vmem:[%s1 + $0x138] sm:$0xff]
  %v121 = vld [vmem:[%s1 + $0x140] sm:$0xff]
  %v122 = vld [vmem:[%s1 + $0x148] sm:$0xff]
  %v123 = vld [vmem:[%s1 + $0x150] sm:$0xff]
  %v124 = vld [vmem:[%s1 + $0x158] sm:$0xff]
  %v125 = vld [vmem:[%s1 + $0x160] sm:$0xff]
  %v126 = vld [vmem:[%s1 + $0x168] sm:$0xff]
  %v127 = vld [vmem:[%s1 + $0x170] sm:$0xff]
  %v128 = vld [vmem:[%s1 + $0x178] sm:$0xff]
  %v129 = vld [vmem:[%s1 + $0x180] sm:$0xff]
  %v130 = vld [vmem:[%s1 + $0x188] sm:$0xff]
  %v131 = vld [vmem:[%s1 + $0x190] sm:$0xff]
  %v132 = vld [vmem:[%s1 + $0x198] sm:$0xff]
  %v133 = vld [vmem:[%s1 + $0x1a0] sm:$0xff]
  %v134 = vld [vmem:[%s1 + $0x1a8] sm:$0xff]
  %v135 = vld [vmem:[%s1 + $0x1b0] sm:$0xff]
  %v136 = vld [vmem:[%s1 + $0x1b8] sm:$0xff]
  %v137 = vld [vmem:[%s1 + $0x1c0] sm:$0xff]
  %v138 = vld [vmem:[%s1 + $0x1c8] sm:$0xff]
  %v139 = vld [vmem:[%s1 + $0x1d0] sm:$0xff]
  %v140 = vld [vmem:[%s1 + $0x1d8] sm:$0xff]
  %v141 = vld [vmem:[%s1 + $0x1e0] sm:$0xff]
  %v142 = vld [vmem:[%s1 + $0x1e8] sm:$0xff]
  %v143 = vld [vmem:[%s1 + $0x1f0] sm:$0xff]
  %v144 = vld [vmem:[%s1 + $0x1f8] sm:$0xff]
  %145 = vmatpush.msra.mxu0 %v96
  %146 = vmatpush.msra.mxu0 %v95
  %147 = vmatpush.msra.mxu0 %v94
  %148 = vmatpush.msra.mxu0 %v93
  %149 = vmatpush.msra.mxu0 %v92
  %150 = vmatpush.msra.mxu0 %v91
  %151 = vmatpush.msra.mxu0 %v90
  %152 = vmatpush.msra.mxu0 %v89
  %153 = vmatpush.msra.mxu0 %v88
  %154 = vmatpush.msra.mxu0 %v87
  %155 = vmatpush.msra.mxu0 %v86
  %156 = vmatpush.msra.mxu0 %v85
  %157 = vmatpush.msra.mxu0 %v84
  %158 = vmatpush.msra.mxu0 %v83
  %159 = vmatpush.msra.mxu0 %v82
  %160 = vmatpush.msra.mxu0 %v81
  %161 = vmatmul.f32.gmra.mxu0 %v17
  %v162 = vpop.f32.mrf.mxu0
  %v163 = vadd.f32 0.0, %v162
  %164 = vmatmul.f32.gmra.mxu0 %v21
  %v165 = vpop.f32.mrf.mxu0
  %v166 = vadd.f32 0.0, %v165
  %167 = vmatmul.f32.gmra.mxu0 %v25
  %v168 = vpop.f32.mrf.mxu0
  %v169 = vadd.f32 0.0, %v168
  %170 = vmatmul.f32.gmra.mxu0 %v29
  %v171 = vpop.f32.mrf.mxu0
  %v172 = vadd.f32 0.0, %v171
  %173 = vmatmul.f32.gmra.mxu0 %v33
  %v174 = vpop.f32.mrf.mxu0
  %v175 = vadd.f32 0.0, %v174
  %176 = vmatmul.f32.gmra.mxu0 %v37
  %v177 = vpop.f32.mrf.mxu0
  %v178 = vadd.f32 0.0, %v177
  %179 = vmatmul.f32.gmra.mxu0 %v41
  %v180 = vpop.f32.mrf.mxu0
  %v181 = vadd.f32 0.0, %v180
  %182 = vmatmul.f32.gmra.mxu0 %v45
  %v183 = vpop.f32.mrf.mxu0
  %v184 = vadd.f32 0.0, %v183
  %185 = vmatmul.f32.gmra.mxu0 %v49
  %v186 = vpop.f32.mrf.mxu0
  %v187 = vadd.f32 0.0, %v186
  %188 = vmatmul.f32.gmra.mxu0 %v53
  %v189 = vpop.f32.mrf.mxu0
  %v190 = vadd.f32 0.0, %v189
  %191 = vmatmul.f32.gmra.mxu0 %v57
  %v192 = vpop.f32.mrf.mxu0
  %v193 = vadd.f32 0.0, %v192
  %194 = vmatmul.f32.gmra.mxu0 %v61
  %v195 = vpop.f32.mrf.mxu0
  %v196 = vadd.f32 0.0, %v195
  %197 = vmatmul.f32.gmra.mxu0 %v65
  %v198 = vpop.f32.mrf.mxu0
  %v199 = vadd.f32 0.0, %v198
  %200 = vmatmul.f32.gmra.mxu0 %v69
  %v201 = vpop.f32.mrf.mxu0
  %v202 = vadd.f32 0.0, %v201
  %203 = vmatmul.f32.gmra.mxu0 %v73
  %v204 = vpop.f32.mrf.mxu0
  %v205 = vadd.f32 0.0, %v204
  %206 = vmatmul.f32.gmra.mxu0 %v77
  %v207 = vpop.f32.mrf.mxu0
  %v208 = vadd.f32 0.0, %v207
  %209 = vdwg.mxu0
  %210 = vmatpush.msra.mxu0 %v112
  %211 = vmatpush.msra.mxu0 %v111
  %212 = vmatpush.msra.mxu0 %v110
  %213 = vmatpush.msra.mxu0 %v109
  %214 = vmatpush.msra.mxu0 %v108
  %215 = vmatpush.msra.mxu0 %v107
  %216 = vmatpush.msra.mxu0 %v106
  %217 = vmatpush.msra.mxu0 %v105
  %218 = vmatpush.msra.mxu0 %v104
  %219 = vmatpush.msra.mxu0 %v103
  %220 = vmatpush.msra.mxu0 %v102
  %221 = vmatpush.msra.mxu0 %v101
  %222 = vmatpush.msra.mxu0 %v100
  %223 = vmatpush.msra.mxu0 %v99
  %224 = vmatpush.msra.mxu0 %v98
  %225 = vmatpush.msra.mxu0 %v97
  %226 = vmatmul.f32.gmra.mxu0 %v18
  %v227 = vpop.f32.mrf.mxu0
  %v228 = vadd.f32 %v163, %v227
  %229 = vmatmul.f32.gmra.mxu0 %v22
  %v230 = vpop.f32.mrf.mxu0
  %v231 = vadd.f32 %v166, %v230
  %232 = vmatmul.f32.gmra.mxu0 %v26
  %v233 = vpop.f32.mrf.mxu0
  %v234 = vadd.f32 %v169, %v233
  %235 = vmatmul.f32.gmra.mxu0 %v30
  %v236 = vpop.f32.mrf.mxu0
  %v237 = vadd.f32 %v172, %v236
  %238 = vmatmul.f32.gmra.mxu0 %v34
  %v239 = vpop.f32.mrf.mxu0
  %v240 = vadd.f32 %v175, %v239
  %241 = vmatmul.f32.gmra.mxu0 %v38
  %v242 = vpop.f32.mrf.mxu0
  %v243 = vadd.f32 %v178, %v242
  %244 = vmatmul.f32.gmra.mxu0 %v42
  %v245 = vpop.f32.mrf.mxu0
  %v246 = vadd.f32 %v181, %v245
  %247 = vmatmul.f32.gmra.mxu0 %v46
  %v248 = vpop.f32.mrf.mxu0
  %v249 = vadd.f32 %v184, %v248
  %250 = vmatmul.f32.gmra.mxu0 %v50
  %v251 = vpop.f32.mrf.mxu0
  %v252 = vadd.f32 %v187, %v251
  %253 = vmatmul.f32.gmra.mxu0 %v54
  %v254 = vpop.f32.mrf.mxu0
  %v255 = vadd.f32 %v190, %v254
  %256 = vmatmul.f32.gmra.mxu0 %v58
  %v257 = vpop.f32.mrf.mxu0
  %v258 = vadd.f32 %v193, %v257
  %259 = vmatmul.f32.gmra.mxu0 %v62
  %v260 = vpop.f32.mrf.mxu0
  %v261 = vadd.f32 %v196, %v260
  %262 = vmatmul.f32.gmra.mxu0 %v66
  %v263 = vpop.f32.mrf.mxu0
  %v264 = vadd.f32 %v199, %v263
  %265 = vmatmul.f32.gmra.mxu0 %v70
  %v266 = vpop.f32.mrf.mxu0
  %v267 = vadd.f32 %v202, %v266
  %268 = vmatmul.f32.gmra.mxu0 %v74
  %v269 = vpop.f32.mrf.mxu0
  %v270 = vadd.f32 %v205, %v269
  %271 = vmatmul.f32.gmra.mxu0 %v78
  %v272 = vpop.f32.mrf.mxu0
  %v273 = vadd.f32 %v208, %v272
  %274 = vdwg.mxu0
  %275 = vmatpush.msra.mxu0 %v128
  %276 = vmatpush.msra.mxu0 %v127
  %277 = vmatpush.msra.mxu0 %v126
  %278 = vmatpush.msra.mxu0 %v125
  %279 = vmatpush.msra.mxu0 %v124
  %280 = vmatpush.msra.mxu0 %v123
  %281 = vmatpush.msra.mxu0 %v122
  %282 = vmatpush.msra.mxu0 %v121
  %283 = vmatpush.msra.mxu0 %v120
  %284 = vmatpush.msra.mxu0 %v119
  %285 = vmatpush.msra.mxu0 %v118
  %286 = vmatpush.msra.mxu0 %v117
  %287 = vmatpush.msra.mxu0 %v116
  %288 = vmatpush.msra.mxu0 %v115
  %289 = vmatpush.msra.mxu0 %v114
  %290 = vmatpush.msra.mxu0 %v113
  %291 = vmatmul.f32.gmra.mxu0 %v19
  %v292 = vpop.f32.mrf.mxu0
  %v293 = vadd.f32 %v228, %v292
  %294 = vmatmul.f32.gmra.mxu0 %v23
  %v295 = vpop.f32.mrf.mxu0
  %v296 = vadd.f32 %v231, %v295
  %297 = vmatmul.f32.gmra.mxu0 %v27
  %v298 = vpop.f32.mrf.mxu0
  %v299 = vadd.f32 %v234, %v298
  %300 = vmatmul.f32.gmra.mxu0 %v31
  %v301 = vpop.f32.mrf.mxu0
  %v302 = vadd.f32 %v237, %v301
  %303 = vmatmul.f32.gmra.mxu0 %v35
  %v304 = vpop.f32.mrf.mxu0
  %v305 = vadd.f32 %v240, %v304
  %306 = vmatmul.f32.gmra.mxu0 %v39
  %v307 = vpop.f32.mrf.mxu0
  %v308 = vadd.f32 %v243, %v307
  %309 = vmatmul.f32.gmra.mxu0 %v43
  %v310 = vpop.f32.mrf.mxu0
  %v311 = vadd.f32 %v246, %v310
  %312 = vmatmul.f32.gmra.mxu0 %v47
  %v313 = vpop.f32.mrf.mxu0
  %v314 = vadd.f32 %v249, %v313
  %315 = vmatmul.f32.gmra.mxu0 %v51
  %v316 = vpop.f32.mrf.mxu0
  %v317 = vadd.f32 %v252, %v316
  %318 = vmatmul.f32.gmra.mxu0 %v55
  %v319 = vpop.f32.mrf.mxu0
  %v320 = vadd.f32 %v255, %v319
  %321 = vmatmul.f32.gmra.mxu0 %v59
  %v322 = vpop.f32.mrf.mxu0
  %v323 = vadd.f32 %v258, %v322
  %324 = vmatmul.f32.gmra.mxu0 %v63
  %v325 = vpop.f32.mrf.mxu0
  %v326 = vadd.f32 %v261, %v325
  %327 = vmatmul.f32.gmra.mxu0 %v67
  %v328 = vpop.f32.mrf.mxu0
  %v329 = vadd.f32 %v264, %v328
  %330 = vmatmul.f32.gmra.mxu0 %v71
  %v331 = vpop.f32.mrf.mxu0
  %v332 = vadd.f32 %v267, %v331
  %333 = vmatmul.f32.gmra.mxu0 %v75
  %v334 = vpop.f32.mrf.mxu0
  %v335 = vadd.f32 %v270, %v334
  %336 = vmatmul.f32.gmra.mxu0 %v79
  %v337 = vpop.f32.mrf.mxu0
  %v338 = vadd.f32 %v273, %v337
  %339 = vdwg.mxu0
  %340 = vmatpush.msra.mxu0 %v144
  %341 = vmatpush.msra.mxu0 %v143
  %342 = vmatpush.msra.mxu0 %v142
  %343 = vmatpush.msra.mxu0 %v141
  %344 = vmatpush.msra.mxu0 %v140
  %345 = vmatpush.msra.mxu0 %v139
  %346 = vmatpush.msra.mxu0 %v138
  %347 = vmatpush.msra.mxu0 %v137
  %348 = vmatpush.msra.mxu0 %v136
  %349 = vmatpush.msra.mxu0 %v135
  %350 = vmatpush.msra.mxu0 %v134
  %351 = vmatpush.msra.mxu0 %v133
  %352 = vmatpush.msra.mxu0 %v132
  %353 = vmatpush.msra.mxu0 %v131
  %354 = vmatpush.msra.mxu0 %v130
  %355 = vmatpush.msra.mxu0 %v129
  %356 = vmatmul.f32.gmra.mxu0 %v20
  %v357 = vpop.f32.mrf.mxu0
  %v358 = vadd.f32 %v293, %v357
  %359 = vmatmul.f32.gmra.mxu0 %v24
  %v360 = vpop.f32.mrf.mxu0
  %v361 = vadd.f32 %v296, %v360
  %362 = vmatmul.f32.gmra.mxu0 %v28
  %v363 = vpop.f32.mrf.mxu0
  %v364 = vadd.f32 %v299, %v363
  %365 = vmatmul.f32.gmra.mxu0 %v32
  %v366 = vpop.f32.mrf.mxu0
  %v367 = vadd.f32 %v302, %v366
  %368 = vmatmul.f32.gmra.mxu0 %v36
  %v369 = vpop.f32.mrf.mxu0
  %v370 = vadd.f32 %v305, %v369
  %371 = vmatmul.f32.gmra.mxu0 %v40
  %v372 = vpop.f32.mrf.mxu0
  %v373 = vadd.f32 %v308, %v372
  %374 = vmatmul.f32.gmra.mxu0 %v44
  %v375 = vpop.f32.mrf.mxu0
  %v376 = vadd.f32 %v311, %v375
  %377 = vmatmul.f32.gmra.mxu0 %v48
  %v378 = vpop.f32.mrf.mxu0
  %v379 = vadd.f32 %v314, %v378
  %380 = vmatmul.f32.gmra.mxu0 %v52
  %v381 = vpop.f32.mrf.mxu0
  %v382 = vadd.f32 %v317, %v381
  %383 = vmatmul.f32.gmra.mxu0 %v56
  %v384 = vpop.f32.mrf.mxu0
  %v385 = vadd.f32 %v320, %v384
  %386 = vmatmul.f32.gmra.mxu0 %v60
  %v387 = vpop.f32.mrf.mxu0
  %v388 = vadd.f32 %v323, %v387
  %389 = vmatmul.f32.gmra.mxu0 %v64
  %v390 = vpop.f32.mrf.mxu0
  %v391 = vadd.f32 %v326, %v390
  %392 = vmatmul.f32.gmra.mxu0 %v68
  %v393 = vpop.f32.mrf.mxu0
  %v394 = vadd.f32 %v329, %v393
  %395 = vmatmul.f32.gmra.mxu0 %v72
  %v396 = vpop.f32.mrf.mxu0
  %v397 = vadd.f32 %v332, %v396
  %398 = vmatmul.f32.gmra.mxu0 %v76
  %v399 = vpop.f32.mrf.mxu0
  %v400 = vadd.f32 %v335, %v399
  %401 = vmatmul.f32.gmra.mxu0 %v80
  %v402 = vpop.f32.mrf.mxu0
  %v403 = vadd.f32 %v338, %v402
  %404 = vdwg.mxu0
  %v405 = vld [vmem:[%s2] sm:$0x1]
  %v406 = vld [vmem:[%s3] sm:$0x1]
  %407 = vmatpush.msra.mxu0 %v403
  %408 = vmatpush.msra.mxu0 %v400
  %409 = vmatpush.msra.mxu0 %v397
  %410 = vmatpush.msra.mxu0 %v394
  %411 = vmatpush.msra.mxu0 %v391
  %412 = vmatpush.msra.mxu0 %v388
  %413 = vmatpush.msra.mxu0 %v385
  %414 = vmatpush.msra.mxu0 %v382
  %415 = vmatpush.msra.mxu0 %v379
  %416 = vmatpush.msra.mxu0 %v376
  %417 = vmatpush.msra.mxu0 %v373
  %418 = vmatpush.msra.mxu0 %v370
  %419 = vmatpush.msra.mxu0 %v367
  %420 = vmatpush.msra.mxu0 %v364
  %421 = vmatpush.msra.mxu0 %v361
  %422 = vmatpush.msra.mxu0 %v358
  %423 = vmatmul.f32.gmra.mxu0 1.0
  %v424 = vpop.f32.mrf.mxu0
  %v425 = vadd.f32 0.0, %v424
  %426 = vdwg.mxu0
  %v427 = vmul.f32 %v425, 0.0078125
  %v428 = vperm.slane %v427, 0
  %v429 = vsub.f32 %v358, %v428
  %v430 = vsub.f32 %v361, %v428
  %v431 = vsub.f32 %v364, %v428
  %v432 = vsub.f32 %v367, %v428
  %v433 = vsub.f32 %v370, %v428
  %v434 = vsub.f32 %v373, %v428
  %v435 = vsub.f32 %v376, %v428
  %v436 = vsub.f32 %v379, %v428
  %v437 = vsub.f32 %v382, %v428
  %v438 = vsub.f32 %v385, %v428
  %v439 = vsub.f32 %v388, %v428
  %v440 = vsub.f32 %v391, %v428
  %v441 = vsub.f32 %v394, %v428
  %v442 = vsub.f32 %v397, %v428
  %v443 = vsub.f32 %v400, %v428
  %v444 = vsub.f32 %v403, %v428
  %v445 = vmul.f32 %v429, %v429
  %v446 = vmul.f32 %v430, %v430
  %v447 = vmul.f32 %v431, %v431
  %v448 = vmul.f32 %v432, %v432
  %v449 = vmul.f32 %v433, %v433
  %v450 = vmul.f32 %v434, %v434
  %v451 = vmul.f32 %v435, %v435
  %v452 = vmul.f32 %v436, %v436
  %v453 = vmul.f32 %v437, %v437
  %v454 = vmul.f32 %v438, %v438
  %v455 = vmul.f32 %v439, %v439
  %v456 = vmul.f32 %v440, %v440
  %v457 = vmul.f32 %v441, %v441
  %v458 = vmul.f32 %v442, %v442
  %v459 = vmul.f32 %v443, %v443
  %v460 = vmul.f32 %v444, %v444
  %461 = vmatpush.msra.mxu0 %v460
  %462 = vmatpush.msra.mxu0 %v459
  %463 = vmatpush.msra.mxu0 %v458
  %464 = vmatpush.msra.mxu0 %v457
  %465 = vmatpush.msra.mxu0 %v456
  %466 = vmatpush.msra.mxu0 %v455
  %467 = vmatpush.msra.mxu0 %v454
  %468 = vmatpush.msra.mxu0 %v453
  %469 = vmatpush.msra.mxu0 %v452
  %470 = vmatpush.msra.mxu0 %v451
  %471 = vmatpush.msra.mxu0 %v450
  %472 = vmatpush.msra.mxu0 %v449
  %473 = vmatpush.msra.mxu0 %v448
  %474 = vmatpush.msra.mxu0 %v447
  %475 = vmatpush.msra.mxu0 %v446
  %476 = vmatpush.msra.mxu0 %v445
  %477 = vmatmul.f32.gmra.mxu0 1.0
  %v478 = vpop.f32.mrf.mxu0
  %v479 = vadd.f32 0.0, %v478
  %480 = vdwg.mxu0
  %v481 = vmul.f32 %v479, 0.0078125
  %v482 = vadd.f32 %v481, 1e-05
  %v483 = vrsqrt.pop %v482
  %v484 = vmul.f32 %v483, %v482
  %v485 = vmul.f32 %v484, %v483
  %v486 = vmul.f32 0.5, %v485
  %v487 = vsub.f32 1.5, %v486
  %v488 = vmul.f32 %v483, %v487
  %vm489 = vweird.f32 %v482
  %vm490 = vweird.f32 %v483
  %vm491 = vmor %vm489, %vm490
  %v492 = vsel %vm491, %v483, %v488
  %v493 = vmul.f32 %v405, %v492
  %v495 = vperm.slane %v493, 0
  %v497 = vmul.f32 %v429, %v495
  %v498 = vmul.f32 %v430, %v495
  %v499 = vmul.f32 %v431, %v495
  %v500 = vmul.f32 %v432, %v495
  %v501 = vmul.f32 %v433, %v495
  %v502 = vmul.f32 %v434, %v495
  %v503 = vmul.f32 %v435, %v495
  %v504 = vmul.f32 %v436, %v495
  %v505 = vmul.f32 %v437, %v495
  %v506 = vmul.f32 %v438, %v495
  %v507 = vmul.f32 %v439, %v495
  %v508 = vmul.f32 %v440, %v495
  %v509 = vmul.f32 %v441, %v495
  %v510 = vmul.f32 %v442, %v495
  %v511 = vmul.f32 %v443, %v495
  %v512 = vmul.f32 %v444, %v495
  %v514 = vperm.slane %v406, 0
  %v516 = vadd.f32 %v497, %v514
  %v517 = vadd.f32 %v498, %v514
  %v518 = vadd.f32 %v499, %v514
  %v519 = vadd.f32 %v500, %v514
  %v520 = vadd.f32 %v501, %v514
  %v521 = vadd.f32 %v502, %v514
  %v522 = vadd.f32 %v503, %v514
  %v523 = vadd.f32 %v504, %v514
  %v524 = vadd.f32 %v505, %v514
  %v525 = vadd.f32 %v506, %v514
  %v526 = vadd.f32 %v507, %v514
  %v527 = vadd.f32 %v508, %v514
  %v528 = vadd.f32 %v509, %v514
  %v529 = vadd.f32 %v510, %v514
  %v530 = vadd.f32 %v511, %v514
  %v531 = vadd.f32 %v512, %v514
  %vm532 = vcmp.ge.f32.partialorder %v516, 0.0
  %vm533 = vcmp.ge.f32.partialorder %v517, 0.0
  %vm534 = vcmp.ge.f32.partialorder %v518, 0.0
  %vm535 = vcmp.ge.f32.partialorder %v519, 0.0
  %vm536 = vcmp.ge.f32.partialorder %v520, 0.0
  %vm537 = vcmp.ge.f32.partialorder %v521, 0.0
  %vm538 = vcmp.ge.f32.partialorder %v522, 0.0
  %vm539 = vcmp.ge.f32.partialorder %v523, 0.0
  %vm540 = vcmp.ge.f32.partialorder %v524, 0.0
  %vm541 = vcmp.ge.f32.partialorder %v525, 0.0
  %vm542 = vcmp.ge.f32.partialorder %v526, 0.0
  %vm543 = vcmp.ge.f32.partialorder %v527, 0.0
  %vm544 = vcmp.ge.f32.partialorder %v528, 0.0
  %vm545 = vcmp.ge.f32.partialorder %v529, 0.0
  %vm546 = vcmp.ge.f32.partialorder %v530, 0.0
  %vm547 = vcmp.ge.f32.partialorder %v531, 0.0
  %v548 = vmul.f32 %v516, 0.2
  %v549 = vmul.f32 %v517, 0.2
  %v550 = vmul.f32 %v518, 0.2
  %v551 = vmul.f32 %v519, 0.2
  %v552 = vmul.f32 %v520, 0.2
  %v553 = vmul.f32 %v521, 0.2
  %v554 = vmul.f32 %v522, 0.2
  %v555 = vmul.f32 %v523, 0.2
  %v556 = vmul.f32 %v524, 0.2
  %v557 = vmul.f32 %v525, 0.2
  %v558 = vmul.f32 %v526, 0.2
  %v559 = vmul.f32 %v527, 0.2
  %v560 = vmul.f32 %v528, 0.2
  %v561 = vmul.f32 %v529, 0.2
  %v562 = vmul.f32 %v530, 0.2
  %v563 = vmul.f32 %v531, 0.2
  %v564 = vsel %vm532, %v516, %v548
  %v565 = vsel %vm533, %v517, %v549
  %v566 = vsel %vm534, %v518, %v550
  %v567 = vsel %vm535, %v519, %v551
  %v568 = vsel %vm536, %v520, %v552
  %v569 = vsel %vm537, %v521, %v553
  %v570 = vsel %vm538, %v522, %v554
  %v571 = vsel %vm539, %v523, %v555
  %v572 = vsel %vm540, %v524, %v556
  %v573 = vsel %vm541, %v525, %v557
  %v574 = vsel %vm542, %v526, %v558
  %v575 = vsel %vm543, %v527, %v559
  %v576 = vsel %vm544, %v528, %v560
  %v577 = vsel %vm545, %v529, %v561
  %v578 = vsel %vm546, %v530, %v562
  %v579 = vsel %vm547, %v531, %v563
  %vm580 = vcmask 523264
  %581 = vst.msk [vmem:[%s4] sm:$0xff] %vm580, %v564
  %582 = vst.msk [vmem:[%s4 + $0x8] sm:$0xff] %vm580, %v565
  %583 = vst.msk [vmem:[%s4 + $0x10] sm:$0xff] %vm580, %v566
  %584 = vst.msk [vmem:[%s4 + $0x18] sm:$0xff] %vm580, %v567
  %585 = vst.msk [vmem:[%s4 + $0x20] sm:$0xff] %vm580, %v568
  %586 = vst.msk [vmem:[%s4 + $0x28] sm:$0xff] %vm580, %v569
  %587 = vst.msk [vmem:[%s4 + $0x30] sm:$0xff] %vm580, %v570
  %588 = vst.msk [vmem:[%s4 + $0x38] sm:$0xff] %vm580, %v571
  %589 = vst.msk [vmem:[%s4 + $0x40] sm:$0xff] %vm580, %v572
  %590 = vst.msk [vmem:[%s4 + $0x48] sm:$0xff] %vm580, %v573
  %591 = vst.msk [vmem:[%s4 + $0x50] sm:$0xff] %vm580, %v574
  %592 = vst.msk [vmem:[%s4 + $0x58] sm:$0xff] %vm580, %v575
  %593 = vst.msk [vmem:[%s4 + $0x60] sm:$0xff] %vm580, %v576
  %594 = vst.msk [vmem:[%s4 + $0x68] sm:$0xff] %vm580, %v577
  %595 = vst.msk [vmem:[%s4 + $0x70] sm:$0xff] %vm580, %v578
  %596 = vst.msk [vmem:[%s4 + $0x78] sm:$0xff] %vm580, %v579
  // Predicated region
  $region18: #{vae_encoder_forward.5} parent=0 // pred_check
    _
  $region19: #{vae_encoder_forward.5} parent=0 // pred_check_branch
    %598 = sbr.rel (0) target = $region21
  $region20: #{vae_encoder_forward.5} parent=0 // pred_region
    _
  $region21: #{vae_encoder_forward.5} parent=0 // pred_fallthru
    _
  // Predicated region
  $region22: #{vae_encoder_forward.5} parent=0 // pred_check
    _
  $region23: #{vae_encoder_forward.5} parent=0 // pred_check_branch
    %600 = sbr.rel (0) target = $region25
  $region24: #{vae_encoder_forward.5} parent=0 // pred_region
    _
  $region25: #{vae_encoder_forward.5} parent=0 // pred_fallthru
    _

// kernel: vae_encoder_forward.6
$region0: #{vae_encoder_forward.6}
  #allocation0 [shape = 'u32[]', space=smem, size = 0x4, offset = 0x4, fixed_abs, tag = 'smem constant byte address 0x4 - core index']
  #allocation1 [shape = 'u32[72,128]{1,0:T(1,128)}', space=vmem, size = 0x9000, scoped, tag = 'internal scratch']
  %s0 = inlined_call_operand.vmem [shape: f32[32,1024], index: 0, kind: input, shape index: {}]
  %s1 = inlined_call_operand.vmem [shape: f32[1024,128], index: 1, kind: input, shape index: {}]
  %s2 = inlined_call_operand.vmem [shape: f32[1,128], index: 2, kind: input, shape index: {}]
  %s3 = inlined_call_operand.vmem [shape: f32[1,128], index: 3, kind: input, shape index: {}]
  %s4 = inlined_call_operand.vmem [shape: f32[32,128], index: 4, kind: output, shape index: {}]
  %s5 = sld [smem:[#allocation0]]
  $region26: #{vae_encoder_forward.6} parent=0
    _
  %s7 = ssub.s32 1, %s5
  %s8 = scalar_select 0, %s7, %s5
  // Predicated region
  $region2: #{vae_encoder_forward.6} parent=0 // pred_check
    _
  $region3: #{vae_encoder_forward.6} parent=0 // pred_check_branch
    %10 = sbr.rel (0) target = $region5
  $region4: #{vae_encoder_forward.6} parent=0 // pred_region
    _
  $region5: #{vae_encoder_forward.6} parent=0 // pred_fallthru
    _
  // Predicated region
  $region6: #{vae_encoder_forward.6} parent=0 // pred_check
    _
  $region7: #{vae_encoder_forward.6} parent=0 // pred_check_branch
    %12 = sbr.rel (0) target = $region9
  $region8: #{vae_encoder_forward.6} parent=0 // pred_region
    _
  $region9: #{vae_encoder_forward.6} parent=0 // pred_fallthru
    _
  // Predicated region
  $region10: #{vae_encoder_forward.6} parent=0 // pred_check
    _
  $region11: #{vae_encoder_forward.6} parent=0 // pred_check_branch
    %14 = sbr.rel (0) target = $region13
  $region12: #{vae_encoder_forward.6} parent=0 // pred_region
    _
  $region13: #{vae_encoder_forward.6} parent=0 // pred_fallthru
    _
  // Predicated region
  $region14: #{vae_encoder_forward.6} parent=0 // pred_check
    _
  $region15: #{vae_encoder_forward.6} parent=0 // pred_check_branch
    %16 = sbr.rel (0) target = $region17
  $region16: #{vae_encoder_forward.6} parent=0 // pred_region
    _
  $region17: #{vae_encoder_forward.6} parent=0 // pred_fallthru
    _
  %v17 = vld [vmem:[%s0] sm:$0xff]
  %v18 = vld [vmem:[%s0 + $0x8] sm:$0xff]
  %v19 = vld [vmem:[%s0 + $0x10] sm:$0xff]
  %v20 = vld [vmem:[%s0 + $0x18] sm:$0xff]
  %v21 = vld [vmem:[%s0 + $0x20] sm:$0xff]
  %v22 = vld [vmem:[%s0 + $0x28] sm:$0xff]
  %v23 = vld [vmem:[%s0 + $0x30] sm:$0xff]
  %v24 = vld [vmem:[%s0 + $0x38] sm:$0xff]
  %v25 = vld [vmem:[%s0 + $0x40] sm:$0xff]
  %v26 = vld [vmem:[%s0 + $0x48] sm:$0xff]
  %v27 = vld [vmem:[%s0 + $0x50] sm:$0xff]
  %v28 = vld [vmem:[%s0 + $0x58] sm:$0xff]
  %v29 = vld [vmem:[%s0 + $0x60] sm:$0xff]
  %v30 = vld [vmem:[%s0 + $0x68] sm:$0xff]
  %v31 = vld [vmem:[%s0 + $0x70] sm:$0xff]
  %v32 = vld [vmem:[%s0 + $0x78] sm:$0xff]
  %v33 = vld [vmem:[%s0 + $0x80] sm:$0xff]
  %v34 = vld [vmem:[%s0 + $0x88] sm:$0xff]
  %v35 = vld [vmem:[%s0 + $0x90] sm:$0xff]
  %v36 = vld [vmem:[%s0 + $0x98] sm:$0xff]
  %v37 = vld [vmem:[%s0 + $0xa0] sm:$0xff]
  %v38 = vld [vmem:[%s0 + $0xa8] sm:$0xff]
  %v39 = vld [vmem:[%s0 + $0xb0] sm:$0xff]
  %v40 = vld [vmem:[%s0 + $0xb8] sm:$0xff]
  %v41 = vld [vmem:[%s0 + $0xc0] sm:$0xff]
  %v42 = vld [vmem:[%s0 + $0xc8] sm:$0xff]
  %v43 = vld [vmem:[%s0 + $0xd0] sm:$0xff]
  %v44 = vld [vmem:[%s0 + $0xd8] sm:$0xff]
  %v45 = vld [vmem:[%s0 + $0xe0] sm:$0xff]
  %v46 = vld [vmem:[%s0 + $0xe8] sm:$0xff]
  %v47 = vld [vmem:[%s0 + $0xf0] sm:$0xff]
  %v48 = vld [vmem:[%s0 + $0xf8] sm:$0xff]
  %v49 = vld [vmem:[%s1] sm:$0xff]
  %v50 = vld [vmem:[%s1 + $0x8] sm:$0xff]
  %v51 = vld [vmem:[%s1 + $0x10] sm:$0xff]
  %v52 = vld [vmem:[%s1 + $0x18] sm:$0xff]
  %v53 = vld [vmem:[%s1 + $0x20] sm:$0xff]
  %v54 = vld [vmem:[%s1 + $0x28] sm:$0xff]
  %v55 = vld [vmem:[%s1 + $0x30] sm:$0xff]
  %v56 = vld [vmem:[%s1 + $0x38] sm:$0xff]
  %v57 = vld [vmem:[%s1 + $0x40] sm:$0xff]
  %v58 = vld [vmem:[%s1 + $0x48] sm:$0xff]
  %v59 = vld [vmem:[%s1 + $0x50] sm:$0xff]
  %v60 = vld [vmem:[%s1 + $0x58] sm:$0xff]
  %v61 = vld [vmem:[%s1 + $0x60] sm:$0xff]
  %v62 = vld [vmem:[%s1 + $0x68] sm:$0xff]
  %v63 = vld [vmem:[%s1 + $0x70] sm:$0xff]
  %v64 = vld [vmem:[%s1 + $0x78] sm:$0xff]
  %v65 = vld [vmem:[%s1 + $0x80] sm:$0xff]
  %v66 = vld [vmem:[%s1 + $0x88] sm:$0xff]
  %v67 = vld [vmem:[%s1 + $0x90] sm:$0xff]
  %v68 = vld [vmem:[%s1 + $0x98] sm:$0xff]
  %v69 = vld [vmem:[%s1 + $0xa0] sm:$0xff]
  %v70 = vld [vmem:[%s1 + $0xa8] sm:$0xff]
  %v71 = vld [vmem:[%s1 + $0xb0] sm:$0xff]
  %v72 = vld [vmem:[%s1 + $0xb8] sm:$0xff]
  %v73 = vld [vmem:[%s1 + $0xc0] sm:$0xff]
  %v74 = vld [vmem:[%s1 + $0xc8] sm:$0xff]
  %v75 = vld [vmem:[%s1 + $0xd0] sm:$0xff]
  %v76 = vld [vmem:[%s1 + $0xd8] sm:$0xff]
  %v77 = vld [vmem:[%s1 + $0xe0] sm:$0xff]
  %v78 = vld [vmem:[%s1 + $0xe8] sm:$0xff]
  %v79 = vld [vmem:[%s1 + $0xf0] sm:$0xff]
  %v80 = vld [vmem:[%s1 + $0xf8] sm:$0xff]
  %v81 = vld [vmem:[%s1 + $0x100] sm:$0xff]
  %v82 = vld [vmem:[%s1 + $0x108] sm:$0xff]
  %v83 = vld [vmem:[%s1 + $0x110] sm:$0xff]
  %v84 = vld [vmem:[%s1 + $0x118] sm:$0xff]
  %v85 = vld [vmem:[%s1 + $0x120] sm:$0xff]
  %v86 = vld [vmem:[%s1 + $0x128] sm:$0xff]
  %v87 = vld [vmem:[%s1 + $0x130] sm:$0xff]
  %v88 = vld [vmem:[%s1 + $0x138] sm:$0xff]
  %v89 = vld [vmem:[%s1 + $0x140] sm:$0xff]
  %v90 = vld [vmem:[%s1 + $0x148] sm:$0xff]
  %v91 = vld [vmem:[%s1 + $0x150] sm:$0xff]
  %v92 = vld [vmem:[%s1 + $0x158] sm:$0xff]
  %v93 = vld [vmem:[%s1 + $0x160] sm:$0xff]
  %v94 = vld [vmem:[%s1 + $0x168] sm:$0xff]
  %v95 = vld [vmem:[%s1 + $0x170] sm:$0xff]
  %v96 = vld [vmem:[%s1 + $0x178] sm:$0xff]
  %v97 = vld [vmem:[%s1 + $0x180] sm:$0xff]
  %v98 = vld [vmem:[%s1 + $0x188] sm:$0xff]
  %v99 = vld [vmem:[%s1 + $0x190] sm:$0xff]
  %v100 = vld [vmem:[%s1 + $0x198] sm:$0xff]
  %v101 = vld [vmem:[%s1 + $0x1a0] sm:$0xff]
  %v102 = vld [vmem:[%s1 + $0x1a8] sm:$0xff]
  %v103 = vld [vmem:[%s1 + $0x1b0] sm:$0xff]
  %v104 = vld [vmem:[%s1 + $0x1b8] sm:$0xff]
  %v105 = vld [vmem:[%s1 + $0x1c0] sm:$0xff]
  %v106 = vld [vmem:[%s1 + $0x1c8] sm:$0xff]
  %v107 = vld [vmem:[%s1 + $0x1d0] sm:$0xff]
  %v108 = vld [vmem:[%s1 + $0x1d8] sm:$0xff]
  %v109 = vld [vmem:[%s1 + $0x1e0] sm:$0xff]
  %v110 = vld [vmem:[%s1 + $0x1e8] sm:$0xff]
  %v111 = vld [vmem:[%s1 + $0x1f0] sm:$0xff]
  %v112 = vld [vmem:[%s1 + $0x1f8] sm:$0xff]
  %v113 = vld [vmem:[%s1 + $0x200] sm:$0xff]
  %v114 = vld [vmem:[%s1 + $0x208] sm:$0xff]
  %v115 = vld [vmem:[%s1 + $0x210] sm:$0xff]
  %v116 = vld [vmem:[%s1 + $0x218] sm:$0xff]
  %v117 = vld [vmem:[%s1 + $0x220] sm:$0xff]
  %v118 = vld [vmem:[%s1 + $0x228] sm:$0xff]
  %v119 = vld [vmem:[%s1 + $0x230] sm:$0xff]
  %v120 = vld [vmem:[%s1 + $0x238] sm:$0xff]
  %v121 = vld [vmem:[%s1 + $0x240] sm:$0xff]
  %v122 = vld [vmem:[%s1 + $0x248] sm:$0xff]
  %v123 = vld [vmem:[%s1 + $0x250] sm:$0xff]
  %v124 = vld [vmem:[%s1 + $0x258] sm:$0xff]
  %v125 = vld [vmem:[%s1 + $0x260] sm:$0xff]
  %v126 = vld [vmem:[%s1 + $0x268] sm:$0xff]
  %v127 = vld [vmem:[%s1 + $0x270] sm:$0xff]
  %v128 = vld [vmem:[%s1 + $0x278] sm:$0xff]
  %v129 = vld [vmem:[%s1 + $0x280] sm:$0xff]
  %v130 = vld [vmem:[%s1 + $0x288] sm:$0xff]
  %v131 = vld [vmem:[%s1 + $0x290] sm:$0xff]
  %v132 = vld [vmem:[%s1 + $0x298] sm:$0xff]
  %v133 = vld [vmem:[%s1 + $0x2a0] sm:$0xff]
  %v134 = vld [vmem:[%s1 + $0x2a8] sm:$0xff]
  %v135 = vld [vmem:[%s1 + $0x2b0] sm:$0xff]
  %v136 = vld [vmem:[%s1 + $0x2b8] sm:$0xff]
  %v137 = vld [vmem:[%s1 + $0x2c0] sm:$0xff]
  %v138 = vld [vmem:[%s1 + $0x2c8] sm:$0xff]
  %v139 = vld [vmem:[%s1 + $0x2d0] sm:$0xff]
  %v140 = vld [vmem:[%s1 + $0x2d8] sm:$0xff]
  %v141 = vld [vmem:[%s1 + $0x2e0] sm:$0xff]
  %v142 = vld [vmem:[%s1 + $0x2e8] sm:$0xff]
  %v143 = vld [vmem:[%s1 + $0x2f0] sm:$0xff]
  %v144 = vld [vmem:[%s1 + $0x2f8] sm:$0xff]
  %v145 = vld [vmem:[%s1 + $0x300] sm:$0xff]
  %v146 = vld [vmem:[%s1 + $0x308] sm:$0xff]
  %v147 = vld [vmem:[%s1 + $0x310] sm:$0xff]
  %v148 = vld [vmem:[%s1 + $0x318] sm:$0xff]
  %v149 = vld [vmem:[%s1 + $0x320] sm:$0xff]
  %v150 = vld [vmem:[%s1 + $0x328] sm:$0xff]
  %v151 = vld [vmem:[%s1 + $0x330] sm:$0xff]
  %v152 = vld [vmem:[%s1 + $0x338] sm:$0xff]
  %v153 = vld [vmem:[%s1 + $0x340] sm:$0xff]
  %v154 = vld [vmem:[%s1 + $0x348] sm:$0xff]
  %v155 = vld [vmem:[%s1 + $0x350] sm:$0xff]
  %v156 = vld [vmem:[%s1 + $0x358] sm:$0xff]
  %v157 = vld [vmem:[%s1 + $0x360] sm:$0xff]
  %v158 = vld [vmem:[%s1 + $0x368] sm:$0xff]
  %v159 = vld [vmem:[%s1 + $0x370] sm:$0xff]
  %v160 = vld [vmem:[%s1 + $0x378] sm:$0xff]
  %v161 = vld [vmem:[%s1 + $0x380] sm:$0xff]
  %v162 = vld [vmem:[%s1 + $0x388] sm:$0xff]
  %v163 = vld [vmem:[%s1 + $0x390] sm:$0xff]
  %v164 = vld [vmem:[%s1 + $0x398] sm:$0xff]
  %v165 = vld [vmem:[%s1 + $0x3a0] sm:$0xff]
  %v166 = vld [vmem:[%s1 + $0x3a8] sm:$0xff]
  %v167 = vld [vmem:[%s1 + $0x3b0] sm:$0xff]
  %v168 = vld [vmem:[%s1 + $0x3b8] sm:$0xff]
  %v169 = vld [vmem:[%s1 + $0x3c0] sm:$0xff]
  %v170 = vld [vmem:[%s1 + $0x3c8] sm:$0xff]
  %v171 = vld [vmem:[%s1 + $0x3d0] sm:$0xff]
  %v172 = vld [vmem:[%s1 + $0x3d8] sm:$0xff]
  %v173 = vld [vmem:[%s1 + $0x3e0] sm:$0xff]
  %v174 = vld [vmem:[%s1 + $0x3e8] sm:$0xff]
  %v175 = vld [vmem:[%s1 + $0x3f0] sm:$0xff]
  %v176 = vld [vmem:[%s1 + $0x3f8] sm:$0xff]
  %177 = vmatpush.msra.mxu0 %v64
  %178 = vmatpush.msra.mxu0 %v63
  %179 = vmatpush.msra.mxu0 %v62
  %180 = vmatpush.msra.mxu0 %v61
  %181 = vmatpush.msra.mxu0 %v60
  %182 = vmatpush.msra.mxu0 %v59
  %183 = vmatpush.msra.mxu0 %v58
  %184 = vmatpush.msra.mxu0 %v57
  %185 = vmatpush.msra.mxu0 %v56
  %186 = vmatpush.msra.mxu0 %v55
  %187 = vmatpush.msra.mxu0 %v54
  %188 = vmatpush.msra.mxu0 %v53
  %189 = vmatpush.msra.mxu0 %v52
  %190 = vmatpush.msra.mxu0 %v51
  %191 = vmatpush.msra.mxu0 %v50
  %192 = vmatpush.msra.mxu0 %v49
  %193 = vmatmul.f32.gmra.mxu0 %v17
  %v194 = vpop.f32.mrf.mxu0
  %v195 = vadd.f32 0.0, %v194
  %196 = vmatmul.f32.gmra.mxu0 %v25
  %v197 = vpop.f32.mrf.mxu0
  %v198 = vadd.f32 0.0, %v197
  %199 = vmatmul.f32.gmra.mxu0 %v33
  %v200 = vpop.f32.mrf.mxu0
  %v201 = vadd.f32 0.0, %v200
  %202 = vmatmul.f32.gmra.mxu0 %v41
  %v203 = vpop.f32.mrf.mxu0
  %v204 = vadd.f32 0.0, %v203
  %205 = vdwg.mxu0
  %206 = vmatpush.msra.mxu0 %v80
  %207 = vmatpush.msra.mxu0 %v79
  %208 = vmatpush.msra.mxu0 %v78
  %209 = vmatpush.msra.mxu0 %v77
  %210 = vmatpush.msra.mxu0 %v76
  %211 = vmatpush.msra.mxu0 %v75
  %212 = vmatpush.msra.mxu0 %v74
  %213 = vmatpush.msra.mxu0 %v73
  %214 = vmatpush.msra.mxu0 %v72
  %215 = vmatpush.msra.mxu0 %v71
  %216 = vmatpush.msra.mxu0 %v70
  %217 = vmatpush.msra.mxu0 %v69
  %218 = vmatpush.msra.mxu0 %v68
  %219 = vmatpush.msra.mxu0 %v67
  %220 = vmatpush.msra.mxu0 %v66
  %221 = vmatpush.msra.mxu0 %v65
  %222 = vmatmul.f32.gmra.mxu0 %v18
  %v223 = vpop.f32.mrf.mxu0
  %v224 = vadd.f32 %v195, %v223
  %225 = vmatmul.f32.gmra.mxu0 %v26
  %v226 = vpop.f32.mrf.mxu0
  %v227 = vadd.f32 %v198, %v226
  %228 = vmatmul.f32.gmra.mxu0 %v34
  %v229 = vpop.f32.mrf.mxu0
  %v230 = vadd.f32 %v201, %v229
  %231 = vmatmul.f32.gmra.mxu0 %v42
  %v232 = vpop.f32.mrf.mxu0
  %v233 = vadd.f32 %v204, %v232
  %234 = vdwg.mxu0
  %235 = vmatpush.msra.mxu0 %v96
  %236 = vmatpush.msra.mxu0 %v95
  %237 = vmatpush.msra.mxu0 %v94
  %238 = vmatpush.msra.mxu0 %v93
  %239 = vmatpush.msra.mxu0 %v92
  %240 = vmatpush.msra.mxu0 %v91
  %241 = vmatpush.msra.mxu0 %v90
  %242 = vmatpush.msra.mxu0 %v89
  %243 = vmatpush.msra.mxu0 %v88
  %244 = vmatpush.msra.mxu0 %v87
  %245 = vmatpush.msra.mxu0 %v86
  %246 = vmatpush.msra.mxu0 %v85
  %247 = vmatpush.msra.mxu0 %v84
  %248 = vmatpush.msra.mxu0 %v83
  %249 = vmatpush.msra.mxu0 %v82
  %250 = vmatpush.msra.mxu0 %v81
  %251 = vmatmul.f32.gmra.mxu0 %v19
  %v252 = vpop.f32.mrf.mxu0
  %v253 = vadd.f32 %v224, %v252
  %254 = vmatmul.f32.gmra.mxu0 %v27
  %v255 = vpop.f32.mrf.mxu0
  %v256 = vadd.f32 %v227, %v255
  %257 = vmatmul.f32.gmra.mxu0 %v35
  %v258 = vpop.f32.mrf.mxu0
  %v259 = vadd.f32 %v230, %v258
  %260 = vmatmul.f32.gmra.mxu0 %v43
  %v261 = vpop.f32.mrf.mxu0
  %v262 = vadd.f32 %v233, %v261
  %263 = vdwg.mxu0
  %264 = vmatpush.msra.mxu0 %v112
  %265 = vmatpush.msra.mxu0 %v111
  %266 = vmatpush.msra.mxu0 %v110
  %267 = vmatpush.msra.mxu0 %v109
  %268 = vmatpush.msra.mxu0 %v108
  %269 = vmatpush.msra.mxu0 %v107
  %270 = vmatpush.msra.mxu0 %v106
  %271 = vmatpush.msra.mxu0 %v105
  %272 = vmatpush.msra.mxu0 %v104
  %273 = vmatpush.msra.mxu0 %v103
  %274 = vmatpush.msra.mxu0 %v102
  %275 = vmatpush.msra.mxu0 %v101
  %276 = vmatpush.msra.mxu0 %v100
  %277 = vmatpush.msra.mxu0 %v99
  %278 = vmatpush.msra.mxu0 %v98
  %279 = vmatpush.msra.mxu0 %v97
  %280 = vmatmul.f32.gmra.mxu0 %v20
  %v281 = vpop.f32.mrf.mxu0
  %v282 = vadd.f32 %v253, %v281
  %283 = vmatmul.f32.gmra.mxu0 %v28
  %v284 = vpop.f32.mrf.mxu0
  %v285 = vadd.f32 %v256, %v284
  %286 = vmatmul.f32.gmra.mxu0 %v36
  %v287 = vpop.f32.mrf.mxu0
  %v288 = vadd.f32 %v259, %v287
  %289 = vmatmul.f32.gmra.mxu0 %v44
  %v290 = vpop.f32.mrf.mxu0
  %v291 = vadd.f32 %v262, %v290
  %292 = vdwg.mxu0
  %293 = vmatpush.msra.mxu0 %v128
  %294 = vmatpush.msra.mxu0 %v127
  %295 = vmatpush.msra.mxu0 %v126
  %296 = vmatpush.msra.mxu0 %v125
  %297 = vmatpush.msra.mxu0 %v124
  %298 = vmatpush.msra.mxu0 %v123
  %299 = vmatpush.msra.mxu0 %v122
  %300 = vmatpush.msra.mxu0 %v121
  %301 = vmatpush.msra.mxu0 %v120
  %302 = vmatpush.msra.mxu0 %v119
  %303 = vmatpush.msra.mxu0 %v118
  %304 = vmatpush.msra.mxu0 %v117
  %305 = vmatpush.msra.mxu0 %v116
  %306 = vmatpush.msra.mxu0 %v115
  %307 = vmatpush.msra.mxu0 %v114
  %308 = vmatpush.msra.mxu0 %v113
  %309 = vmatmul.f32.gmra.mxu0 %v21
  %v310 = vpop.f32.mrf.mxu0
  %v311 = vadd.f32 %v282, %v310
  %312 = vmatmul.f32.gmra.mxu0 %v29
  %v313 = vpop.f32.mrf.mxu0
  %v314 = vadd.f32 %v285, %v313
  %315 = vmatmul.f32.gmra.mxu0 %v37
  %v316 = vpop.f32.mrf.mxu0
  %v317 = vadd.f32 %v288, %v316
  %318 = vmatmul.f32.gmra.mxu0 %v45
  %v319 = vpop.f32.mrf.mxu0
  %v320 = vadd.f32 %v291, %v319
  %321 = vdwg.mxu0
  %322 = vmatpush.msra.mxu0 %v144
  %323 = vmatpush.msra.mxu0 %v143
  %324 = vmatpush.msra.mxu0 %v142
  %325 = vmatpush.msra.mxu0 %v141
  %326 = vmatpush.msra.mxu0 %v140
  %327 = vmatpush.msra.mxu0 %v139
  %328 = vmatpush.msra.mxu0 %v138
  %329 = vmatpush.msra.mxu0 %v137
  %330 = vmatpush.msra.mxu0 %v136
  %331 = vmatpush.msra.mxu0 %v135
  %332 = vmatpush.msra.mxu0 %v134
  %333 = vmatpush.msra.mxu0 %v133
  %334 = vmatpush.msra.mxu0 %v132
  %335 = vmatpush.msra.mxu0 %v131
  %336 = vmatpush.msra.mxu0 %v130
  %337 = vmatpush.msra.mxu0 %v129
  %338 = vmatmul.f32.gmra.mxu0 %v22
  %v339 = vpop.f32.mrf.mxu0
  %v340 = vadd.f32 %v311, %v339
  %341 = vmatmul.f32.gmra.mxu0 %v30
  %v342 = vpop.f32.mrf.mxu0
  %v343 = vadd.f32 %v314, %v342
  %344 = vmatmul.f32.gmra.mxu0 %v38
  %v345 = vpop.f32.mrf.mxu0
  %v346 = vadd.f32 %v317, %v345
  %347 = vmatmul.f32.gmra.mxu0 %v46
  %v348 = vpop.f32.mrf.mxu0
  %v349 = vadd.f32 %v320, %v348
  %350 = vdwg.mxu0
  %351 = vmatpush.msra.mxu0 %v160
  %352 = vmatpush.msra.mxu0 %v159
  %353 = vmatpush.msra.mxu0 %v158
  %354 = vmatpush.msra.mxu0 %v157
  %355 = vmatpush.msra.mxu0 %v156
  %356 = vmatpush.msra.mxu0 %v155
  %357 = vmatpush.msra.mxu0 %v154
  %358 = vmatpush.msra.mxu0 %v153
  %359 = vmatpush.msra.mxu0 %v152
  %360 = vmatpush.msra.mxu0 %v151
  %361 = vmatpush.msra.mxu0 %v150
  %362 = vmatpush.msra.mxu0 %v149
  %363 = vmatpush.msra.mxu0 %v148
  %364 = vmatpush.msra.mxu0 %v147
  %365 = vmatpush.msra.mxu0 %v146
  %366 = vmatpush.msra.mxu0 %v145
  %367 = vmatmul.f32.gmra.mxu0 %v23
  %v368 = vpop.f32.mrf.mxu0
  %v369 = vadd.f32 %v340, %v368
  %370 = vmatmul.f32.gmra.mxu0 %v31
  %v371 = vpop.f32.mrf.mxu0
  %v372 = vadd.f32 %v343, %v371
  %373 = vmatmul.f32.gmra.mxu0 %v39
  %v374 = vpop.f32.mrf.mxu0
  %v375 = vadd.f32 %v346, %v374
  %376 = vmatmul.f32.gmra.mxu0 %v47
  %v377 = vpop.f32.mrf.mxu0
  %v378 = vadd.f32 %v349, %v377
  %379 = vdwg.mxu0
  %380 = vmatpush.msra.mxu0 %v176
  %381 = vmatpush.msra.mxu0 %v175
  %382 = vmatpush.msra.mxu0 %v174
  %383 = vmatpush.msra.mxu0 %v173
  %384 = vmatpush.msra.mxu0 %v172
  %385 = vmatpush.msra.mxu0 %v171
  %386 = vmatpush.msra.mxu0 %v170
  %387 = vmatpush.msra.mxu0 %v169
  %388 = vmatpush.msra.mxu0 %v168
  %389 = vmatpush.msra.mxu0 %v167
  %390 = vmatpush.msra.mxu0 %v166
  %391 = vmatpush.msra.mxu0 %v165
  %392 = vmatpush.msra.mxu0 %v164
  %393 = vmatpush.msra.mxu0 %v163
  %394 = vmatpush.msra.mxu0 %v162
  %395 = vmatpush.msra.mxu0 %v161
  %396 = vmatmul.f32.gmra.mxu0 %v24
  %v397 = vpop.f32.mrf.mxu0
  %v398 = vadd.f32 %v369, %v397
  %399 = vmatmul.f32.gmra.mxu0 %v32
  %v400 = vpop.f32.mrf.mxu0
  %v401 = vadd.f32 %v372, %v400
  %402 = vmatmul.f32.gmra.mxu0 %v40
  %v403 = vpop.f32.mrf.mxu0
  %v404 = vadd.f32 %v375, %v403
  %405 = vmatmul.f32.gmra.mxu0 %v48
  %v406 = vpop.f32.mrf.mxu0
  %v407 = vadd.f32 %v378, %v406
  %408 = vdwg.mxu0
  %v409 = vld [vmem:[%s2] sm:$0x1]
  %v410 = vld [vmem:[%s3] sm:$0x1]
  %vm411 = vcmask 261120
  %v413 = vsel %vm411, 1.0, 0
  %415 = vmatpush.msra.mxu0 0.0
  %416 = vmatpush.msra.mxu0 0.0
  %417 = vmatpush.msra.mxu0 0.0
  %418 = vmatpush.msra.mxu0 0.0
  %419 = vmatpush.msra.mxu0 0.0
  %420 = vmatpush.msra.mxu0 0.0
  %421 = vmatpush.msra.mxu0 0.0
  %422 = vmatpush.msra.mxu0 0.0
  %423 = vmatpush.msra.mxu0 0.0
  %424 = vmatpush.msra.mxu0 0.0
  %425 = vmatpush.msra.mxu0 0.0
  %426 = vmatpush.msra.mxu0 0.0
  %427 = vmatpush.msra.mxu0 %v407
  %428 = vmatpush.msra.mxu0 %v404
  %429 = vmatpush.msra.mxu0 %v401
  %430 = vmatpush.msra.mxu0 %v398
  %431 = vmatmul.f32.gmra.mxu0 %v413
  %v432 = vpop.f32.mrf.mxu0
  %v433 = vadd.f32 0.0, %v432
  %434 = vdwg.mxu0
  %v435 = vmul.f32 %v433, 0.03125
  %v436 = vperm.slane %v435, 0
  %v437 = vsub.f32 %v398, %v436
  %v438 = vsub.f32 %v401, %v436
  %v439 = vsub.f32 %v404, %v436
  %v440 = vsub.f32 %v407, %v436
  %v441 = vmul.f32 %v437, %v437
  %v442 = vmul.f32 %v438, %v438
  %v443 = vmul.f32 %v439, %v439
  %v444 = vmul.f32 %v440, %v440
  %445 = vmatpush.msra.mxu0 0.0
  %446 = vmatpush.msra.mxu0 0.0
  %447 = vmatpush.msra.mxu0 0.0
  %448 = vmatpush.msra.mxu0 0.0
  %449 = vmatpush.msra.mxu0 0.0
  %450 = vmatpush.msra.mxu0 0.0
  %451 = vmatpush.msra.mxu0 0.0
  %452 = vmatpush.msra.mxu0 0.0
  %453 = vmatpush.msra.mxu0 0.0
  %454 = vmatpush.msra.mxu0 0.0
  %455 = vmatpush.msra.mxu0 0.0
  %456 = vmatpush.msra.mxu0 0.0
  %457 = vmatpush.msra.mxu0 %v444
  %458 = vmatpush.msra.mxu0 %v443
  %459 = vmatpush.msra.mxu0 %v442
  %460 = vmatpush.msra.mxu0 %v441
  %461 = vmatmul.f32.gmra.mxu0 %v413
  %v462 = vpop.f32.mrf.mxu0
  %v463 = vadd.f32 0.0, %v462
  %464 = vdwg.mxu0
  %v465 = vmul.f32 %v463, 0.03125
  %v466 = vadd.f32 %v465, 1e-05
  %v467 = vrsqrt.pop %v466
  %v468 = vmul.f32 %v467, %v466
  %v469 = vmul.f32 %v468, %v467
  %v470 = vmul.f32 0.5, %v469
  %v471 = vsub.f32 1.5, %v470
  %v472 = vmul.f32 %v467, %v471
  %vm473 = vweird.f32 %v466
  %vm474 = vweird.f32 %v467
  %vm475 = vmor %vm473, %vm474
  %v476 = vsel %vm475, %v467, %v472
  %v477 = vmul.f32 %v409, %v476
  %v479 = vperm.slane %v477, 0
  %v481 = vmul.f32 %v437, %v479
  %v482 = vmul.f32 %v438, %v479
  %v483 = vmul.f32 %v439, %v479
  %v484 = vmul.f32 %v440, %v479
  %v486 = vperm.slane %v410, 0
  %v488 = vadd.f32 %v481, %v486
  %v489 = vadd.f32 %v482, %v486
  %v490 = vadd.f32 %v483, %v486
  %v491 = vadd.f32 %v484, %v486
  %vm492 = vcmp.ge.f32.partialorder %v488, 0.0
  %vm493 = vcmp.ge.f32.partialorder %v489, 0.0
  %vm494 = vcmp.ge.f32.partialorder %v490, 0.0
  %vm495 = vcmp.ge.f32.partialorder %v491, 0.0
  %v496 = vmul.f32 %v488, 0.2
  %v497 = vmul.f32 %v489, 0.2
  %v498 = vmul.f32 %v490, 0.2
  %v499 = vmul.f32 %v491, 0.2
  %v500 = vsel %vm492, %v488, %v496
  %v501 = vsel %vm493, %v489, %v497
  %v502 = vsel %vm494, %v490, %v498
  %v503 = vsel %vm495, %v491, %v499
  %504 = vst [vmem:[%s4] sm:$0xff] %v500
  %505 = vst [vmem:[%s4 + $0x8] sm:$0xff] %v501
  %506 = vst [vmem:[%s4 + $0x10] sm:$0xff] %v502
  %507 = vst [vmem:[%s4 + $0x18] sm:$0xff] %v503
  // Predicated region
  $region18: #{vae_encoder_forward.6} parent=0 // pred_check
    _
  $region19: #{vae_encoder_forward.6} parent=0 // pred_check_branch
    %509 = sbr.rel (0) target = $region21
  $region20: #{vae_encoder_forward.6} parent=0 // pred_region
    _
  $region21: #{vae_encoder_forward.6} parent=0 // pred_fallthru
    _
  // Predicated region
  $region22: #{vae_encoder_forward.6} parent=0 // pred_check
    _
  $region23: #{vae_encoder_forward.6} parent=0 // pred_check_branch
    %511 = sbr.rel (0) target = $region25
  $region24: #{vae_encoder_forward.6} parent=0 // pred_region
    _
  $region25: #{vae_encoder_forward.6} parent=0 // pred_fallthru
    _

// kernel: vae_encoder_forward.7
$region0: #{vae_encoder_forward.7}
  #allocation0 [shape = 'u32[]', space=smem, size = 0x4, offset = 0x4, fixed_abs, tag = 'smem constant byte address 0x4 - core index']
  #allocation1 [shape = 'u32[72,128]{1,0:T(1,128)}', space=vmem, size = 0x9000, scoped, tag = 'internal scratch']
  %s0 = inlined_call_operand.vmem [shape: f32[8,2048], index: 0, kind: input, shape index: {}]
  %s1 = inlined_call_operand.vmem [shape: f32[2048,256], index: 1, kind: input, shape index: {}]
  %s2 = inlined_call_operand.vmem [shape: f32[1,256], index: 2, kind: input, shape index: {}]
  %s3 = inlined_call_operand.vmem [shape: f32[1,256], index: 3, kind: input, shape index: {}]
  %s4 = inlined_call_operand.vmem [shape: f32[1024,64], index: 4, kind: input, shape index: {}]
  %s5 = inlined_call_operand.vmem [shape: f32[1,64], index: 5, kind: input, shape index: {}]
  %s6 = inlined_call_operand.hbm [shape: f32[2,64], index: 6, kind: output, shape index: {}]
  %s7 = sld [smem:[#allocation0]]
  $region34: #{vae_encoder_forward.7} parent=0
    _
  %s9 = ssub.s32 1, %s7
  %s10 = scalar_select 0, %s9, %s7
  $region1: #{vae_encoder_forward.7} parent=0
    #allocation2 [shape = 'u8[1024]{0}', space=vmem, size = 0x400, scoped, tag = 'output window, operand 0, single buffered']
    #allocation3 [shape = 's32[1]{0}', space=sflag, size = 0x4, scoped, tag = 'scoped memory for vae_encoder_forward.7']
    %11 = vsyncpa [#allocation3], 0
    // Predicated region
    $region2: #{vae_encoder_forward.7} parent=1 // pred_check
      _
    $region3: #{vae_encoder_forward.7} parent=1 // pred_check_branch
      %13 = sbr.rel (0) target = $region5
    $region4: #{vae_encoder_forward.7} parent=1 // pred_region
      _
    $region5: #{vae_encoder_forward.7} parent=1 // pred_fallthru
      _
    // Predicated region
    $region6: #{vae_encoder_forward.7} parent=1 // pred_check
      _
    $region7: #{vae_encoder_forward.7} parent=1 // pred_check_branch
      %15 = sbr.rel (0) target = $region9
    $region8: #{vae_encoder_forward.7} parent=1 // pred_region
      _
    $region9: #{vae_encoder_forward.7} parent=1 // pred_fallthru
      _
    // Predicated region
    $region10: #{vae_encoder_forward.7} parent=1 // pred_check
      _
    $region11: #{vae_encoder_forward.7} parent=1 // pred_check_branch
      %17 = sbr.rel (0) target = $region13
    $region12: #{vae_encoder_forward.7} parent=1 // pred_region
      _
    $region13: #{vae_encoder_forward.7} parent=1 // pred_fallthru
      _
    // Predicated region
    $region14: #{vae_encoder_forward.7} parent=1 // pred_check
      _
    $region15: #{vae_encoder_forward.7} parent=1 // pred_check_branch
      %19 = sbr.rel (0) target = $region17
    $region16: #{vae_encoder_forward.7} parent=1 // pred_region
      _
    $region17: #{vae_encoder_forward.7} parent=1 // pred_fallthru
      _
    // Predicated region
    $region18: #{vae_encoder_forward.7} parent=1 // pred_check
      _
    $region19: #{vae_encoder_forward.7} parent=1 // pred_check_branch
      %21 = sbr.rel (0) target = $region21
    $region20: #{vae_encoder_forward.7} parent=1 // pred_region
      _
    $region21: #{vae_encoder_forward.7} parent=1 // pred_fallthru
      _
    // Predicated region
    $region22: #{vae_encoder_forward.7} parent=1 // pred_check
      _
    $region23: #{vae_encoder_forward.7} parent=1 // pred_check_branch
      %23 = sbr.rel (0) target = $region25
    $region24: #{vae_encoder_forward.7} parent=1 // pred_region
      _
    $region25: #{vae_encoder_forward.7} parent=1 // pred_fallthru
      _
    %v24 = vld [vmem:[%s0] sm:$0xff]
    %v25 = vld [vmem:[%s0 + $0x8] sm:$0xff]
    %v26 = vld [vmem:[%s0 + $0x10] sm:$0xff]
    %v27 = vld [vmem:[%s0 + $0x18] sm:$0xff]
    %v28 = vld [vmem:[%s0 + $0x20] sm:$0xff]
    %v29 = vld [vmem:[%s0 + $0x28] sm:$0xff]
    %v30 = vld [vmem:[%s0 + $0x30] sm:$0xff]
    %v31 = vld [vmem:[%s0 + $0x38] sm:$0xff]
    %v32 = vld [vmem:[%s0 + $0x40] sm:$0xff]
    %v33 = vld [vmem:[%s0 + $0x48] sm:$0xff]
    %v34 = vld [vmem:[%s0 + $0x50] sm:$0xff]
    %v35 = vld [vmem:[%s0 + $0x58] sm:$0xff]
    %v36 = vld [vmem:[%s0 + $0x60] sm:$0xff]
    %v37 = vld [vmem:[%s0 + $0x68] sm:$0xff]
    %v38 = vld [vmem:[%s0 + $0x70] sm:$0xff]
    %v39 = vld [vmem:[%s0 + $0x78] sm:$0xff]
    %v40 = vld [vmem:[%s1] sm:$0xff]
    %v41 = vld [vmem:[%s1 + $0x8] sm:$0xff]
    %v42 = vld [vmem:[%s1 + $0x10] sm:$0xff]
    %v43 = vld [vmem:[%s1 + $0x18] sm:$0xff]
    %v44 = vld [vmem:[%s1 + $0x20] sm:$0xff]
    %v45 = vld [vmem:[%s1 + $0x28] sm:$0xff]
    %v46 = vld [vmem:[%s1 + $0x30] sm:$0xff]
    %v47 = vld [vmem:[%s1 + $0x38] sm:$0xff]
    %v48 = vld [vmem:[%s1 + $0x40] sm:$0xff]
    %v49 = vld [vmem:[%s1 + $0x48] sm:$0xff]
    %v50 = vld [vmem:[%s1 + $0x50] sm:$0xff]
    %v51 = vld [vmem:[%s1 + $0x58] sm:$0xff]
    %v52 = vld [vmem:[%s1 + $0x60] sm:$0xff]
    %v53 = vld [vmem:[%s1 + $0x68] sm:$0xff]
    %v54 = vld [vmem:[%s1 + $0x70] sm:$0xff]
    %v55 = vld [vmem:[%s1 + $0x78] sm:$0xff]
    %v56 = vld [vmem:[%s1 + $0x80] sm:$0xff]
    %v57 = vld [vmem:[%s1 + $0x88] sm:$0xff]
    %v58 = vld [vmem:[%s1 + $0x90] sm:$0xff]
    %v59 = vld [vmem:[%s1 + $0x98] sm:$0xff]
    %v60 = vld [vmem:[%s1 + $0xa0] sm:$0xff]
    %v61 = vld [vmem:[%s1 + $0xa8] sm:$0xff]
    %v62 = vld [vmem:[%s1 + $0xb0] sm:$0xff]
    %v63 = vld [vmem:[%s1 + $0xb8] sm:$0xff]
    %v64 = vld [vmem:[%s1 + $0xc0] sm:$0xff]
    %v65 = vld [vmem:[%s1 + $0xc8] sm:$0xff]
    %v66 = vld [vmem:[%s1 + $0xd0] sm:$0xff]
    %v67 = vld [vmem:[%s1 + $0xd8] sm:$0xff]
    %v68 = vld [vmem:[%s1 + $0xe0] sm:$0xff]
    %v69 = vld [vmem:[%s1 + $0xe8] sm:$0xff]
    %v70 = vld [vmem:[%s1 + $0xf0] sm:$0xff]
    %v71 = vld [vmem:[%s1 + $0xf8] sm:$0xff]
    %v72 = vld [vmem:[%s1 + $0x100] sm:$0xff]
    %v73 = vld [vmem:[%s1 + $0x108] sm:$0xff]
    %v74 = vld [vmem:[%s1 + $0x110] sm:$0xff]
    %v75 = vld [vmem:[%s1 + $0x118] sm:$0xff]
    %v76 = vld [vmem:[%s1 + $0x120] sm:$0xff]
    %v77 = vld [vmem:[%s1 + $0x128] sm:$0xff]
    %v78 = vld [vmem:[%s1 + $0x130] sm:$0xff]
    %v79 = vld [vmem:[%s1 + $0x138] sm:$0xff]
    %v80 = vld [vmem:[%s1 + $0x140] sm:$0xff]
    %v81 = vld [vmem:[%s1 + $0x148] sm:$0xff]
    %v82 = vld [vmem:[%s1 + $0x150] sm:$0xff]
    %v83 = vld [vmem:[%s1 + $0x158] sm:$0xff]
    %v84 = vld [vmem:[%s1 + $0x160] sm:$0xff]
    %v85 = vld [vmem:[%s1 + $0x168] sm:$0xff]
    %v86 = vld [vmem:[%s1 + $0x170] sm:$0xff]
    %v87 = vld [vmem:[%s1 + $0x178] sm:$0xff]
    %v88 = vld [vmem:[%s1 + $0x180] sm:$0xff]
    %v89 = vld [vmem:[%s1 + $0x188] sm:$0xff]
    %v90 = vld [vmem:[%s1 + $0x190] sm:$0xff]
    %v91 = vld [vmem:[%s1 + $0x198] sm:$0xff]
    %v92 = vld [vmem:[%s1 + $0x1a0] sm:$0xff]
    %v93 = vld [vmem:[%s1 + $0x1a8] sm:$0xff]
    %v94 = vld [vmem:[%s1 + $0x1b0] sm:$0xff]
    %v95 = vld [vmem:[%s1 + $0x1b8] sm:$0xff]
    %v96 = vld [vmem:[%s1 + $0x1c0] sm:$0xff]
    %v97 = vld [vmem:[%s1 + $0x1c8] sm:$0xff]
    %v98 = vld [vmem:[%s1 + $0x1d0] sm:$0xff]
    %v99 = vld [vmem:[%s1 + $0x1d8] sm:$0xff]
    %v100 = vld [vmem:[%s1 + $0x1e0] sm:$0xff]
    %v101 = vld [vmem:[%s1 + $0x1e8] sm:$0xff]
    %v102 = vld [vmem:[%s1 + $0x1f0] sm:$0xff]
    %v103 = vld [vmem:[%s1 + $0x1f8] sm:$0xff]
    %v104 = vld [vmem:[%s1 + $0x200] sm:$0xff]
    %v105 = vld [vmem:[%s1 + $0x208] sm:$0xff]
    %v106 = vld [vmem:[%s1 + $0x210] sm:$0xff]
    %v107 = vld [vmem:[%s1 + $0x218] sm:$0xff]
    %v108 = vld [vmem:[%s1 + $0x220] sm:$0xff]
    %v109 = vld [vmem:[%s1 + $0x228] sm:$0xff]
    %v110 = vld [vmem:[%s1 + $0x230] sm:$0xff]
    %v111 = vld [vmem:[%s1 + $0x238] sm:$0xff]
    %v112 = vld [vmem:[%s1 + $0x240] sm:$0xff]
    %v113 = vld [vmem:[%s1 + $0x248] sm:$0xff]
    %v114 = vld [vmem:[%s1 + $0x250] sm:$0xff]
    %v115 = vld [vmem:[%s1 + $0x258] sm:$0xff]
    %v116 = vld [vmem:[%s1 + $0x260] sm:$0xff]
    %v117 = vld [vmem:[%s1 + $0x268] sm:$0xff]
    %v118 = vld [vmem:[%s1 + $0x270] sm:$0xff]
    %v119 = vld [vmem:[%s1 + $0x278] sm:$0xff]
    %v120 = vld [vmem:[%s1 + $0x280] sm:$0xff]
    %v121 = vld [vmem:[%s1 + $0x288] sm:$0xff]
    %v122 = vld [vmem:[%s1 + $0x290] sm:$0xff]
    %v123 = vld [vmem:[%s1 + $0x298] sm:$0xff]
    %v124 = vld [vmem:[%s1 + $0x2a0] sm:$0xff]
    %v125 = vld [vmem:[%s1 + $0x2a8] sm:$0xff]
    %v126 = vld [vmem:[%s1 + $0x2b0] sm:$0xff]
    %v127 = vld [vmem:[%s1 + $0x2b8] sm:$0xff]
    %v128 = vld [vmem:[%s1 + $0x2c0] sm:$0xff]
    %v129 = vld [vmem:[%s1 + $0x2c8] sm:$0xff]
    %v130 = vld [vmem:[%s1 + $0x2d0] sm:$0xff]
    %v131 = vld [vmem:[%s1 + $0x2d8] sm:$0xff]
    %v132 = vld [vmem:[%s1 + $0x2e0] sm:$0xff]
    %v133 = vld [vmem:[%s1 + $0x2e8] sm:$0xff]
    %v134 = vld [vmem:[%s1 + $0x2f0] sm:$0xff]
    %v135 = vld [vmem:[%s1 + $0x2f8] sm:$0xff]
    %v136 = vld [vmem:[%s1 + $0x300] sm:$0xff]
    %v137 = vld [vmem:[%s1 + $0x308] sm:$0xff]
    %v138 = vld [vmem:[%s1 + $0x310] sm:$0xff]
    %v139 = vld [vmem:[%s1 + $0x318] sm:$0xff]
    %v140 = vld [vmem:[%s1 + $0x320] sm:$0xff]
    %v141 = vld [vmem:[%s1 + $0x328] sm:$0xff]
    %v142 = vld [vmem:[%s1 + $0x330] sm:$0xff]
    %v143 = vld [vmem:[%s1 + $0x338] sm:$0xff]
    %v144 = vld [vmem:[%s1 + $0x340] sm:$0xff]
    %v145 = vld [vmem:[%s1 + $0x348] sm:$0xff]
    %v146 = vld [vmem:[%s1 + $0x350] sm:$0xff]
    %v147 = vld [vmem:[%s1 + $0x358] sm:$0xff]
    %v148 = vld [vmem:[%s1 + $0x360] sm:$0xff]
    %v149 = vld [vmem:[%s1 + $0x368] sm:$0xff]
    %v150 = vld [vmem:[%s1 + $0x370] sm:$0xff]
    %v151 = vld [vmem:[%s1 + $0x378] sm:$0xff]
    %v152 = vld [vmem:[%s1 + $0x380] sm:$0xff]
    %v153 = vld [vmem:[%s1 + $0x388] sm:$0xff]
    %v154 = vld [vmem:[%s1 + $0x390] sm:$0xff]
    %v155 = vld [vmem:[%s1 + $0x398] sm:$0xff]
    %v156 = vld [vmem:[%s1 + $0x3a0] sm:$0xff]
    %v157 = vld [vmem:[%s1 + $0x3a8] sm:$0xff]
    %v158 = vld [vmem:[%s1 + $0x3b0] sm:$0xff]
    %v159 = vld [vmem:[%s1 + $0x3b8] sm:$0xff]
    %v160 = vld [vmem:[%s1 + $0x3c0] sm:$0xff]
    %v161 = vld [vmem:[%s1 + $0x3c8] sm:$0xff]
    %v162 = vld [vmem:[%s1 + $0x3d0] sm:$0xff]
    %v163 = vld [vmem:[%s1 + $0x3d8] sm:$0xff]
    %v164 = vld [vmem:[%s1 + $0x3e0] sm:$0xff]
    %v165 = vld [vmem:[%s1 + $0x3e8] sm:$0xff]
    %v166 = vld [vmem:[%s1 + $0x3f0] sm:$0xff]
    %v167 = vld [vmem:[%s1 + $0x3f8] sm:$0xff]
    %v168 = vld [vmem:[%s1 + $0x400] sm:$0xff]
    %v169 = vld [vmem:[%s1 + $0x408] sm:$0xff]
    %v170 = vld [vmem:[%s1 + $0x410] sm:$0xff]
    %v171 = vld [vmem:[%s1 + $0x418] sm:$0xff]
    %v172 = vld [vmem:[%s1 + $0x420] sm:$0xff]
    %v173 = vld [vmem:[%s1 + $0x428] sm:$0xff]
    %v174 = vld [vmem:[%s1 + $0x430] sm:$0xff]
    %v175 = vld [vmem:[%s1 + $0x438] sm:$0xff]
    %v176 = vld [vmem:[%s1 + $0x440] sm:$0xff]
    %v177 = vld [vmem:[%s1 + $0x448] sm:$0xff]
    %v178 = vld [vmem:[%s1 + $0x450] sm:$0xff]
    %v179 = vld [vmem:[%s1 + $0x458] sm:$0xff]
    %v180 = vld [vmem:[%s1 + $0x460] sm:$0xff]
    %v181 = vld [vmem:[%s1 + $0x468] sm:$0xff]
    %v182 = vld [vmem:[%s1 + $0x470] sm:$0xff]
    %v183 = vld [vmem:[%s1 + $0x478] sm:$0xff]
    %v184 = vld [vmem:[%s1 + $0x480] sm:$0xff]
    %v185 = vld [vmem:[%s1 + $0x488] sm:$0xff]
    %v186 = vld [vmem:[%s1 + $0x490] sm:$0xff]
    %v187 = vld [vmem:[%s1 + $0x498] sm:$0xff]
    %v188 = vld [vmem:[%s1 + $0x4a0] sm:$0xff]
    %v189 = vld [vmem:[%s1 + $0x4a8] sm:$0xff]
    %v190 = vld [vmem:[%s1 + $0x4b0] sm:$0xff]
    %v191 = vld [vmem:[%s1 + $0x4b8] sm:$0xff]
    %v192 = vld [vmem:[%s1 + $0x4c0] sm:$0xff]
    %v193 = vld [vmem:[%s1 + $0x4c8] sm:$0xff]
    %v194 = vld [vmem:[%s1 + $0x4d0] sm:$0xff]
    %v195 = vld [vmem:[%s1 + $0x4d8] sm:$0xff]
    %v196 = vld [vmem:[%s1 + $0x4e0] sm:$0xff]
    %v197 = vld [vmem:[%s1 + $0x4e8] sm:$0xff]
    %v198 = vld [vmem:[%s1 + $0x4f0] sm:$0xff]
    %v199 = vld [vmem:[%s1 + $0x4f8] sm:$0xff]
    %v200 = vld [vmem:[%s1 + $0x500] sm:$0xff]
    %v201 = vld [vmem:[%s1 + $0x508] sm:$0xff]
    %v202 = vld [vmem:[%s1 + $0x510] sm:$0xff]
    %v203 = vld [vmem:[%s1 + $0x518] sm:$0xff]
    %v204 = vld [vmem:[%s1 + $0x520] sm:$0xff]
    %v205 = vld [vmem:[%s1 + $0x528] sm:$0xff]
    %v206 = vld [vmem:[%s1 + $0x530] sm:$0xff]
    %v207 = vld [vmem:[%s1 + $0x538] sm:$0xff]
    %v208 = vld [vmem:[%s1 + $0x540] sm:$0xff]
    %v209 = vld [vmem:[%s1 + $0x548] sm:$0xff]
    %v210 = vld [vmem:[%s1 + $0x550] sm:$0xff]
    %v211 = vld [vmem:[%s1 + $0x558] sm:$0xff]
    %v212 = vld [vmem:[%s1 + $0x560] sm:$0xff]
    %v213 = vld [vmem:[%s1 + $0x568] sm:$0xff]
    %v214 = vld [vmem:[%s1 + $0x570] sm:$0xff]
    %v215 = vld [vmem:[%s1 + $0x578] sm:$0xff]
    %v216 = vld [vmem:[%s1 + $0x580] sm:$0xff]
    %v217 = vld [vmem:[%s1 + $0x588] sm:$0xff]
    %v218 = vld [vmem:[%s1 + $0x590] sm:$0xff]
    %v219 = vld [vmem:[%s1 + $0x598] sm:$0xff]
    %v220 = vld [vmem:[%s1 + $0x5a0] sm:$0xff]
    %v221 = vld [vmem:[%s1 + $0x5a8] sm:$0xff]
    %v222 = vld [vmem:[%s1 + $0x5b0] sm:$0xff]
    %v223 = vld [vmem:[%s1 + $0x5b8] sm:$0xff]
    %v224 = vld [vmem:[%s1 + $0x5c0] sm:$0xff]
    %v225 = vld [vmem:[%s1 + $0x5c8] sm:$0xff]
    %v226 = vld [vmem:[%s1 + $0x5d0] sm:$0xff]
    %v227 = vld [vmem:[%s1 + $0x5d8] sm:$0xff]
    %v228 = vld [vmem:[%s1 + $0x5e0] sm:$0xff]
    %v229 = vld [vmem:[%s1 + $0x5e8] sm:$0xff]
    %v230 = vld [vmem:[%s1 + $0x5f0] sm:$0xff]
    %v231 = vld [vmem:[%s1 + $0x5f8] sm:$0xff]
    %v232 = vld [vmem:[%s1 + $0x600] sm:$0xff]
    %v233 = vld [vmem:[%s1 + $0x608] sm:$0xff]
    %v234 = vld [vmem:[%s1 + $0x610] sm:$0xff]
    %v235 = vld [vmem:[%s1 + $0x618] sm:$0xff]
    %v236 = vld [vmem:[%s1 + $0x620] sm:$0xff]
    %v237 = vld [vmem:[%s1 + $0x628] sm:$0xff]
    %v238 = vld [vmem:[%s1 + $0x630] sm:$0xff]
    %v239 = vld [vmem:[%s1 + $0x638] sm:$0xff]
    %v240 = vld [vmem:[%s1 + $0x640] sm:$0xff]
    %v241 = vld [vmem:[%s1 + $0x648] sm:$0xff]
    %v242 = vld [vmem:[%s1 + $0x650] sm:$0xff]
    %v243 = vld [vmem:[%s1 + $0x658] sm:$0xff]
    %v244 = vld [vmem:[%s1 + $0x660] sm:$0xff]
    %v245 = vld [vmem:[%s1 + $0x668] sm:$0xff]
    %v246 = vld [vmem:[%s1 + $0x670] sm:$0xff]
    %v247 = vld [vmem:[%s1 + $0x678] sm:$0xff]
    %v248 = vld [vmem:[%s1 + $0x680] sm:$0xff]
    %v249 = vld [vmem:[%s1 + $0x688] sm:$0xff]
    %v250 = vld [vmem:[%s1 + $0x690] sm:$0xff]
    %v251 = vld [vmem:[%s1 + $0x698] sm:$0xff]
    %v252 = vld [vmem:[%s1 + $0x6a0] sm:$0xff]
    %v253 = vld [vmem:[%s1 + $0x6a8] sm:$0xff]
    %v254 = vld [vmem:[%s1 + $0x6b0] sm:$0xff]
    %v255 = vld [vmem:[%s1 + $0x6b8] sm:$0xff]
    %v256 = vld [vmem:[%s1 + $0x6c0] sm:$0xff]
    %v257 = vld [vmem:[%s1 + $0x6c8] sm:$0xff]
    %v258 = vld [vmem:[%s1 + $0x6d0] sm:$0xff]
    %v259 = vld [vmem:[%s1 + $0x6d8] sm:$0xff]
    %v260 = vld [vmem:[%s1 + $0x6e0] sm:$0xff]
    %v261 = vld [vmem:[%s1 + $0x6e8] sm:$0xff]
    %v262 = vld [vmem:[%s1 + $0x6f0] sm:$0xff]
    %v263 = vld [vmem:[%s1 + $0x6f8] sm:$0xff]
    %v264 = vld [vmem:[%s1 + $0x700] sm:$0xff]
    %v265 = vld [vmem:[%s1 + $0x708] sm:$0xff]
    %v266 = vld [vmem:[%s1 + $0x710] sm:$0xff]
    %v267 = vld [vmem:[%s1 + $0x718] sm:$0xff]
    %v268 = vld [vmem:[%s1 + $0x720] sm:$0xff]
    %v269 = vld [vmem:[%s1 + $0x728] sm:$0xff]
    %v270 = vld [vmem:[%s1 + $0x730] sm:$0xff]
    %v271 = vld [vmem:[%s1 + $0x738] sm:$0xff]
    %v272 = vld [vmem:[%s1 + $0x740] sm:$0xff]
    %v273 = vld [vmem:[%s1 + $0x748] sm:$0xff]
    %v274 = vld [vmem:[%s1 + $0x750] sm:$0xff]
    %v275 = vld [vmem:[%s1 + $0x758] sm:$0xff]
    %v276 = vld [vmem:[%s1 + $0x760] sm:$0xff]
    %v277 = vld [vmem:[%s1 + $0x768] sm:$0xff]
    %v278 = vld [vmem:[%s1 + $0x770] sm:$0xff]
    %v279 = vld [vmem:[%s1 + $0x778] sm:$0xff]
    %v280 = vld [vmem:[%s1 + $0x780] sm:$0xff]
    %v281 = vld [vmem:[%s1 + $0x788] sm:$0xff]
    %v282 = vld [vmem:[%s1 + $0x790] sm:$0xff]
    %v283 = vld [vmem:[%s1 + $0x798] sm:$0xff]
    %v284 = vld [vmem:[%s1 + $0x7a0] sm:$0xff]
    %v285 = vld [vmem:[%s1 + $0x7a8] sm:$0xff]
    %v286 = vld [vmem:[%s1 + $0x7b0] sm:$0xff]
    %v287 = vld [vmem:[%s1 + $0x7b8] sm:$0xff]
    %v288 = vld [vmem:[%s1 + $0x7c0] sm:$0xff]
    %v289 = vld [vmem:[%s1 + $0x7c8] sm:$0xff]
    %v290 = vld [vmem:[%s1 + $0x7d0] sm:$0xff]
    %v291 = vld [vmem:[%s1 + $0x7d8] sm:$0xff]
    %v292 = vld [vmem:[%s1 + $0x7e0] sm:$0xff]
    %v293 = vld [vmem:[%s1 + $0x7e8] sm:$0xff]
    %v294 = vld [vmem:[%s1 + $0x7f0] sm:$0xff]
    %v295 = vld [vmem:[%s1 + $0x7f8] sm:$0xff]
    %v296 = vld [vmem:[%s1 + $0x800] sm:$0xff]
    %v297 = vld [vmem:[%s1 + $0x808] sm:$0xff]
    %v298 = vld [vmem:[%s1 + $0x810] sm:$0xff]
    %v299 = vld [vmem:[%s1 + $0x818] sm:$0xff]
    %v300 = vld [vmem:[%s1 + $0x820] sm:$0xff]
    %v301 = vld [vmem:[%s1 + $0x828] sm:$0xff]
    %v302 = vld [vmem:[%s1 + $0x830] sm:$0xff]
    %v303 = vld [vmem:[%s1 + $0x838] sm:$0xff]
    %v304 = vld [vmem:[%s1 + $0x840] sm:$0xff]
    %v305 = vld [vmem:[%s1 + $0x848] sm:$0xff]
    %v306 = vld [vmem:[%s1 + $0x850] sm:$0xff]
    %v307 = vld [vmem:[%s1 + $0x858] sm:$0xff]
    %v308 = vld [vmem:[%s1 + $0x860] sm:$0xff]
    %v309 = vld [vmem:[%s1 + $0x868] sm:$0xff]
    %v310 = vld [vmem:[%s1 + $0x870] sm:$0xff]
    %v311 = vld [vmem:[%s1 + $0x878] sm:$0xff]
    %v312 = vld [vmem:[%s1 + $0x880] sm:$0xff]
    %v313 = vld [vmem:[%s1 + $0x888] sm:$0xff]
    %v314 = vld [vmem:[%s1 + $0x890] sm:$0xff]
    %v315 = vld [vmem:[%s1 + $0x898] sm:$0xff]
    %v316 = vld [vmem:[%s1 + $0x8a0] sm:$0xff]
    %v317 = vld [vmem:[%s1 + $0x8a8] sm:$0xff]
    %v318 = vld [vmem:[%s1 + $0x8b0] sm:$0xff]
    %v319 = vld [vmem:[%s1 + $0x8b8] sm:$0xff]
    %v320 = vld [vmem:[%s1 + $0x8c0] sm:$0xff]
    %v321 = vld [vmem:[%s1 + $0x8c8] sm:$0xff]
    %v322 = vld [vmem:[%s1 + $0x8d0] sm:$0xff]
    %v323 = vld [vmem:[%s1 + $0x8d8] sm:$0xff]
    %v324 = vld [vmem:[%s1 + $0x8e0] sm:$0xff]
    %v325 = vld [vmem:[%s1 + $0x8e8] sm:$0xff]
    %v326 = vld [vmem:[%s1 + $0x8f0] sm:$0xff]
    %v327 = vld [vmem:[%s1 + $0x8f8] sm:$0xff]
    %v328 = vld [vmem:[%s1 + $0x900] sm:$0xff]
    %v329 = vld [vmem:[%s1 + $0x908] sm:$0xff]
    %v330 = vld [vmem:[%s1 + $0x910] sm:$0xff]
    %v331 = vld [vmem:[%s1 + $0x918] sm:$0xff]
    %v332 = vld [vmem:[%s1 + $0x920] sm:$0xff]
    %v333 = vld [vmem:[%s1 + $0x928] sm:$0xff]
    %v334 = vld [vmem:[%s1 + $0x930] sm:$0xff]
    %v335 = vld [vmem:[%s1 + $0x938] sm:$0xff]
    %v336 = vld [vmem:[%s1 + $0x940] sm:$0xff]
    %v337 = vld [vmem:[%s1 + $0x948] sm:$0xff]
    %v338 = vld [vmem:[%s1 + $0x950] sm:$0xff]
    %v339 = vld [vmem:[%s1 + $0x958] sm:$0xff]
    %v340 = vld [vmem:[%s1 + $0x960] sm:$0xff]
    %v341 = vld [vmem:[%s1 + $0x968] sm:$0xff]
    %v342 = vld [vmem:[%s1 + $0x970] sm:$0xff]
    %v343 = vld [vmem:[%s1 + $0x978] sm:$0xff]
    %v344 = vld [vmem:[%s1 + $0x980] sm:$0xff]
    %v345 = vld [vmem:[%s1 + $0x988] sm:$0xff]
    %v346 = vld [vmem:[%s1 + $0x990] sm:$0xff]
    %v347 = vld [vmem:[%s1 + $0x998] sm:$0xff]
    %v348 = vld [vmem:[%s1 + $0x9a0] sm:$0xff]
    %v349 = vld [vmem:[%s1 + $0x9a8] sm:$0xff]
    %v350 = vld [vmem:[%s1 + $0x9b0] sm:$0xff]
    %v351 = vld [vmem:[%s1 + $0x9b8] sm:$0xff]
    %v352 = vld [vmem:[%s1 + $0x9c0] sm:$0xff]
    %v353 = vld [vmem:[%s1 + $0x9c8] sm:$0xff]
    %v354 = vld [vmem:[%s1 + $0x9d0] sm:$0xff]
    %v355 = vld [vmem:[%s1 + $0x9d8] sm:$0xff]
    %v356 = vld [vmem:[%s1 + $0x9e0] sm:$0xff]
    %v357 = vld [vmem:[%s1 + $0x9e8] sm:$0xff]
    %v358 = vld [vmem:[%s1 + $0x9f0] sm:$0xff]
    %v359 = vld [vmem:[%s1 + $0x9f8] sm:$0xff]
    %v360 = vld [vmem:[%s1 + $0xa00] sm:$0xff]
    %v361 = vld [vmem:[%s1 + $0xa08] sm:$0xff]
    %v362 = vld [vmem:[%s1 + $0xa10] sm:$0xff]
    %v363 = vld [vmem:[%s1 + $0xa18] sm:$0xff]
    %v364 = vld [vmem:[%s1 + $0xa20] sm:$0xff]
    %v365 = vld [vmem:[%s1 + $0xa28] sm:$0xff]
    %v366 = vld [vmem:[%s1 + $0xa30] sm:$0xff]
    %v367 = vld [vmem:[%s1 + $0xa38] sm:$0xff]
    %v368 = vld [vmem:[%s1 + $0xa40] sm:$0xff]
    %v369 = vld [vmem:[%s1 + $0xa48] sm:$0xff]
    %v370 = vld [vmem:[%s1 + $0xa50] sm:$0xff]
    %v371 = vld [vmem:[%s1 + $0xa58] sm:$0xff]
    %v372 = vld [vmem:[%s1 + $0xa60] sm:$0xff]
    %v373 = vld [vmem:[%s1 + $0xa68] sm:$0xff]
    %v374 = vld [vmem:[%s1 + $0xa70] sm:$0xff]
    %v375 = vld [vmem:[%s1 + $0xa78] sm:$0xff]
    %v376 = vld [vmem:[%s1 + $0xa80] sm:$0xff]
    %v377 = vld [vmem:[%s1 + $0xa88] sm:$0xff]
    %v378 = vld [vmem:[%s1 + $0xa90] sm:$0xff]
    %v379 = vld [vmem:[%s1 + $0xa98] sm:$0xff]
    %v380 = vld [vmem:[%s1 + $0xaa0] sm:$0xff]
    %v381 = vld [vmem:[%s1 + $0xaa8] sm:$0xff]
    %v382 = vld [vmem:[%s1 + $0xab0] sm:$0xff]
    %v383 = vld [vmem:[%s1 + $0xab8] sm:$0xff]
    %v384 = vld [vmem:[%s1 + $0xac0] sm:$0xff]
    %v385 = vld [vmem:[%s1 + $0xac8] sm:$0xff]
    %v386 = vld [vmem:[%s1 + $0xad0] sm:$0xff]
    %v387 = vld [vmem:[%s1 + $0xad8] sm:$0xff]
    %v388 = vld [vmem:[%s1 + $0xae0] sm:$0xff]
    %v389 = vld [vmem:[%s1 + $0xae8] sm:$0xff]
    %v390 = vld [vmem:[%s1 + $0xaf0] sm:$0xff]
    %v391 = vld [vmem:[%s1 + $0xaf8] sm:$0xff]
    %v392 = vld [vmem:[%s1 + $0xb00] sm:$0xff]
    %v393 = vld [vmem:[%s1 + $0xb08] sm:$0xff]
    %v394 = vld [vmem:[%s1 + $0xb10] sm:$0xff]
    %v395 = vld [vmem:[%s1 + $0xb18] sm:$0xff]
    %v396 = vld [vmem:[%s1 + $0xb20] sm:$0xff]
    %v397 = vld [vmem:[%s1 + $0xb28] sm:$0xff]
    %v398 = vld [vmem:[%s1 + $0xb30] sm:$0xff]
    %v399 = vld [vmem:[%s1 + $0xb38] sm:$0xff]
    %v400 = vld [vmem:[%s1 + $0xb40] sm:$0xff]
    %v401 = vld [vmem:[%s1 + $0xb48] sm:$0xff]
    %v402 = vld [vmem:[%s1 + $0xb50] sm:$0xff]
    %v403 = vld [vmem:[%s1 + $0xb58] sm:$0xff]
    %v404 = vld [vmem:[%s1 + $0xb60] sm:$0xff]
    %v405 = vld [vmem:[%s1 + $0xb68] sm:$0xff]
    %v406 = vld [vmem:[%s1 + $0xb70] sm:$0xff]
    %v407 = vld [vmem:[%s1 + $0xb78] sm:$0xff]
    %v408 = vld [vmem:[%s1 + $0xb80] sm:$0xff]
    %v409 = vld [vmem:[%s1 + $0xb88] sm:$0xff]
    %v410 = vld [vmem:[%s1 + $0xb90] sm:$0xff]
    %v411 = vld [vmem:[%s1 + $0xb98] sm:$0xff]
    %v412 = vld [vmem:[%s1 + $0xba0] sm:$0xff]
    %v413 = vld [vmem:[%s1 + $0xba8] sm:$0xff]
    %v414 = vld [vmem:[%s1 + $0xbb0] sm:$0xff]
    %v415 = vld [vmem:[%s1 + $0xbb8] sm:$0xff]
    %v416 = vld [vmem:[%s1 + $0xbc0] sm:$0xff]
    %v417 = vld [vmem:[%s1 + $0xbc8] sm:$0xff]
    %v418 = vld [vmem:[%s1 + $0xbd0] sm:$0xff]
    %v419 = vld [vmem:[%s1 + $0xbd8] sm:$0xff]
    %v420 = vld [vmem:[%s1 + $0xbe0] sm:$0xff]
    %v421 = vld [vmem:[%s1 + $0xbe8] sm:$0xff]
    %v422 = vld [vmem:[%s1 + $0xbf0] sm:$0xff]
    %v423 = vld [vmem:[%s1 + $0xbf8] sm:$0xff]
    %v424 = vld [vmem:[%s1 + $0xc00] sm:$0xff]
    %v425 = vld [vmem:[%s1 + $0xc08] sm:$0xff]
    %v426 = vld [vmem:[%s1 + $0xc10] sm:$0xff]
    %v427 = vld [vmem:[%s1 + $0xc18] sm:$0xff]
    %v428 = vld [vmem:[%s1 + $0xc20] sm:$0xff]
    %v429 = vld [vmem:[%s1 + $0xc28] sm:$0xff]
    %v430 = vld [vmem:[%s1 + $0xc30] sm:$0xff]
    %v431 = vld [vmem:[%s1 + $0xc38] sm:$0xff]
    %v432 = vld [vmem:[%s1 + $0xc40] sm:$0xff]
    %v433 = vld [vmem:[%s1 + $0xc48] sm:$0xff]
    %v434 = vld [vmem:[%s1 + $0xc50] sm:$0xff]
    %v435 = vld [vmem:[%s1 + $0xc58] sm:$0xff]
    %v436 = vld [vmem:[%s1 + $0xc60] sm:$0xff]
    %v437 = vld [vmem:[%s1 + $0xc68] sm:$0xff]
    %v438 = vld [vmem:[%s1 + $0xc70] sm:$0xff]
    %v439 = vld [vmem:[%s1 + $0xc78] sm:$0xff]
    %v440 = vld [vmem:[%s1 + $0xc80] sm:$0xff]
    %v441 = vld [vmem:[%s1 + $0xc88] sm:$0xff]
    %v442 = vld [vmem:[%s1 + $0xc90] sm:$0xff]
    %v443 = vld [vmem:[%s1 + $0xc98] sm:$0xff]
    %v444 = vld [vmem:[%s1 + $0xca0] sm:$0xff]
    %v445 = vld [vmem:[%s1 + $0xca8] sm:$0xff]
    %v446 = vld [vmem:[%s1 + $0xcb0] sm:$0xff]
    %v447 = vld [vmem:[%s1 + $0xcb8] sm:$0xff]
    %v448 = vld [vmem:[%s1 + $0xcc0] sm:$0xff]
    %v449 = vld [vmem:[%s1 + $0xcc8] sm:$0xff]
    %v450 = vld [vmem:[%s1 + $0xcd0] sm:$0xff]
    %v451 = vld [vmem:[%s1 + $0xcd8] sm:$0xff]
    %v452 = vld [vmem:[%s1 + $0xce0] sm:$0xff]
    %v453 = vld [vmem:[%s1 + $0xce8] sm:$0xff]
    %v454 = vld [vmem:[%s1 + $0xcf0] sm:$0xff]
    %v455 = vld [vmem:[%s1 + $0xcf8] sm:$0xff]
    %v456 = vld [vmem:[%s1 + $0xd00] sm:$0xff]
    %v457 = vld [vmem:[%s1 + $0xd08] sm:$0xff]
    %v458 = vld [vmem:[%s1 + $0xd10] sm:$0xff]
    %v459 = vld [vmem:[%s1 + $0xd18] sm:$0xff]
    %v460 = vld [vmem:[%s1 + $0xd20] sm:$0xff]
    %v461 = vld [vmem:[%s1 + $0xd28] sm:$0xff]
    %v462 = vld [vmem:[%s1 + $0xd30] sm:$0xff]
    %v463 = vld [vmem:[%s1 + $0xd38] sm:$0xff]
    %v464 = vld [vmem:[%s1 + $0xd40] sm:$0xff]
    %v465 = vld [vmem:[%s1 + $0xd48] sm:$0xff]
    %v466 = vld [vmem:[%s1 + $0xd50] sm:$0xff]
    %v467 = vld [vmem:[%s1 + $0xd58] sm:$0xff]
    %v468 = vld [vmem:[%s1 + $0xd60] sm:$0xff]
    %v469 = vld [vmem:[%s1 + $0xd68] sm:$0xff]
    %v470 = vld [vmem:[%s1 + $0xd70] sm:$0xff]
    %v471 = vld [vmem:[%s1 + $0xd78] sm:$0xff]
    %v472 = vld [vmem:[%s1 + $0xd80] sm:$0xff]
    %v473 = vld [vmem:[%s1 + $0xd88] sm:$0xff]
    %v474 = vld [vmem:[%s1 + $0xd90] sm:$0xff]
    %v475 = vld [vmem:[%s1 + $0xd98] sm:$0xff]
    %v476 = vld [vmem:[%s1 + $0xda0] sm:$0xff]
    %v477 = vld [vmem:[%s1 + $0xda8] sm:$0xff]
    %v478 = vld [vmem:[%s1 + $0xdb0] sm:$0xff]
    %v479 = vld [vmem:[%s1 + $0xdb8] sm:$0xff]
    %v480 = vld [vmem:[%s1 + $0xdc0] sm:$0xff]
    %v481 = vld [vmem:[%s1 + $0xdc8] sm:$0xff]
    %v482 = vld [vmem:[%s1 + $0xdd0] sm:$0xff]
    %v483 = vld [vmem:[%s1 + $0xdd8] sm:$0xff]
    %v484 = vld [vmem:[%s1 + $0xde0] sm:$0xff]
    %v485 = vld [vmem:[%s1 + $0xde8] sm:$0xff]
    %v486 = vld [vmem:[%s1 + $0xdf0] sm:$0xff]
    %v487 = vld [vmem:[%s1 + $0xdf8] sm:$0xff]
    %v488 = vld [vmem:[%s1 + $0xe00] sm:$0xff]
    %v489 = vld [vmem:[%s1 + $0xe08] sm:$0xff]
    %v490 = vld [vmem:[%s1 + $0xe10] sm:$0xff]
    %v491 = vld [vmem:[%s1 + $0xe18] sm:$0xff]
    %v492 = vld [vmem:[%s1 + $0xe20] sm:$0xff]
    %v493 = vld [vmem:[%s1 + $0xe28] sm:$0xff]
    %v494 = vld [vmem:[%s1 + $0xe30] sm:$0xff]
    %v495 = vld [vmem:[%s1 + $0xe38] sm:$0xff]
    %v496 = vld [vmem:[%s1 + $0xe40] sm:$0xff]
    %v497 = vld [vmem:[%s1 + $0xe48] sm:$0xff]
    %v498 = vld [vmem:[%s1 + $0xe50] sm:$0xff]
    %v499 = vld [vmem:[%s1 + $0xe58] sm:$0xff]
    %v500 = vld [vmem:[%s1 + $0xe60] sm:$0xff]
    %v501 = vld [vmem:[%s1 + $0xe68] sm:$0xff]
    %v502 = vld [vmem:[%s1 + $0xe70] sm:$0xff]
    %v503 = vld [vmem:[%s1 + $0xe78] sm:$0xff]
    %v504 = vld [vmem:[%s1 + $0xe80] sm:$0xff]
    %v505 = vld [vmem:[%s1 + $0xe88] sm:$0xff]
    %v506 = vld [vmem:[%s1 + $0xe90] sm:$0xff]
    %v507 = vld [vmem:[%s1 + $0xe98] sm:$0xff]
    %v508 = vld [vmem:[%s1 + $0xea0] sm:$0xff]
    %v509 = vld [vmem:[%s1 + $0xea8] sm:$0xff]
    %v510 = vld [vmem:[%s1 + $0xeb0] sm:$0xff]
    %v511 = vld [vmem:[%s1 + $0xeb8] sm:$0xff]
    %v512 = vld [vmem:[%s1 + $0xec0] sm:$0xff]
    %v513 = vld [vmem:[%s1 + $0xec8] sm:$0xff]
    %v514 = vld [vmem:[%s1 + $0xed0] sm:$0xff]
    %v515 = vld [vmem:[%s1 + $0xed8] sm:$0xff]
    %v516 = vld [vmem:[%s1 + $0xee0] sm:$0xff]
    %v517 = vld [vmem:[%s1 + $0xee8] sm:$0xff]
    %v518 = vld [vmem:[%s1 + $0xef0] sm:$0xff]
    %v519 = vld [vmem:[%s1 + $0xef8] sm:$0xff]
    %v520 = vld [vmem:[%s1 + $0xf00] sm:$0xff]
    %v521 = vld [vmem:[%s1 + $0xf08] sm:$0xff]
    %v522 = vld [vmem:[%s1 + $0xf10] sm:$0xff]
    %v523 = vld [vmem:[%s1 + $0xf18] sm:$0xff]
    %v524 = vld [vmem:[%s1 + $0xf20] sm:$0xff]
    %v525 = vld [vmem:[%s1 + $0xf28] sm:$0xff]
    %v526 = vld [vmem:[%s1 + $0xf30] sm:$0xff]
    %v527 = vld [vmem:[%s1 + $0xf38] sm:$0xff]
    %v528 = vld [vmem:[%s1 + $0xf40] sm:$0xff]
    %v529 = vld [vmem:[%s1 + $0xf48] sm:$0xff]
    %v530 = vld [vmem:[%s1 + $0xf50] sm:$0xff]
    %v531 = vld [vmem:[%s1 + $0xf58] sm:$0xff]
    %v532 = vld [vmem:[%s1 + $0xf60] sm:$0xff]
    %v533 = vld [vmem:[%s1 + $0xf68] sm:$0xff]
    %v534 = vld [vmem:[%s1 + $0xf70] sm:$0xff]
    %v535 = vld [vmem:[%s1 + $0xf78] sm:$0xff]
    %v536 = vld [vmem:[%s1 + $0xf80] sm:$0xff]
    %v537 = vld [vmem:[%s1 + $0xf88] sm:$0xff]
    %v538 = vld [vmem:[%s1 + $0xf90] sm:$0xff]
    %v539 = vld [vmem:[%s1 + $0xf98] sm:$0xff]
    %v540 = vld [vmem:[%s1 + $0xfa0] sm:$0xff]
    %v541 = vld [vmem:[%s1 + $0xfa8] sm:$0xff]
    %v542 = vld [vmem:[%s1 + $0xfb0] sm:$0xff]
    %v543 = vld [vmem:[%s1 + $0xfb8] sm:$0xff]
    %v544 = vld [vmem:[%s1 + $0xfc0] sm:$0xff]
    %v545 = vld [vmem:[%s1 + $0xfc8] sm:$0xff]
    %v546 = vld [vmem:[%s1 + $0xfd0] sm:$0xff]
    %v547 = vld [vmem:[%s1 + $0xfd8] sm:$0xff]
    %v548 = vld [vmem:[%s1 + $0xfe0] sm:$0xff]
    %v549 = vld [vmem:[%s1 + $0xfe8] sm:$0xff]
    %v550 = vld [vmem:[%s1 + $0xff0] sm:$0xff]
    %v551 = vld [vmem:[%s1 + $0xff8] sm:$0xff]
    %552 = vmatpush.msra.mxu0 %v70
    %553 = vmatpush.msra.mxu0 %v68
    %554 = vmatpush.msra.mxu0 %v66
    %555 = vmatpush.msra.mxu0 %v64
    %556 = vmatpush.msra.mxu0 %v62
    %557 = vmatpush.msra.mxu0 %v60
    %558 = vmatpush.msra.mxu0 %v58
    %559 = vmatpush.msra.mxu0 %v56
    %560 = vmatpush.msra.mxu0 %v54
    %561 = vmatpush.msra.mxu0 %v52
    %562 = vmatpush.msra.mxu0 %v50
    %563 = vmatpush.msra.mxu0 %v48
    %564 = vmatpush.msra.mxu0 %v46
    %565 = vmatpush.msra.mxu0 %v44
    %566 = vmatpush.msra.mxu0 %v42
    %567 = vmatpush.msra.mxu0 %v40
    %568 = vmatmul.f32.gmra.mxu0 %v24
    %v569 = vpop.f32.mrf.mxu0
    %v570 = vadd.f32 0.0, %v569
    %571 = vdwg.mxu0
    %572 = vmatpush.msra.mxu0 %v102
    %573 = vmatpush.msra.mxu0 %v100
    %574 = vmatpush.msra.mxu0 %v98
    %575 = vmatpush.msra.mxu0 %v96
    %576 = vmatpush.msra.mxu0 %v94
    %577 = vmatpush.msra.mxu0 %v92
    %578 = vmatpush.msra.mxu0 %v90
    %579 = vmatpush.msra.mxu0 %v88
    %580 = vmatpush.msra.mxu0 %v86
    %581 = vmatpush.msra.mxu0 %v84
    %582 = vmatpush.msra.mxu0 %v82
    %583 = vmatpush.msra.mxu0 %v80
    %584 = vmatpush.msra.mxu0 %v78
    %585 = vmatpush.msra.mxu0 %v76
    %586 = vmatpush.msra.mxu0 %v74
    %587 = vmatpush.msra.mxu0 %v72
    %588 = vmatmul.f32.gmra.mxu0 %v25
    %v589 = vpop.f32.mrf.mxu0
    %v590 = vadd.f32 %v570, %v589
    %591 = vdwg.mxu0
    %592 = vmatpush.msra.mxu0 %v134
    %593 = vmatpush.msra.mxu0 %v132
    %594 = vmatpush.msra.mxu0 %v130
    %595 = vmatpush.msra.mxu0 %v128
    %596 = vmatpush.msra.mxu0 %v126
    %597 = vmatpush.msra.mxu0 %v124
    %598 = vmatpush.msra.mxu0 %v122
    %599 = vmatpush.msra.mxu0 %v120
    %600 = vmatpush.msra.mxu0 %v118
    %601 = vmatpush.msra.mxu0 %v116
    %602 = vmatpush.msra.mxu0 %v114
    %603 = vmatpush.msra.mxu0 %v112
    %604 = vmatpush.msra.mxu0 %v110
    %605 = vmatpush.msra.mxu0 %v108
    %606 = vmatpush.msra.mxu0 %v106
    %607 = vmatpush.msra.mxu0 %v104
    %608 = vmatmul.f32.gmra.mxu0 %v26
    %v609 = vpop.f32.mrf.mxu0
    %v610 = vadd.f32 %v590, %v609
    %611 = vdwg.mxu0
    %612 = vmatpush.msra.mxu0 %v166
    %613 = vmatpush.msra.mxu0 %v164
    %614 = vmatpush.msra.mxu0 %v162
    %615 = vmatpush.msra.mxu0 %v160
    %616 = vmatpush.msra.mxu0 %v158
    %617 = vmatpush.msra.mxu0 %v156
    %618 = vmatpush.msra.mxu0 %v154
    %619 = vmatpush.msra.mxu0 %v152
    %620 = vmatpush.msra.mxu0 %v150
    %621 = vmatpush.msra.mxu0 %v148
    %622 = vmatpush.msra.mxu0 %v146
    %623 = vmatpush.msra.mxu0 %v144
    %624 = vmatpush.msra.mxu0 %v142
    %625 = vmatpush.msra.mxu0 %v140
    %626 = vmatpush.msra.mxu0 %v138
    %627 = vmatpush.msra.mxu0 %v136
    %628 = vmatmul.f32.gmra.mxu0 %v27
    %v629 = vpop.f32.mrf.mxu0
    %v630 = vadd.f32 %v610, %v629
    %631 = vdwg.mxu0
    %632 = vmatpush.msra.mxu0 %v198
    %633 = vmatpush.msra.mxu0 %v196
    %634 = vmatpush.msra.mxu0 %v194
    %635 = vmatpush.msra.mxu0 %v192
    %636 = vmatpush.msra.mxu0 %v190
    %637 = vmatpush.msra.mxu0 %v188
    %638 = vmatpush.msra.mxu0 %v186
    %639 = vmatpush.msra.mxu0 %v184
    %640 = vmatpush.msra.mxu0 %v182
    %641 = vmatpush.msra.mxu0 %v180
    %642 = vmatpush.msra.mxu0 %v178
    %643 = vmatpush.msra.mxu0 %v176
    %644 = vmatpush.msra.mxu0 %v174
    %645 = vmatpush.msra.mxu0 %v172
    %646 = vmatpush.msra.mxu0 %v170
    %647 = vmatpush.msra.mxu0 %v168
    %648 = vmatmul.f32.gmra.mxu0 %v28
    %v649 = vpop.f32.mrf.mxu0
    %v650 = vadd.f32 %v630, %v649
    %651 = vdwg.mxu0
    %652 = vmatpush.msra.mxu0 %v230
    %653 = vmatpush.msra.mxu0 %v228
    %654 = vmatpush.msra.mxu0 %v226
    %655 = vmatpush.msra.mxu0 %v224
    %656 = vmatpush.msra.mxu0 %v222
    %657 = vmatpush.msra.mxu0 %v220
    %658 = vmatpush.msra.mxu0 %v218
    %659 = vmatpush.msra.mxu0 %v216
    %660 = vmatpush.msra.mxu0 %v214
    %661 = vmatpush.msra.mxu0 %v212
    %662 = vmatpush.msra.mxu0 %v210
    %663 = vmatpush.msra.mxu0 %v208
    %664 = vmatpush.msra.mxu0 %v206
    %665 = vmatpush.msra.mxu0 %v204
    %666 = vmatpush.msra.mxu0 %v202
    %667 = vmatpush.msra.mxu0 %v200
    %668 = vmatmul.f32.gmra.mxu0 %v29
    %v669 = vpop.f32.mrf.mxu0
    %v670 = vadd.f32 %v650, %v669
    %671 = vdwg.mxu0
    %672 = vmatpush.msra.mxu0 %v262
    %673 = vmatpush.msra.mxu0 %v260
    %674 = vmatpush.msra.mxu0 %v258
    %675 = vmatpush.msra.mxu0 %v256
    %676 = vmatpush.msra.mxu0 %v254
    %677 = vmatpush.msra.mxu0 %v252
    %678 = vmatpush.msra.mxu0 %v250
    %679 = vmatpush.msra.mxu0 %v248
    %680 = vmatpush.msra.mxu0 %v246
    %681 = vmatpush.msra.mxu0 %v244
    %682 = vmatpush.msra.mxu0 %v242
    %683 = vmatpush.msra.mxu0 %v240
    %684 = vmatpush.msra.mxu0 %v238
    %685 = vmatpush.msra.mxu0 %v236
    %686 = vmatpush.msra.mxu0 %v234
    %687 = vmatpush.msra.mxu0 %v232
    %688 = vmatmul.f32.gmra.mxu0 %v30
    %v689 = vpop.f32.mrf.mxu0
    %v690 = vadd.f32 %v670, %v689
    %691 = vdwg.mxu0
    %692 = vmatpush.msra.mxu0 %v294
    %693 = vmatpush.msra.mxu0 %v292
    %694 = vmatpush.msra.mxu0 %v290
    %695 = vmatpush.msra.mxu0 %v288
    %696 = vmatpush.msra.mxu0 %v286
    %697 = vmatpush.msra.mxu0 %v284
    %698 = vmatpush.msra.mxu0 %v282
    %699 = vmatpush.msra.mxu0 %v280
    %700 = vmatpush.msra.mxu0 %v278
    %701 = vmatpush.msra.mxu0 %v276
    %702 = vmatpush.msra.mxu0 %v274
    %703 = vmatpush.msra.mxu0 %v272
    %704 = vmatpush.msra.mxu0 %v270
    %705 = vmatpush.msra.mxu0 %v268
    %706 = vmatpush.msra.mxu0 %v266
    %707 = vmatpush.msra.mxu0 %v264
    %708 = vmatmul.f32.gmra.mxu0 %v31
    %v709 = vpop.f32.mrf.mxu0
    %v710 = vadd.f32 %v690, %v709
    %711 = vdwg.mxu0
    %712 = vmatpush.msra.mxu0 %v326
    %713 = vmatpush.msra.mxu0 %v324
    %714 = vmatpush.msra.mxu0 %v322
    %715 = vmatpush.msra.mxu0 %v320
    %716 = vmatpush.msra.mxu0 %v318
    %717 = vmatpush.msra.mxu0 %v316
    %718 = vmatpush.msra.mxu0 %v314
    %719 = vmatpush.msra.mxu0 %v312
    %720 = vmatpush.msra.mxu0 %v310
    %721 = vmatpush.msra.mxu0 %v308
    %722 = vmatpush.msra.mxu0 %v306
    %723 = vmatpush.msra.mxu0 %v304
    %724 = vmatpush.msra.mxu0 %v302
    %725 = vmatpush.msra.mxu0 %v300
    %726 = vmatpush.msra.mxu0 %v298
    %727 = vmatpush.msra.mxu0 %v296
    %728 = vmatmul.f32.gmra.mxu0 %v32
    %v729 = vpop.f32.mrf.mxu0
    %v730 = vadd.f32 %v710, %v729
    %731 = vdwg.mxu0
    %732 = vmatpush.msra.mxu0 %v358
    %733 = vmatpush.msra.mxu0 %v356
    %734 = vmatpush.msra.mxu0 %v354
    %735 = vmatpush.msra.mxu0 %v352
    %736 = vmatpush.msra.mxu0 %v350
    %737 = vmatpush.msra.mxu0 %v348
    %738 = vmatpush.msra.mxu0 %v346
    %739 = vmatpush.msra.mxu0 %v344
    %740 = vmatpush.msra.mxu0 %v342
    %741 = vmatpush.msra.mxu0 %v340
    %742 = vmatpush.msra.mxu0 %v338
    %743 = vmatpush.msra.mxu0 %v336
    %744 = vmatpush.msra.mxu0 %v334
    %745 = vmatpush.msra.mxu0 %v332
    %746 = vmatpush.msra.mxu0 %v330
    %747 = vmatpush.msra.mxu0 %v328
    %748 = vmatmul.f32.gmra.mxu0 %v33
    %v749 = vpop.f32.mrf.mxu0
    %v750 = vadd.f32 %v730, %v749
    %751 = vdwg.mxu0
    %752 = vmatpush.msra.mxu0 %v390
    %753 = vmatpush.msra.mxu0 %v388
    %754 = vmatpush.msra.mxu0 %v386
    %755 = vmatpush.msra.mxu0 %v384
    %756 = vmatpush.msra.mxu0 %v382
    %757 = vmatpush.msra.mxu0 %v380
    %758 = vmatpush.msra.mxu0 %v378
    %759 = vmatpush.msra.mxu0 %v376
    %760 = vmatpush.msra.mxu0 %v374
    %761 = vmatpush.msra.mxu0 %v372
    %762 = vmatpush.msra.mxu0 %v370
    %763 = vmatpush.msra.mxu0 %v368
    %764 = vmatpush.msra.mxu0 %v366
    %765 = vmatpush.msra.mxu0 %v364
    %766 = vmatpush.msra.mxu0 %v362
    %767 = vmatpush.msra.mxu0 %v360
    %768 = vmatmul.f32.gmra.mxu0 %v34
    %v769 = vpop.f32.mrf.mxu0
    %v770 = vadd.f32 %v750, %v769
    %771 = vdwg.mxu0
    %772 = vmatpush.msra.mxu0 %v422
    %773 = vmatpush.msra.mxu0 %v420
    %774 = vmatpush.msra.mxu0 %v418
    %775 = vmatpush.msra.mxu0 %v416
    %776 = vmatpush.msra.mxu0 %v414
    %777 = vmatpush.msra.mxu0 %v412
    %778 = vmatpush.msra.mxu0 %v410
    %779 = vmatpush.msra.mxu0 %v408
    %780 = vmatpush.msra.mxu0 %v406
    %781 = vmatpush.msra.mxu0 %v404
    %782 = vmatpush.msra.mxu0 %v402
    %783 = vmatpush.msra.mxu0 %v400
    %784 = vmatpush.msra.mxu0 %v398
    %785 = vmatpush.msra.mxu0 %v396
    %786 = vmatpush.msra.mxu0 %v394
    %787 = vmatpush.msra.mxu0 %v392
    %788 = vmatmul.f32.gmra.mxu0 %v35
    %v789 = vpop.f32.mrf.mxu0
    %v790 = vadd.f32 %v770, %v789
    %791 = vdwg.mxu0
    %792 = vmatpush.msra.mxu0 %v454
    %793 = vmatpush.msra.mxu0 %v452
    %794 = vmatpush.msra.mxu0 %v450
    %795 = vmatpush.msra.mxu0 %v448
    %796 = vmatpush.msra.mxu0 %v446
    %797 = vmatpush.msra.mxu0 %v444
    %798 = vmatpush.msra.mxu0 %v442
    %799 = vmatpush.msra.mxu0 %v440
    %800 = vmatpush.msra.mxu0 %v438
    %801 = vmatpush.msra.mxu0 %v436
    %802 = vmatpush.msra.mxu0 %v434
    %803 = vmatpush.msra.mxu0 %v432
    %804 = vmatpush.msra.mxu0 %v430
    %805 = vmatpush.msra.mxu0 %v428
    %806 = vmatpush.msra.mxu0 %v426
    %807 = vmatpush.msra.mxu0 %v424
    %808 = vmatmul.f32.gmra.mxu0 %v36
    %v809 = vpop.f32.mrf.mxu0
    %v810 = vadd.f32 %v790, %v809
    %811 = vdwg.mxu0
    %812 = vmatpush.msra.mxu0 %v486
    %813 = vmatpush.msra.mxu0 %v484
    %814 = vmatpush.msra.mxu0 %v482
    %815 = vmatpush.msra.mxu0 %v480
    %816 = vmatpush.msra.mxu0 %v478
    %817 = vmatpush.msra.mxu0 %v476
    %818 = vmatpush.msra.mxu0 %v474
    %819 = vmatpush.msra.mxu0 %v472
    %820 = vmatpush.msra.mxu0 %v470
    %821 = vmatpush.msra.mxu0 %v468
    %822 = vmatpush.msra.mxu0 %v466
    %823 = vmatpush.msra.mxu0 %v464
    %824 = vmatpush.msra.mxu0 %v462
    %825 = vmatpush.msra.mxu0 %v460
    %826 = vmatpush.msra.mxu0 %v458
    %827 = vmatpush.msra.mxu0 %v456
    %828 = vmatmul.f32.gmra.mxu0 %v37
    %v829 = vpop.f32.mrf.mxu0
    %v830 = vadd.f32 %v810, %v829
    %831 = vdwg.mxu0
    %832 = vmatpush.msra.mxu0 %v518
    %833 = vmatpush.msra.mxu0 %v516
    %834 = vmatpush.msra.mxu0 %v514
    %835 = vmatpush.msra.mxu0 %v512
    %836 = vmatpush.msra.mxu0 %v510
    %837 = vmatpush.msra.mxu0 %v508
    %838 = vmatpush.msra.mxu0 %v506
    %839 = vmatpush.msra.mxu0 %v504
    %840 = vmatpush.msra.mxu0 %v502
    %841 = vmatpush.msra.mxu0 %v500
    %842 = vmatpush.msra.mxu0 %v498
    %843 = vmatpush.msra.mxu0 %v496
    %844 = vmatpush.msra.mxu0 %v494
    %845 = vmatpush.msra.mxu0 %v492
    %846 = vmatpush.msra.mxu0 %v490
    %847 = vmatpush.msra.mxu0 %v488
    %848 = vmatmul.f32.gmra.mxu0 %v38
    %v849 = vpop.f32.mrf.mxu0
    %v850 = vadd.f32 %v830, %v849
    %851 = vdwg.mxu0
    %852 = vmatpush.msra.mxu0 %v550
    %853 = vmatpush.msra.mxu0 %v548
    %854 = vmatpush.msra.mxu0 %v546
    %855 = vmatpush.msra.mxu0 %v544
    %856 = vmatpush.msra.mxu0 %v542
    %857 = vmatpush.msra.mxu0 %v540
    %858 = vmatpush.msra.mxu0 %v538
    %859 = vmatpush.msra.mxu0 %v536
    %860 = vmatpush.msra.mxu0 %v534
    %861 = vmatpush.msra.mxu0 %v532
    %862 = vmatpush.msra.mxu0 %v530
    %863 = vmatpush.msra.mxu0 %v528
    %864 = vmatpush.msra.mxu0 %v526
    %865 = vmatpush.msra.mxu0 %v524
    %866 = vmatpush.msra.mxu0 %v522
    %867 = vmatpush.msra.mxu0 %v520
    %868 = vmatmul.f32.gmra.mxu0 %v39
    %v869 = vpop.f32.mrf.mxu0
    %v870 = vadd.f32 %v850, %v869
    %871 = vdwg.mxu0
    %872 = vmatpush.msra.mxu0 %v71
    %873 = vmatpush.msra.mxu0 %v69
    %874 = vmatpush.msra.mxu0 %v67
    %875 = vmatpush.msra.mxu0 %v65
    %876 = vmatpush.msra.mxu0 %v63
    %877 = vmatpush.msra.mxu0 %v61
    %878 = vmatpush.msra.mxu0 %v59
    %879 = vmatpush.msra.mxu0 %v57
    %880 = vmatpush.msra.mxu0 %v55
    %881 = vmatpush.msra.mxu0 %v53
    %882 = vmatpush.msra.mxu0 %v51
    %883 = vmatpush.msra.mxu0 %v49
    %884 = vmatpush.msra.mxu0 %v47
    %885 = vmatpush.msra.mxu0 %v45
    %886 = vmatpush.msra.mxu0 %v43
    %887 = vmatpush.msra.mxu0 %v41
    %888 = vmatmul.f32.gmra.mxu0 %v24
    %v889 = vpop.f32.mrf.mxu0
    %v890 = vadd.f32 0.0, %v889
    %891 = vdwg.mxu0
    %892 = vmatpush.msra.mxu0 %v103
    %893 = vmatpush.msra.mxu0 %v101
    %894 = vmatpush.msra.mxu0 %v99
    %895 = vmatpush.msra.mxu0 %v97
    %896 = vmatpush.msra.mxu0 %v95
    %897 = vmatpush.msra.mxu0 %v93
    %898 = vmatpush.msra.mxu0 %v91
    %899 = vmatpush.msra.mxu0 %v89
    %900 = vmatpush.msra.mxu0 %v87
    %901 = vmatpush.msra.mxu0 %v85
    %902 = vmatpush.msra.mxu0 %v83
    %903 = vmatpush.msra.mxu0 %v81
    %904 = vmatpush.msra.mxu0 %v79
    %905 = vmatpush.msra.mxu0 %v77
    %906 = vmatpush.msra.mxu0 %v75
    %907 = vmatpush.msra.mxu0 %v73
    %908 = vmatmul.f32.gmra.mxu0 %v25
    %v909 = vpop.f32.mrf.mxu0
    %v910 = vadd.f32 %v890, %v909
    %911 = vdwg.mxu0
    %912 = vmatpush.msra.mxu0 %v135
    %913 = vmatpush.msra.mxu0 %v133
    %914 = vmatpush.msra.mxu0 %v131
    %915 = vmatpush.msra.mxu0 %v129
    %916 = vmatpush.msra.mxu0 %v127
    %917 = vmatpush.msra.mxu0 %v125
    %918 = vmatpush.msra.mxu0 %v123
    %919 = vmatpush.msra.mxu0 %v121
    %920 = vmatpush.msra.mxu0 %v119
    %921 = vmatpush.msra.mxu0 %v117
    %922 = vmatpush.msra.mxu0 %v115
    %923 = vmatpush.msra.mxu0 %v113
    %924 = vmatpush.msra.mxu0 %v111
    %925 = vmatpush.msra.mxu0 %v109
    %926 = vmatpush.msra.mxu0 %v107
    %927 = vmatpush.msra.mxu0 %v105
    %928 = vmatmul.f32.gmra.mxu0 %v26
    %v929 = vpop.f32.mrf.mxu0
    %v930 = vadd.f32 %v910, %v929
    %931 = vdwg.mxu0
    %932 = vmatpush.msra.mxu0 %v167
    %933 = vmatpush.msra.mxu0 %v165
    %934 = vmatpush.msra.mxu0 %v163
    %935 = vmatpush.msra.mxu0 %v161
    %936 = vmatpush.msra.mxu0 %v159
    %937 = vmatpush.msra.mxu0 %v157
    %938 = vmatpush.msra.mxu0 %v155
    %939 = vmatpush.msra.mxu0 %v153
    %940 = vmatpush.msra.mxu0 %v151
    %941 = vmatpush.msra.mxu0 %v149
    %942 = vmatpush.msra.mxu0 %v147
    %943 = vmatpush.msra.mxu0 %v145
    %944 = vmatpush.msra.mxu0 %v143
    %945 = vmatpush.msra.mxu0 %v141
    %946 = vmatpush.msra.mxu0 %v139
    %947 = vmatpush.msra.mxu0 %v137
    %948 = vmatmul.f32.gmra.mxu0 %v27
    %v949 = vpop.f32.mrf.mxu0
    %v950 = vadd.f32 %v930, %v949
    %951 = vdwg.mxu0
    %952 = vmatpush.msra.mxu0 %v199
    %953 = vmatpush.msra.mxu0 %v197
    %954 = vmatpush.msra.mxu0 %v195
    %955 = vmatpush.msra.mxu0 %v193
    %956 = vmatpush.msra.mxu0 %v191
    %957 = vmatpush.msra.mxu0 %v189
    %958 = vmatpush.msra.mxu0 %v187
    %959 = vmatpush.msra.mxu0 %v185
    %960 = vmatpush.msra.mxu0 %v183
    %961 = vmatpush.msra.mxu0 %v181
    %962 = vmatpush.msra.mxu0 %v179
    %963 = vmatpush.msra.mxu0 %v177
    %964 = vmatpush.msra.mxu0 %v175
    %965 = vmatpush.msra.mxu0 %v173
    %966 = vmatpush.msra.mxu0 %v171
    %967 = vmatpush.msra.mxu0 %v169
    %968 = vmatmul.f32.gmra.mxu0 %v28
    %v969 = vpop.f32.mrf.mxu0
    %v970 = vadd.f32 %v950, %v969
    %971 = vdwg.mxu0
    %972 = vmatpush.msra.mxu0 %v231
    %973 = vmatpush.msra.mxu0 %v229
    %974 = vmatpush.msra.mxu0 %v227
    %975 = vmatpush.msra.mxu0 %v225
    %976 = vmatpush.msra.mxu0 %v223
    %977 = vmatpush.msra.mxu0 %v221
    %978 = vmatpush.msra.mxu0 %v219
    %979 = vmatpush.msra.mxu0 %v217
    %980 = vmatpush.msra.mxu0 %v215
    %981 = vmatpush.msra.mxu0 %v213
    %982 = vmatpush.msra.mxu0 %v211
    %983 = vmatpush.msra.mxu0 %v209
    %984 = vmatpush.msra.mxu0 %v207
    %985 = vmatpush.msra.mxu0 %v205
    %986 = vmatpush.msra.mxu0 %v203
    %987 = vmatpush.msra.mxu0 %v201
    %988 = vmatmul.f32.gmra.mxu0 %v29
    %v989 = vpop.f32.mrf.mxu0
    %v990 = vadd.f32 %v970, %v989
    %991 = vdwg.mxu0
    %992 = vmatpush.msra.mxu0 %v263
    %993 = vmatpush.msra.mxu0 %v261
    %994 = vmatpush.msra.mxu0 %v259
    %995 = vmatpush.msra.mxu0 %v257
    %996 = vmatpush.msra.mxu0 %v255
    %997 = vmatpush.msra.mxu0 %v253
    %998 = vmatpush.msra.mxu0 %v251
    %999 = vmatpush.msra.mxu0 %v249
    %1000 = vmatpush.msra.mxu0 %v247
    %1001 = vmatpush.msra.mxu0 %v245
    %1002 = vmatpush.msra.mxu0 %v243
    %1003 = vmatpush.msra.mxu0 %v241
    %1004 = vmatpush.msra.mxu0 %v239
    %1005 = vmatpush.msra.mxu0 %v237
    %1006 = vmatpush.msra.mxu0 %v235
    %1007 = vmatpush.msra.mxu0 %v233
    %1008 = vmatmul.f32.gmra.mxu0 %v30
    %v1009 = vpop.f32.mrf.mxu0
    %v1010 = vadd.f32 %v990, %v1009
    %1011 = vdwg.mxu0
    %1012 = vmatpush.msra.mxu0 %v295
    %1013 = vmatpush.msra.mxu0 %v293
    %1014 = vmatpush.msra.mxu0 %v291
    %1015 = vmatpush.msra.mxu0 %v289
    %1016 = vmatpush.msra.mxu0 %v287
    %1017 = vmatpush.msra.mxu0 %v285
    %1018 = vmatpush.msra.mxu0 %v283
    %1019 = vmatpush.msra.mxu0 %v281
    %1020 = vmatpush.msra.mxu0 %v279
    %1021 = vmatpush.msra.mxu0 %v277
    %1022 = vmatpush.msra.mxu0 %v275
    %1023 = vmatpush.msra.mxu0 %v273
    %1024 = vmatpush.msra.mxu0 %v271
    %1025 = vmatpush.msra.mxu0 %v269
    %1026 = vmatpush.msra.mxu0 %v267
    %1027 = vmatpush.msra.mxu0 %v265
    %1028 = vmatmul.f32.gmra.mxu0 %v31
    %v1029 = vpop.f32.mrf.mxu0
    %v1030 = vadd.f32 %v1010, %v1029
    %1031 = vdwg.mxu0
    %1032 = vmatpush.msra.mxu0 %v327
    %1033 = vmatpush.msra.mxu0 %v325
    %1034 = vmatpush.msra.mxu0 %v323
    %1035 = vmatpush.msra.mxu0 %v321
    %1036 = vmatpush.msra.mxu0 %v319
    %1037 = vmatpush.msra.mxu0 %v317
    %1038 = vmatpush.msra.mxu0 %v315
    %1039 = vmatpush.msra.mxu0 %v313
    %1040 = vmatpush.msra.mxu0 %v311
    %1041 = vmatpush.msra.mxu0 %v309
    %1042 = vmatpush.msra.mxu0 %v307
    %1043 = vmatpush.msra.mxu0 %v305
    %1044 = vmatpush.msra.mxu0 %v303
    %1045 = vmatpush.msra.mxu0 %v301
    %1046 = vmatpush.msra.mxu0 %v299
    %1047 = vmatpush.msra.mxu0 %v297
    %1048 = vmatmul.f32.gmra.mxu0 %v32
    %v1049 = vpop.f32.mrf.mxu0
    %v1050 = vadd.f32 %v1030, %v1049
    %1051 = vdwg.mxu0
    %1052 = vmatpush.msra.mxu0 %v359
    %1053 = vmatpush.msra.mxu0 %v357
    %1054 = vmatpush.msra.mxu0 %v355
    %1055 = vmatpush.msra.mxu0 %v353
    %1056 = vmatpush.msra.mxu0 %v351
    %1057 = vmatpush.msra.mxu0 %v349
    %1058 = vmatpush.msra.mxu0 %v347
    %1059 = vmatpush.msra.mxu0 %v345
    %1060 = vmatpush.msra.mxu0 %v343
    %1061 = vmatpush.msra.mxu0 %v341
    %1062 = vmatpush.msra.mxu0 %v339
    %1063 = vmatpush.msra.mxu0 %v337
    %1064 = vmatpush.msra.mxu0 %v335
    %1065 = vmatpush.msra.mxu0 %v333
    %1066 = vmatpush.msra.mxu0 %v331
    %1067 = vmatpush.msra.mxu0 %v329
    %1068 = vmatmul.f32.gmra.mxu0 %v33
    %v1069 = vpop.f32.mrf.mxu0
    %v1070 = vadd.f32 %v1050, %v1069
    %1071 = vdwg.mxu0
    %1072 = vmatpush.msra.mxu0 %v391
    %1073 = vmatpush.msra.mxu0 %v389
    %1074 = vmatpush.msra.mxu0 %v387
    %1075 = vmatpush.msra.mxu0 %v385
    %1076 = vmatpush.msra.mxu0 %v383
    %1077 = vmatpush.msra.mxu0 %v381
    %1078 = vmatpush.msra.mxu0 %v379
    %1079 = vmatpush.msra.mxu0 %v377
    %1080 = vmatpush.msra.mxu0 %v375
    %1081 = vmatpush.msra.mxu0 %v373
    %1082 = vmatpush.msra.mxu0 %v371
    %1083 = vmatpush.msra.mxu0 %v369
    %1084 = vmatpush.msra.mxu0 %v367
    %1085 = vmatpush.msra.mxu0 %v365
    %1086 = vmatpush.msra.mxu0 %v363
    %1087 = vmatpush.msra.mxu0 %v361
    %1088 = vmatmul.f32.gmra.mxu0 %v34
    %v1089 = vpop.f32.mrf.mxu0
    %v1090 = vadd.f32 %v1070, %v1089
    %1091 = vdwg.mxu0
    %1092 = vmatpush.msra.mxu0 %v423
    %1093 = vmatpush.msra.mxu0 %v421
    %1094 = vmatpush.msra.mxu0 %v419
    %1095 = vmatpush.msra.mxu0 %v417
    %1096 = vmatpush.msra.mxu0 %v415
    %1097 = vmatpush.msra.mxu0 %v413
    %1098 = vmatpush.msra.mxu0 %v411
    %1099 = vmatpush.msra.mxu0 %v409
    %1100 = vmatpush.msra.mxu0 %v407
    %1101 = vmatpush.msra.mxu0 %v405
    %1102 = vmatpush.msra.mxu0 %v403
    %1103 = vmatpush.msra.mxu0 %v401
    %1104 = vmatpush.msra.mxu0 %v399
    %1105 = vmatpush.msra.mxu0 %v397
    %1106 = vmatpush.msra.mxu0 %v395
    %1107 = vmatpush.msra.mxu0 %v393
    %1108 = vmatmul.f32.gmra.mxu0 %v35
    %v1109 = vpop.f32.mrf.mxu0
    %v1110 = vadd.f32 %v1090, %v1109
    %1111 = vdwg.mxu0
    %1112 = vmatpush.msra.mxu0 %v455
    %1113 = vmatpush.msra.mxu0 %v453
    %1114 = vmatpush.msra.mxu0 %v451
    %1115 = vmatpush.msra.mxu0 %v449
    %1116 = vmatpush.msra.mxu0 %v447
    %1117 = vmatpush.msra.mxu0 %v445
    %1118 = vmatpush.msra.mxu0 %v443
    %1119 = vmatpush.msra.mxu0 %v441
    %1120 = vmatpush.msra.mxu0 %v439
    %1121 = vmatpush.msra.mxu0 %v437
    %1122 = vmatpush.msra.mxu0 %v435
    %1123 = vmatpush.msra.mxu0 %v433
    %1124 = vmatpush.msra.mxu0 %v431
    %1125 = vmatpush.msra.mxu0 %v429
    %1126 = vmatpush.msra.mxu0 %v427
    %1127 = vmatpush.msra.mxu0 %v425
    %1128 = vmatmul.f32.gmra.mxu0 %v36
    %v1129 = vpop.f32.mrf.mxu0
    %v1130 = vadd.f32 %v1110, %v1129
    %1131 = vdwg.mxu0
    %1132 = vmatpush.msra.mxu0 %v487
    %1133 = vmatpush.msra.mxu0 %v485
    %1134 = vmatpush.msra.mxu0 %v483
    %1135 = vmatpush.msra.mxu0 %v481
    %1136 = vmatpush.msra.mxu0 %v479
    %1137 = vmatpush.msra.mxu0 %v477
    %1138 = vmatpush.msra.mxu0 %v475
    %1139 = vmatpush.msra.mxu0 %v473
    %1140 = vmatpush.msra.mxu0 %v471
    %1141 = vmatpush.msra.mxu0 %v469
    %1142 = vmatpush.msra.mxu0 %v467
    %1143 = vmatpush.msra.mxu0 %v465
    %1144 = vmatpush.msra.mxu0 %v463
    %1145 = vmatpush.msra.mxu0 %v461
    %1146 = vmatpush.msra.mxu0 %v459
    %1147 = vmatpush.msra.mxu0 %v457
    %1148 = vmatmul.f32.gmra.mxu0 %v37
    %v1149 = vpop.f32.mrf.mxu0
    %v1150 = vadd.f32 %v1130, %v1149
    %1151 = vdwg.mxu0
    %1152 = vmatpush.msra.mxu0 %v519
    %1153 = vmatpush.msra.mxu0 %v517
    %1154 = vmatpush.msra.mxu0 %v515
    %1155 = vmatpush.msra.mxu0 %v513
    %1156 = vmatpush.msra.mxu0 %v511
    %1157 = vmatpush.msra.mxu0 %v509
    %1158 = vmatpush.msra.mxu0 %v507
    %1159 = vmatpush.msra.mxu0 %v505
    %1160 = vmatpush.msra.mxu0 %v503
    %1161 = vmatpush.msra.mxu0 %v501
    %1162 = vmatpush.msra.mxu0 %v499
    %1163 = vmatpush.msra.mxu0 %v497
    %1164 = vmatpush.msra.mxu0 %v495
    %1165 = vmatpush.msra.mxu0 %v493
    %1166 = vmatpush.msra.mxu0 %v491
    %1167 = vmatpush.msra.mxu0 %v489
    %1168 = vmatmul.f32.gmra.mxu0 %v38
    %v1169 = vpop.f32.mrf.mxu0
    %v1170 = vadd.f32 %v1150, %v1169
    %1171 = vdwg.mxu0
    %1172 = vmatpush.msra.mxu0 %v551
    %1173 = vmatpush.msra.mxu0 %v549
    %1174 = vmatpush.msra.mxu0 %v547
    %1175 = vmatpush.msra.mxu0 %v545
    %1176 = vmatpush.msra.mxu0 %v543
    %1177 = vmatpush.msra.mxu0 %v541
    %1178 = vmatpush.msra.mxu0 %v539
    %1179 = vmatpush.msra.mxu0 %v537
    %1180 = vmatpush.msra.mxu0 %v535
    %1181 = vmatpush.msra.mxu0 %v533
    %1182 = vmatpush.msra.mxu0 %v531
    %1183 = vmatpush.msra.mxu0 %v529
    %1184 = vmatpush.msra.mxu0 %v527
    %1185 = vmatpush.msra.mxu0 %v525
    %1186 = vmatpush.msra.mxu0 %v523
    %1187 = vmatpush.msra.mxu0 %v521
    %1188 = vmatmul.f32.gmra.mxu0 %v39
    %v1189 = vpop.f32.mrf.mxu0
    %v1190 = vadd.f32 %v1170, %v1189
    %1191 = vdwg.mxu0
    %v1192 = vld [vmem:[%s2] sm:$0x3]
    %v1193 = vld [vmem:[%s3] sm:$0x3]
    %vm1194 = vcmask 64512
    %v1196 = vsel %vm1194, 1.0, 0
    %1198 = vmatpush.msra.mxu0 0.0
    %1199 = vmatpush.msra.mxu0 0.0
    %1200 = vmatpush.msra.mxu0 0.0
    %1201 = vmatpush.msra.mxu0 0.0
    %1202 = vmatpush.msra.mxu0 0.0
    %1203 = vmatpush.msra.mxu0 0.0
    %1204 = vmatpush.msra.mxu0 0.0
    %1205 = vmatpush.msra.mxu0 0.0
    %1206 = vmatpush.msra.mxu0 0.0
    %1207 = vmatpush.msra.mxu0 0.0
    %1208 = vmatpush.msra.mxu0 0.0
    %1209 = vmatpush.msra.mxu0 0.0
    %1210 = vmatpush.msra.mxu0 0.0
    %1211 = vmatpush.msra.mxu0 0.0
    %1212 = vmatpush.msra.mxu0 0.0
    %1213 = vmatpush.msra.mxu0 %v870
    %1214 = vmatmul.f32.gmra.mxu0 %v1196
    %v1215 = vpop.f32.mrf.mxu0
    %v1216 = vadd.f32 0.0, %v1215
    %1217 = vdwg.mxu0
    %1218 = vmatpush.msra.mxu0 0.0
    %1219 = vmatpush.msra.mxu0 0.0
    %1220 = vmatpush.msra.mxu0 0.0
    %1221 = vmatpush.msra.mxu0 0.0
    %1222 = vmatpush.msra.mxu0 0.0
    %1223 = vmatpush.msra.mxu0 0.0
    %1224 = vmatpush.msra.mxu0 0.0
    %1225 = vmatpush.msra.mxu0 0.0
    %1226 = vmatpush.msra.mxu0 0.0
    %1227 = vmatpush.msra.mxu0 0.0
    %1228 = vmatpush.msra.mxu0 0.0
    %1229 = vmatpush.msra.mxu0 0.0
    %1230 = vmatpush.msra.mxu0 0.0
    %1231 = vmatpush.msra.mxu0 0.0
    %1232 = vmatpush.msra.mxu0 0.0
    %1233 = vmatpush.msra.mxu0 %v1190
    %1234 = vmatmul.f32.gmra.mxu0 %v1196
    %v1235 = vpop.f32.mrf.mxu0
    %v1236 = vadd.f32 0.0, %v1235
    %1237 = vdwg.mxu0
    %v1238 = vmul.f32 %v1216, 0.125
    %v1239 = vmul.f32 %v1236, 0.125
    %v1240 = vperm.slane %v1238, 0
    %v1241 = vperm.slane %v1239, 0
    %v1242 = vsub.f32 %v870, %v1240
    %v1243 = vsub.f32 %v1190, %v1241
    %v1244 = vmul.f32 %v1242, %v1242
    %v1245 = vmul.f32 %v1243, %v1243
    %1246 = vmatpush.msra.mxu0 0.0
    %1247 = vmatpush.msra.mxu0 0.0
    %1248 = vmatpush.msra.mxu0 0.0
    %1249 = vmatpush.msra.mxu0 0.0
    %1250 = vmatpush.msra.mxu0 0.0
    %1251 = vmatpush.msra.mxu0 0.0
    %1252 = vmatpush.msra.mxu0 0.0
    %1253 = vmatpush.msra.mxu0 0.0
    %1254 = vmatpush.msra.mxu0 0.0
    %1255 = vmatpush.msra.mxu0 0.0
    %1256 = vmatpush.msra.mxu0 0.0
    %1257 = vmatpush.msra.mxu0 0.0
    %1258 = vmatpush.msra.mxu0 0.0
    %1259 = vmatpush.msra.mxu0 0.0
    %1260 = vmatpush.msra.mxu0 0.0
    %1261 = vmatpush.msra.mxu0 %v1244
    %1262 = vmatmul.f32.gmra.mxu0 %v1196
    %v1263 = vpop.f32.mrf.mxu0
    %v1264 = vadd.f32 0.0, %v1263
    %1265 = vdwg.mxu0
    %1266 = vmatpush.msra.mxu0 0.0
    %1267 = vmatpush.msra.mxu0 0.0
    %1268 = vmatpush.msra.mxu0 0.0
    %1269 = vmatpush.msra.mxu0 0.0
    %1270 = vmatpush.msra.mxu0 0.0
    %1271 = vmatpush.msra.mxu0 0.0
    %1272 = vmatpush.msra.mxu0 0.0
    %1273 = vmatpush.msra.mxu0 0.0
    %1274 = vmatpush.msra.mxu0 0.0
    %1275 = vmatpush.msra.mxu0 0.0
    %1276 = vmatpush.msra.mxu0 0.0
    %1277 = vmatpush.msra.mxu0 0.0
    %1278 = vmatpush.msra.mxu0 0.0
    %1279 = vmatpush.msra.mxu0 0.0
    %1280 = vmatpush.msra.mxu0 0.0
    %1281 = vmatpush.msra.mxu0 %v1245
    %1282 = vmatmul.f32.gmra.mxu0 %v1196
    %v1283 = vpop.f32.mrf.mxu0
    %v1284 = vadd.f32 0.0, %v1283
    %1285 = vdwg.mxu0
    %v1286 = vmul.f32 %v1264, 0.125
    %v1287 = vmul.f32 %v1284, 0.125
    %v1288 = vadd.f32 %v1286, 1e-05
    %v1289 = vadd.f32 %v1287, 1e-05
    %v1290 = vrsqrt.pop %v1288
    %v1291 = vmul.f32 %v1290, %v1288
    %v1292 = vmul.f32 %v1291, %v1290
    %v1293 = vmul.f32 0.5, %v1292
    %v1294 = vsub.f32 1.5, %v1293
    %v1295 = vmul.f32 %v1290, %v1294
    %vm1296 = vweird.f32 %v1288
    %vm1297 = vweird.f32 %v1290
    %vm1298 = vmor %vm1296, %vm1297
    %v1299 = vsel %vm1298, %v1290, %v1295
    %v1300 = vrsqrt.pop %v1289
    %v1301 = vmul.f32 %v1300, %v1289
    %v1302 = vmul.f32 %v1301, %v1300
    %v1303 = vmul.f32 0.5, %v1302
    %v1304 = vsub.f32 1.5, %v1303
    %v1305 = vmul.f32 %v1300, %v1304
    %vm1306 = vweird.f32 %v1289
    %vm1307 = vweird.f32 %v1300
    %vm1308 = vmor %vm1306, %vm1307
    %v1309 = vsel %vm1308, %v1300, %v1305
    %v1312 = vrot.slane %v1309, 7
    %vm1313 = vcmask 1040384
    %v1314 = vsel %vm1313, %v1299, %v1312
    %v1316 = vmul.f32 %v1192, %v1314
    %v1318 = vperm.slane %v1316, 0
    %v1319 = vperm.slane %v1316, 1
    %v1322 = vmul.f32 %v1242, %v1318
    %v1323 = vmul.f32 %v1243, %v1319
    %v1325 = vperm.slane %v1193, 0
    %v1326 = vperm.slane %v1193, 1
    %v1329 = vadd.f32 %v1322, %v1325
    %v1330 = vadd.f32 %v1323, %v1326
    %vm1331 = vcmp.ge.f32.partialorder %v1329, 0.0
    %vm1332 = vcmp.ge.f32.partialorder %v1330, 0.0
    %v1333 = vmul.f32 %v1329, 0.2
    %v1334 = vmul.f32 %v1330, 0.2
    %v1335 = vsel %vm1331, %v1329, %v1333
    %v1336 = vsel %vm1332, %v1330, %v1334
    %v1339 = vrot.slane %v1335, 1
    %v1340 = vrot.slane %v1336, 1
    %v1343 = vrot.slane %v1335, 2
    %v1344 = vrot.slane %v1336, 2
    %v1347 = vrot.slane %v1335, 3
    %v1348 = vrot.slane %v1336, 3
    %v1351 = vrot.slane %v1339, 3
    %v1352 = vrot.slane %v1340, 3
    %v1353 = vrot.slane %v1343, 3
    %v1354 = vrot.slane %v1344, 3
    %v1355 = vrot.slane %v1347, 3
    %v1356 = vrot.slane %v1348, 3
    %v1363 = vsel %vm1313, %v1335, %v1347
    %v1364 = vsel %vm1313, %v1336, %v1348
    %v1365 = vsel %vm1313, %v1339, %v1351
    %v1366 = vsel %vm1313, %v1340, %v1352
    %v1367 = vsel %vm1313, %v1343, %v1353
    %v1368 = vsel %vm1313, %v1344, %v1354
    %v1369 = vsel %vm1313, %v1347, %v1355
    %v1370 = vsel %vm1313, %v1348, %v1356
    %v1371 = vld [vmem:[%s4] sm:$0xff]
    %v1372 = vld [vmem:[%s4 + $0x8] sm:$0xff]
    %v1373 = vld [vmem:[%s4 + $0x10] sm:$0xff]
    %v1374 = vld [vmem:[%s4 + $0x18] sm:$0xff]
    %v1375 = vld [vmem:[%s4 + $0x20] sm:$0xff]
    %v1376 = vld [vmem:[%s4 + $0x28] sm:$0xff]
    %v1377 = vld [vmem:[%s4 + $0x30] sm:$0xff]
    %v1378 = vld [vmem:[%s4 + $0x38] sm:$0xff]
    %v1379 = vld [vmem:[%s4 + $0x40] sm:$0xff]
    %v1380 = vld [vmem:[%s4 + $0x48] sm:$0xff]
    %v1381 = vld [vmem:[%s4 + $0x50] sm:$0xff]
    %v1382 = vld [vmem:[%s4 + $0x58] sm:$0xff]
    %v1383 = vld [vmem:[%s4 + $0x60] sm:$0xff]
    %v1384 = vld [vmem:[%s4 + $0x68] sm:$0xff]
    %v1385 = vld [vmem:[%s4 + $0x70] sm:$0xff]
    %v1386 = vld [vmem:[%s4 + $0x78] sm:$0xff]
    %v1387 = vld [vmem:[%s4 + $0x80] sm:$0xff]
    %v1388 = vld [vmem:[%s4 + $0x88] sm:$0xff]
    %v1389 = vld [vmem:[%s4 + $0x90] sm:$0xff]
    %v1390 = vld [vmem:[%s4 + $0x98] sm:$0xff]
    %v1391 = vld [vmem:[%s4 + $0xa0] sm:$0xff]
    %v1392 = vld [vmem:[%s4 + $0xa8] sm:$0xff]
    %v1393 = vld [vmem:[%s4 + $0xb0] sm:$0xff]
    %v1394 = vld [vmem:[%s4 + $0xb8] sm:$0xff]
    %v1395 = vld [vmem:[%s4 + $0xc0] sm:$0xff]
    %v1396 = vld [vmem:[%s4 + $0xc8] sm:$0xff]
    %v1397 = vld [vmem:[%s4 + $0xd0] sm:$0xff]
    %v1398 = vld [vmem:[%s4 + $0xd8] sm:$0xff]
    %v1399 = vld [vmem:[%s4 + $0xe0] sm:$0xff]
    %v1400 = vld [vmem:[%s4 + $0xe8] sm:$0xff]
    %v1401 = vld [vmem:[%s4 + $0xf0] sm:$0xff]
    %v1402 = vld [vmem:[%s4 + $0xf8] sm:$0xff]
    %v1403 = vld [vmem:[%s4 + $0x100] sm:$0xff]
    %v1404 = vld [vmem:[%s4 + $0x108] sm:$0xff]
    %v1405 = vld [vmem:[%s4 + $0x110] sm:$0xff]
    %v1406 = vld [vmem:[%s4 + $0x118] sm:$0xff]
    %v1407 = vld [vmem:[%s4 + $0x120] sm:$0xff]
    %v1408 = vld [vmem:[%s4 + $0x128] sm:$0xff]
    %v1409 = vld [vmem:[%s4 + $0x130] sm:$0xff]
    %v1410 = vld [vmem:[%s4 + $0x138] sm:$0xff]
    %v1411 = vld [vmem:[%s4 + $0x140] sm:$0xff]
    %v1412 = vld [vmem:[%s4 + $0x148] sm:$0xff]
    %v1413 = vld [vmem:[%s4 + $0x150] sm:$0xff]
    %v1414 = vld [vmem:[%s4 + $0x158] sm:$0xff]
    %v1415 = vld [vmem:[%s4 + $0x160] sm:$0xff]
    %v1416 = vld [vmem:[%s4 + $0x168] sm:$0xff]
    %v1417 = vld [vmem:[%s4 + $0x170] sm:$0xff]
    %v1418 = vld [vmem:[%s4 + $0x178] sm:$0xff]
    %v1419 = vld [vmem:[%s4 + $0x180] sm:$0xff]
    %v1420 = vld [vmem:[%s4 + $0x188] sm:$0xff]
    %v1421 = vld [vmem:[%s4 + $0x190] sm:$0xff]
    %v1422 = vld [vmem:[%s4 + $0x198] sm:$0xff]
    %v1423 = vld [vmem:[%s4 + $0x1a0] sm:$0xff]
    %v1424 = vld [vmem:[%s4 + $0x1a8] sm:$0xff]
    %v1425 = vld [vmem:[%s4 + $0x1b0] sm:$0xff]
    %v1426 = vld [vmem:[%s4 + $0x1b8] sm:$0xff]
    %v1427 = vld [vmem:[%s4 + $0x1c0] sm:$0xff]
    %v1428 = vld [vmem:[%s4 + $0x1c8] sm:$0xff]
    %v1429 = vld [vmem:[%s4 + $0x1d0] sm:$0xff]
    %v1430 = vld [vmem:[%s4 + $0x1d8] sm:$0xff]
    %v1431 = vld [vmem:[%s4 + $0x1e0] sm:$0xff]
    %v1432 = vld [vmem:[%s4 + $0x1e8] sm:$0xff]
    %v1433 = vld [vmem:[%s4 + $0x1f0] sm:$0xff]
    %v1434 = vld [vmem:[%s4 + $0x1f8] sm:$0xff]
    %v1435 = vld [vmem:[%s4 + $0x200] sm:$0xff]
    %v1436 = vld [vmem:[%s4 + $0x208] sm:$0xff]
    %v1437 = vld [vmem:[%s4 + $0x210] sm:$0xff]
    %v1438 = vld [vmem:[%s4 + $0x218] sm:$0xff]
    %v1439 = vld [vmem:[%s4 + $0x220] sm:$0xff]
    %v1440 = vld [vmem:[%s4 + $0x228] sm:$0xff]
    %v1441 = vld [vmem:[%s4 + $0x230] sm:$0xff]
    %v1442 = vld [vmem:[%s4 + $0x238] sm:$0xff]
    %v1443 = vld [vmem:[%s4 + $0x240] sm:$0xff]
    %v1444 = vld [vmem:[%s4 + $0x248] sm:$0xff]
    %v1445 = vld [vmem:[%s4 + $0x250] sm:$0xff]
    %v1446 = vld [vmem:[%s4 + $0x258] sm:$0xff]
    %v1447 = vld [vmem:[%s4 + $0x260] sm:$0xff]
    %v1448 = vld [vmem:[%s4 + $0x268] sm:$0xff]
    %v1449 = vld [vmem:[%s4 + $0x270] sm:$0xff]
    %v1450 = vld [vmem:[%s4 + $0x278] sm:$0xff]
    %v1451 = vld [vmem:[%s4 + $0x280] sm:$0xff]
    %v1452 = vld [vmem:[%s4 + $0x288] sm:$0xff]
    %v1453 = vld [vmem:[%s4 + $0x290] sm:$0xff]
    %v1454 = vld [vmem:[%s4 + $0x298] sm:$0xff]
    %v1455 = vld [vmem:[%s4 + $0x2a0] sm:$0xff]
    %v1456 = vld [vmem:[%s4 + $0x2a8] sm:$0xff]
    %v1457 = vld [vmem:[%s4 + $0x2b0] sm:$0xff]
    %v1458 = vld [vmem:[%s4 + $0x2b8] sm:$0xff]
    %v1459 = vld [vmem:[%s4 + $0x2c0] sm:$0xff]
    %v1460 = vld [vmem:[%s4 + $0x2c8] sm:$0xff]
    %v1461 = vld [vmem:[%s4 + $0x2d0] sm:$0xff]
    %v1462 = vld [vmem:[%s4 + $0x2d8] sm:$0xff]
    %v1463 = vld [vmem:[%s4 + $0x2e0] sm:$0xff]
    %v1464 = vld [vmem:[%s4 + $0x2e8] sm:$0xff]
    %v1465 = vld [vmem:[%s4 + $0x2f0] sm:$0xff]
    %v1466 = vld [vmem:[%s4 + $0x2f8] sm:$0xff]
    %v1467 = vld [vmem:[%s4 + $0x300] sm:$0xff]
    %v1468 = vld [vmem:[%s4 + $0x308] sm:$0xff]
    %v1469 = vld [vmem:[%s4 + $0x310] sm:$0xff]
    %v1470 = vld [vmem:[%s4 + $0x318] sm:$0xff]
    %v1471 = vld [vmem:[%s4 + $0x320] sm:$0xff]
    %v1472 = vld [vmem:[%s4 + $0x328] sm:$0xff]
    %v1473 = vld [vmem:[%s4 + $0x330] sm:$0xff]
    %v1474 = vld [vmem:[%s4 + $0x338] sm:$0xff]
    %v1475 = vld [vmem:[%s4 + $0x340] sm:$0xff]
    %v1476 = vld [vmem:[%s4 + $0x348] sm:$0xff]
    %v1477 = vld [vmem:[%s4 + $0x350] sm:$0xff]
    %v1478 = vld [vmem:[%s4 + $0x358] sm:$0xff]
    %v1479 = vld [vmem:[%s4 + $0x360] sm:$0xff]
    %v1480 = vld [vmem:[%s4 + $0x368] sm:$0xff]
    %v1481 = vld [vmem:[%s4 + $0x370] sm:$0xff]
    %v1482 = vld [vmem:[%s4 + $0x378] sm:$0xff]
    %v1483 = vld [vmem:[%s4 + $0x380] sm:$0xff]
    %v1484 = vld [vmem:[%s4 + $0x388] sm:$0xff]
    %v1485 = vld [vmem:[%s4 + $0x390] sm:$0xff]
    %v1486 = vld [vmem:[%s4 + $0x398] sm:$0xff]
    %v1487 = vld [vmem:[%s4 + $0x3a0] sm:$0xff]
    %v1488 = vld [vmem:[%s4 + $0x3a8] sm:$0xff]
    %v1489 = vld [vmem:[%s4 + $0x3b0] sm:$0xff]
    %v1490 = vld [vmem:[%s4 + $0x3b8] sm:$0xff]
    %v1491 = vld [vmem:[%s4 + $0x3c0] sm:$0xff]
    %v1492 = vld [vmem:[%s4 + $0x3c8] sm:$0xff]
    %v1493 = vld [vmem:[%s4 + $0x3d0] sm:$0xff]
    %v1494 = vld [vmem:[%s4 + $0x3d8] sm:$0xff]
    %v1495 = vld [vmem:[%s4 + $0x3e0] sm:$0xff]
    %v1496 = vld [vmem:[%s4 + $0x3e8] sm:$0xff]
    %v1497 = vld [vmem:[%s4 + $0x3f0] sm:$0xff]
    %v1498 = vld [vmem:[%s4 + $0x3f8] sm:$0xff]
    %v1499 = vld [vmem:[%s5] sm:$0x1]
    %v1501 = vperm.slane %v1499, 0
    %1503 = vmatpush.msra.mxu0 %v1386
    %1504 = vmatpush.msra.mxu0 %v1385
    %1505 = vmatpush.msra.mxu0 %v1384
    %1506 = vmatpush.msra.mxu0 %v1383
    %1507 = vmatpush.msra.mxu0 %v1382
    %1508 = vmatpush.msra.mxu0 %v1381
    %1509 = vmatpush.msra.mxu0 %v1380
    %1510 = vmatpush.msra.mxu0 %v1379
    %1511 = vmatpush.msra.mxu0 %v1378
    %1512 = vmatpush.msra.mxu0 %v1377
    %1513 = vmatpush.msra.mxu0 %v1376
    %1514 = vmatpush.msra.mxu0 %v1375
    %1515 = vmatpush.msra.mxu0 %v1374
    %1516 = vmatpush.msra.mxu0 %v1373
    %1517 = vmatpush.msra.mxu0 %v1372
    %1518 = vmatpush.msra.mxu0 %v1371
    %1519 = vmatmul.f32.gmra.mxu0 %v1363
    %v1520 = vpop.f32.mrf.mxu0
    %v1521 = vadd.f32 %v1501, %v1520
    %1522 = vdwg.mxu0
    %1523 = vmatpush.msra.mxu0 %v1402
    %1524 = vmatpush.msra.mxu0 %v1401
    %1525 = vmatpush.msra.mxu0 %v1400
    %1526 = vmatpush.msra.mxu0 %v1399
    %1527 = vmatpush.msra.mxu0 %v1398
    %1528 = vmatpush.msra.mxu0 %v1397
    %1529 = vmatpush.msra.mxu0 %v1396
    %1530 = vmatpush.msra.mxu0 %v1395
    %1531 = vmatpush.msra.mxu0 %v1394
    %1532 = vmatpush.msra.mxu0 %v1393
    %1533 = vmatpush.msra.mxu0 %v1392
    %1534 = vmatpush.msra.mxu0 %v1391
    %1535 = vmatpush.msra.mxu0 %v1390
    %1536 = vmatpush.msra.mxu0 %v1389
    %1537 = vmatpush.msra.mxu0 %v1388
    %1538 = vmatpush.msra.mxu0 %v1387
    %1539 = vmatmul.f32.gmra.mxu0 %v1364
    %v1540 = vpop.f32.mrf.mxu0
    %v1541 = vadd.f32 %v1521, %v1540
    %1542 = vdwg.mxu0
    %1543 = vmatpush.msra.mxu0 %v1418
    %1544 = vmatpush.msra.mxu0 %v1417
    %1545 = vmatpush.msra.mxu0 %v1416
    %1546 = vmatpush.msra.mxu0 %v1415
    %1547 = vmatpush.msra.mxu0 %v1414
    %1548 = vmatpush.msra.mxu0 %v1413
    %1549 = vmatpush.msra.mxu0 %v1412
    %1550 = vmatpush.msra.mxu0 %v1411
    %1551 = vmatpush.msra.mxu0 %v1410
    %1552 = vmatpush.msra.mxu0 %v1409
    %1553 = vmatpush.msra.mxu0 %v1408
    %1554 = vmatpush.msra.mxu0 %v1407
    %1555 = vmatpush.msra.mxu0 %v1406
    %1556 = vmatpush.msra.mxu0 %v1405
    %1557 = vmatpush.msra.mxu0 %v1404
    %1558 = vmatpush.msra.mxu0 %v1403
    %1559 = vmatmul.f32.gmra.mxu0 %v1365
    %v1560 = vpop.f32.mrf.mxu0
    %v1561 = vadd.f32 %v1541, %v1560
    %1562 = vdwg.mxu0
    %1563 = vmatpush.msra.mxu0 %v1434
    %1564 = vmatpush.msra.mxu0 %v1433
    %1565 = vmatpush.msra.mxu0 %v1432
    %1566 = vmatpush.msra.mxu0 %v1431
    %1567 = vmatpush.msra.mxu0 %v1430
    %1568 = vmatpush.msra.mxu0 %v1429
    %1569 = vmatpush.msra.mxu0 %v1428
    %1570 = vmatpush.msra.mxu0 %v1427
    %1571 = vmatpush.msra.mxu0 %v1426
    %1572 = vmatpush.msra.mxu0 %v1425
    %1573 = vmatpush.msra.mxu0 %v1424
    %1574 = vmatpush.msra.mxu0 %v1423
    %1575 = vmatpush.msra.mxu0 %v1422
    %1576 = vmatpush.msra.mxu0 %v1421
    %1577 = vmatpush.msra.mxu0 %v1420
    %1578 = vmatpush.msra.mxu0 %v1419
    %1579 = vmatmul.f32.gmra.mxu0 %v1366
    %v1580 = vpop.f32.mrf.mxu0
    %v1581 = vadd.f32 %v1561, %v1580
    %1582 = vdwg.mxu0
    %1583 = vmatpush.msra.mxu0 %v1450
    %1584 = vmatpush.msra.mxu0 %v1449
    %1585 = vmatpush.msra.mxu0 %v1448
    %1586 = vmatpush.msra.mxu0 %v1447
    %1587 = vmatpush.msra.mxu0 %v1446
    %1588 = vmatpush.msra.mxu0 %v1445
    %1589 = vmatpush.msra.mxu0 %v1444
    %1590 = vmatpush.msra.mxu0 %v1443
    %1591 = vmatpush.msra.mxu0 %v1442
    %1592 = vmatpush.msra.mxu0 %v1441
    %1593 = vmatpush.msra.mxu0 %v1440
    %1594 = vmatpush.msra.mxu0 %v1439
    %1595 = vmatpush.msra.mxu0 %v1438
    %1596 = vmatpush.msra.mxu0 %v1437
    %1597 = vmatpush.msra.mxu0 %v1436
    %1598 = vmatpush.msra.mxu0 %v1435
    %1599 = vmatmul.f32.gmra.mxu0 %v1367
    %v1600 = vpop.f32.mrf.mxu0
    %v1601 = vadd.f32 %v1581, %v1600
    %1602 = vdwg.mxu0
    %1603 = vmatpush.msra.mxu0 %v1466
    %1604 = vmatpush.msra.mxu0 %v1465
    %1605 = vmatpush.msra.mxu0 %v1464
    %1606 = vmatpush.msra.mxu0 %v1463
    %1607 = vmatpush.msra.mxu0 %v1462
    %1608 = vmatpush.msra.mxu0 %v1461
    %1609 = vmatpush.msra.mxu0 %v1460
    %1610 = vmatpush.msra.mxu0 %v1459
    %1611 = vmatpush.msra.mxu0 %v1458
    %1612 = vmatpush.msra.mxu0 %v1457
    %1613 = vmatpush.msra.mxu0 %v1456
    %1614 = vmatpush.msra.mxu0 %v1455
    %1615 = vmatpush.msra.mxu0 %v1454
    %1616 = vmatpush.msra.mxu0 %v1453
    %1617 = vmatpush.msra.mxu0 %v1452
    %1618 = vmatpush.msra.mxu0 %v1451
    %1619 = vmatmul.f32.gmra.mxu0 %v1368
    %v1620 = vpop.f32.mrf.mxu0
    %v1621 = vadd.f32 %v1601, %v1620
    %1622 = vdwg.mxu0
    %1623 = vmatpush.msra.mxu0 %v1482
    %1624 = vmatpush.msra.mxu0 %v1481
    %1625 = vmatpush.msra.mxu0 %v1480
    %1626 = vmatpush.msra.mxu0 %v1479
    %1627 = vmatpush.msra.mxu0 %v1478
    %1628 = vmatpush.msra.mxu0 %v1477
    %1629 = vmatpush.msra.mxu0 %v1476
    %1630 = vmatpush.msra.mxu0 %v1475
    %1631 = vmatpush.msra.mxu0 %v1474
    %1632 = vmatpush.msra.mxu0 %v1473
    %1633 = vmatpush.msra.mxu0 %v1472
    %1634 = vmatpush.msra.mxu0 %v1471
    %1635 = vmatpush.msra.mxu0 %v1470
    %1636 = vmatpush.msra.mxu0 %v1469
    %1637 = vmatpush.msra.mxu0 %v1468
    %1638 = vmatpush.msra.mxu0 %v1467
    %1639 = vmatmul.f32.gmra.mxu0 %v1369
    %v1640 = vpop.f32.mrf.mxu0
    %v1641 = vadd.f32 %v1621, %v1640
    %1642 = vdwg.mxu0
    %1643 = vmatpush.msra.mxu0 %v1498
    %1644 = vmatpush.msra.mxu0 %v1497
    %1645 = vmatpush.msra.mxu0 %v1496
    %1646 = vmatpush.msra.mxu0 %v1495
    %1647 = vmatpush.msra.mxu0 %v1494
    %1648 = vmatpush.msra.mxu0 %v1493
    %1649 = vmatpush.msra.mxu0 %v1492
    %1650 = vmatpush.msra.mxu0 %v1491
    %1651 = vmatpush.msra.mxu0 %v1490
    %1652 = vmatpush.msra.mxu0 %v1489
    %1653 = vmatpush.msra.mxu0 %v1488
    %1654 = vmatpush.msra.mxu0 %v1487
    %1655 = vmatpush.msra.mxu0 %v1486
    %1656 = vmatpush.msra.mxu0 %v1485
    %1657 = vmatpush.msra.mxu0 %v1484
    %1658 = vmatpush.msra.mxu0 %v1483
    %1659 = vmatmul.f32.gmra.mxu0 %v1370
    %v1660 = vpop.f32.mrf.mxu0
    %v1661 = vadd.f32 %v1641, %v1660
    %1662 = vdwg.mxu0
    %v1663 = vmax.f32 %v1661, 0.0
    %vm1664 = vcmask 517120
    %1665 = vst.msk [vmem:[#allocation2] sm:$0x3] %vm1664, %v1663
    // Predicated region
    $region26: #{vae_encoder_forward.7} parent=1 // pred_check
      _
    $region27: #{vae_encoder_forward.7} parent=1 // pred_check_branch
      %1667 = sbr.rel (0) target = $region29
    $region28: #{vae_encoder_forward.7} parent=1 // pred_region
      %1669 = vsyncadd [#allocation3], 0
      %s1671 = sshll.u32 [#allocation2], 4
      %s1672 = int_to_ptr.vmem [resolvable:$true] %s1671
      %s1673 = sshll.u32 %s6, 4
      %s1674 = int_to_ptr.hbm [resolvable:$true] %s1673
      %1676 = dma.vmem_to_hbm [thread:$0]  %s1672, 32, %s1674, [#allocation3]
    $region29: #{vae_encoder_forward.7} parent=1 // pred_fallthru
      _
    // Predicated region
    $region30: #{vae_encoder_forward.7} parent=1 // pred_check
      _
    $region31: #{vae_encoder_forward.7} parent=1 // pred_check_branch
      %1678 = sbr.rel (0) target = $region33
    $region32: #{vae_encoder_forward.7} parent=1 // pred_region
      %1680 = dma.done [#allocation3], 32
    $region33: #{vae_encoder_forward.7} parent=1 // pred_fallthru
      _
    %1681 = vsyncpa [#allocation3], 1

</llo_original>
